<compile_context>
chip_gen: v6e
topology: v6e:2x2x1
jax: 0.10.0
libtpu: 0.0.40
codegen_flags: <defaults>
</compile_context>

<pallas_src>
import functools

import jax
import jax.numpy as jnp
from jax.experimental import pallas as pl
from jax.experimental.pallas import tpu as pltpu

# Small shapes consistent with the module
# (original module: BATCH=10, TIME_STEP=20, E=32, HIDDEN=128, Z=32)
BATCH_SIZE = 8
TIME_STEP = 8
ENCODER_INPUT_SIZE = 32
HIDDEN_SIZE = 128            # == DECODER_INPUT_SIZE in the PyTorch module
Z_SIZE = 32


def _lstm_cell(gates, c, H):
    """PyTorch nn.LSTMCell semantics on precomputed gate pre-activations.

    Gate order [i, f, g, o]; slices are lane-aligned for H == 128.
    """
    i_g = jax.nn.sigmoid(gates[:, 0 * H:1 * H])
    f_g = jax.nn.sigmoid(gates[:, 1 * H:2 * H])
    g_g = jnp.tanh(gates[:, 2 * H:3 * H])
    o_g = jax.nn.sigmoid(gates[:, 3 * H:4 * H])
    c_new = f_g * c + i_g * g_g
    h_new = o_g * jnp.tanh(c_new)
    return h_new, c_new


def rnn_kernel(x_ref, wih_e_ref, whh_e_ref, b_e_ref,
               whh_d_ref, w_comb_ref, b_d_ref, b_d0_ref,
               wz_ref, bz_ref, out_ref,
               g_scratch, h_scratch, *, T, B):
    H = whh_e_ref.shape[0]

    # ---- Encoder pre-gates: one well-shaped matmul, bias folded in,
    # hoisted off the serial dependency chain.
    g_scratch[...] = (
        jnp.dot(x_ref[...], wih_e_ref[...], preferred_element_type=jnp.float32)
        + b_e_ref[...])

    whh_e = whh_e_ref[...]

    # ---- Encoder recurrence.  Step 0 in the PyTorch code calls the cell
    # WITHOUT a state, i.e. the (0.1, 0.1) init is discarded -> zeros.
    h = jnp.zeros((B, H), jnp.float32)
    c = jnp.zeros((B, H), jnp.float32)
    for t in range(T):                       # fully unrolled, static slices
        gates = (g_scratch[t * B:(t + 1) * B, :]
                 + jnp.dot(h, whh_e, preferred_element_type=jnp.float32))
        h, c = _lstm_cell(gates, c, H)

    # ---- Decoder.
    whh_d = whh_d_ref[...]
    w_comb = w_comb_ref[...]
    b_d = jnp.broadcast_to(b_d_ref[...], (B, 4 * H))    # hoisted broadcast

    # t == 0 (peeled): the input is a constant 0.1 tensor; its ih
    # contribution is pre-folded into b_d0, so only the hh matmul remains.
    gates = jnp.dot(h, whh_d, preferred_element_type=jnp.float32) + b_d0_ref[...]
    h, c = _lstm_cell(gates, c, H)
    h_scratch[0:B, :] = h

    # t >= 1: x_in == h  =>  single fused matmul against (wih + whh).
    for t in range(1, T):                    # fully unrolled
        gates = jnp.dot(h, w_comb, preferred_element_type=jnp.float32) + b_d
        h, c = _lstm_cell(gates, c, H)
        h_scratch[t * B:(t + 1) * B, :] = h

    # ---- Deferred output projection: one matmul + tanh + one dense store.
    out_ref[...] = jnp.tanh(
        jnp.dot(h_scratch[...], wz_ref[...], preferred_element_type=jnp.float32)
        + bz_ref[...])


def rnn_forward(x, p):
    """x: (B, T, E) float32 -> (B, T, Z) float32."""
    B, T, E = x.shape
    H = HIDDEN_SIZE
    # Time-major and pre-flattened to (T*B, E) so the kernel never reshapes.
    x_tm = jnp.transpose(x, (1, 0, 2)).reshape(T * B, E)
    vmem = pl.BlockSpec(memory_space=pltpu.MemorySpace.VMEM)
    out2d = pl.pallas_call(
        functools.partial(rnn_kernel, T=T, B=B),
        out_shape=jax.ShapeDtypeStruct((T * B, Z_SIZE), jnp.float32),
        in_specs=[vmem] * 10,
        out_specs=vmem,
        scratch_shapes=[
            pltpu.VMEM((T * B, 4 * H), jnp.float32),   # encoder pre-gates
            pltpu.VMEM((T * B, H), jnp.float32),       # decoder hidden states
        ],
    )(x_tm,
      p["wih_e_t"], p["whh_e_t"], p["b_e"],
      p["whh_d_t"], p["w_comb"], p["b_d"], p["b_d0"],
      p["wz_t"], p["bz"])
    return jnp.transpose(out2d.reshape(T, B, Z_SIZE), (1, 0, 2))   # (B, T, Z)


def init_params(key):
    """Deterministic PyTorch-style init: uniform(-1/sqrt(H), 1/sqrt(H))."""
    H, E, Z = HIDDEN_SIZE, ENCODER_INPUT_SIZE, Z_SIZE
    k = 1.0 / float(H) ** 0.5
    ks = jax.random.split(key, 10)
    u = lambda kk, shape: jax.random.uniform(kk, shape, jnp.float32, -k, k)

    wih_e = u(ks[0], (4 * H, E))
    whh_e = u(ks[1], (4 * H, H))
    b_e = u(ks[2], (4 * H,)) + u(ks[3], (4 * H,))    # b_ih + b_hh
    wih_d = u(ks[4], (4 * H, H))                     # decoder input size == H
    whh_d = u(ks[5], (4 * H, H))
    b_d = u(ks[6], (4 * H,)) + u(ks[7], (4 * H,))
    wz = u(ks[8], (Z, H))
    bz = u(ks[9], (Z,))

    wih_d_t = wih_d.T                                # (H, 4H)
    whh_d_t = whh_d.T
    w_comb = wih_d_t + whh_d_t                       # fused decoder weights (t>0)
    # t==0 decoder input is the constant 0.1 tensor: 0.1 * ones(1,H) @ wih_d_t
    b_d0 = b_d[None, :] + 0.1 * jnp.sum(wih_d_t, axis=0, keepdims=True)

    return {
        "wih_e_t": wih_e.T, "whh_e_t": whh_e.T, "b_e": b_e[None, :],
        "wih_d_t": wih_d_t, "whh_d_t": whh_d_t, "w_comb": w_comb,
        "b_d": b_d[None, :], "b_d0": b_d0,
        "wz_t": wz.T, "bz": bz[None, :],
    }


def rnn_reference(x, p):
    """Pure-JAX reference reproducing the PyTorch forward exactly (unfused)."""
    B, T, _E = x.shape
    H = HIDDEN_SIZE

    def step(xi, h, c, wih, whh, b):
        g = xi @ wih + h @ whh + b
        i = jax.nn.sigmoid(g[:, :H])
        f = jax.nn.sigmoid(g[:, H:2 * H])
        gg = jnp.tanh(g[:, 2 * H:3 * H])
        o = jax.nn.sigmoid(g[:, 3 * H:])
        c = f * c + i * gg
        return o * jnp.tanh(c), c

    h = jnp.zeros((B, H), jnp.float32)
    c = jnp.zeros((B, H), jnp.float32)
    for t in range(T):
        h, c = step(x[:, t, :], h, c, p["wih_e_t"], p["whh_e_t"], p["b_e"])
    outs = []
    for t in range(T):
        xin = jnp.full((B, H), 0.1, jnp.float32) if t == 0 else h
        h, c = step(xin, h, c, p["wih_d_t"], p["whh_d_t"], p["b_d"])
        outs.append(jnp.tanh(h @ p["wz_t"] + p["bz"]))
    return jnp.stack(outs, axis=1)                    # (B, T, Z)


if __name__ == "__main__":
    key = jax.random.PRNGKey(0)
    k_x, k_p = jax.random.split(key)
    x = jax.random.normal(k_x, (BATCH_SIZE, TIME_STEP, ENCODER_INPUT_SIZE),
                          jnp.float32)
    params = init_params(k_p)

    out = jax.block_until_ready(rnn_forward(x, params))
    ref = jax.block_until_ready(rnn_reference(x, params))

    assert out.shape == (BATCH_SIZE, TIME_STEP, Z_SIZE)
    max_err = float(jnp.max(jnp.abs(out - ref)))
    # Slightly looser than 1e-5: the fused decoder weights / folded biases
    # change f32 summation order vs. the unfused reference.
    assert max_err < 1e-4, f"max abs err {max_err}"

    print("KERNEL_OK")
</pallas_src>

<mosaic_0001>
module attributes {stable_mosaic.version = 11 : i64} {
  func.func @rnn_kernel(%arg0: memref<64x32xf32, #tpu.memory_space<vmem>>, %arg1: memref<32x512xf32, #tpu.memory_space<vmem>>, %arg2: memref<128x512xf32, #tpu.memory_space<vmem>>, %arg3: memref<1x512xf32, #tpu.memory_space<vmem>>, %arg4: memref<128x512xf32, #tpu.memory_space<vmem>>, %arg5: memref<128x512xf32, #tpu.memory_space<vmem>>, %arg6: memref<1x512xf32, #tpu.memory_space<vmem>>, %arg7: memref<1x512xf32, #tpu.memory_space<vmem>>, %arg8: memref<128x32xf32, #tpu.memory_space<vmem>>, %arg9: memref<1x32xf32, #tpu.memory_space<vmem>>, %arg10: memref<64x32xf32, #tpu.memory_space<vmem>>, %arg11: memref<64x512xf32, #tpu.memory_space<vmem>>, %arg12: memref<64x128xf32, #tpu.memory_space<vmem>>) attributes {dimension_semantics = [], scalar_prefetch = 0 : i64, scratch_operands = 2 : i64, tpu.core_type = #tpu.core_type<tc>} {
    %c0 = arith.constant 0 : index
    %c0_0 = arith.constant 0 : index
    %0 = vector.load %arg0[%c0, %c0_0] : memref<64x32xf32, #tpu.memory_space<vmem>>, vector<64x32xf32>
    %c0_1 = arith.constant 0 : index
    %c0_2 = arith.constant 0 : index
    %1 = vector.load %arg1[%c0_1, %c0_2] : memref<32x512xf32, #tpu.memory_space<vmem>>, vector<32x512xf32>
    %cst = arith.constant dense<0.000000e+00> : vector<64x512xf32>
    %2 = tpu.matmul %0, %1, %cst {dimension_numbers = #tpu.dot_dimension_numbers<[1], [0], [0], [1], [0, 0, 1, 1], [], []>} : vector<64x32xf32>, vector<32x512xf32>, vector<64x512xf32> -> vector<64x512xf32>
    %c0_3 = arith.constant 0 : index
    %c0_4 = arith.constant 0 : index
    %3 = vector.load %arg3[%c0_3, %c0_4] : memref<1x512xf32, #tpu.memory_space<vmem>>, vector<1x512xf32>
    %4 = vector.broadcast %3 : vector<1x512xf32> to vector<64x512xf32>
    %5 = arith.addf %2, %4 : vector<64x512xf32>
    %c0_5 = arith.constant 0 : index
    %c0_6 = arith.constant 0 : index
    %6 = vector.load %arg11[%c0_5, %c0_6] : memref<64x512xf32, #tpu.memory_space<vmem>>, vector<64x512xf32>
    tpu.vector_store %arg11[%c0_5, %c0_6], %5 {strides = array<i32>} : memref<64x512xf32, #tpu.memory_space<vmem>>, vector<64x512xf32>,
    %c0_7 = arith.constant 0 : index
    %c0_8 = arith.constant 0 : index
    %7 = vector.load %arg2[%c0_7, %c0_8] : memref<128x512xf32, #tpu.memory_space<vmem>>, vector<128x512xf32>
    %cst_9 = arith.constant 0.000000e+00 : f32
    %8 = vector.broadcast %cst_9 : f32 to vector<8x128xf32>
    %cst_10 = arith.constant 0.000000e+00 : f32
    %9 = vector.broadcast %cst_10 : f32 to vector<8x128xf32>
    %c0_11 = arith.constant 0 : index
    %c0_12 = arith.constant 0 : index
    %10 = vector.load %arg11[%c0_11, %c0_12] : memref<64x512xf32, #tpu.memory_space<vmem>>, vector<8x512xf32>
    %cst_13 = arith.constant dense<0.000000e+00> : vector<8x512xf32>
    %11 = tpu.matmul %8, %7, %cst_13 {dimension_numbers = #tpu.dot_dimension_numbers<[1], [0], [0], [1], [0, 0, 1, 1], [], []>} : vector<8x128xf32>, vector<128x512xf32>, vector<8x512xf32> -> vector<8x512xf32>
    %12 = arith.addf %10, %11 : vector<8x512xf32>
    %13 = vector.extract_strided_slice %12 {offsets = [0, 0], sizes = [8, 128], strides = [1, 1]} : vector<8x512xf32> to vector<8x128xf32>
    %14 = arith.negf %13 : vector<8x128xf32>
    %15 = math.exp %14 : vector<8x128xf32>
    %cst_14 = arith.constant 1.000000e+00 : f32
    %16 = vector.broadcast %cst_14 : f32 to vector<8x128xf32>
    %17 = arith.addf %16, %15 : vector<8x128xf32>
    %18 = arith.divf %16, %17 : vector<8x128xf32>
    %19 = vector.extract_strided_slice %12 {offsets = [0, 128], sizes = [8, 128], strides = [1, 1]} : vector<8x512xf32> to vector<8x128xf32>
    %20 = arith.negf %19 : vector<8x128xf32>
    %21 = math.exp %20 : vector<8x128xf32>
    %cst_15 = arith.constant 1.000000e+00 : f32
    %22 = vector.broadcast %cst_15 : f32 to vector<8x128xf32>
    %23 = arith.addf %22, %21 : vector<8x128xf32>
    %24 = arith.divf %22, %23 : vector<8x128xf32>
    %25 = vector.extract_strided_slice %12 {offsets = [0, 256], sizes = [8, 128], strides = [1, 1]} : vector<8x512xf32> to vector<8x128xf32>
    %26 = math.tanh %25 : vector<8x128xf32>
    %27 = vector.extract_strided_slice %12 {offsets = [0, 384], sizes = [8, 128], strides = [1, 1]} : vector<8x512xf32> to vector<8x128xf32>
    %28 = arith.negf %27 : vector<8x128xf32>
    %29 = math.exp %28 : vector<8x128xf32>
    %cst_16 = arith.constant 1.000000e+00 : f32
    %30 = vector.broadcast %cst_16 : f32 to vector<8x128xf32>
    %31 = arith.addf %30, %29 : vector<8x128xf32>
    %32 = arith.divf %30, %31 : vector<8x128xf32>
    %33 = arith.mulf %24, %9 : vector<8x128xf32>
    %34 = arith.mulf %18, %26 : vector<8x128xf32>
    %35 = arith.addf %33, %34 : vector<8x128xf32>
    %36 = math.tanh %35 : vector<8x128xf32>
    %37 = arith.mulf %32, %36 : vector<8x128xf32>
    %c8 = arith.constant 8 : index
    %c0_17 = arith.constant 0 : index
    %38 = vector.load %arg11[%c8, %c0_17] : memref<64x512xf32, #tpu.memory_space<vmem>>, vector<8x512xf32>
    %cst_18 = arith.constant dense<0.000000e+00> : vector<8x512xf32>
    %39 = tpu.matmul %37, %7, %cst_18 {dimension_numbers = #tpu.dot_dimension_numbers<[1], [0], [0], [1], [0, 0, 1, 1], [], []>} : vector<8x128xf32>, vector<128x512xf32>, vector<8x512xf32> -> vector<8x512xf32>
    %40 = arith.addf %38, %39 : vector<8x512xf32>
    %41 = vector.extract_strided_slice %40 {offsets = [0, 0], sizes = [8, 128], strides = [1, 1]} : vector<8x512xf32> to vector<8x128xf32>
    %42 = arith.negf %41 : vector<8x128xf32>
    %43 = math.exp %42 : vector<8x128xf32>
    %cst_19 = arith.constant 1.000000e+00 : f32
    %44 = vector.broadcast %cst_19 : f32 to vector<8x128xf32>
    %45 = arith.addf %44, %43 : vector<8x128xf32>
    %46 = arith.divf %44, %45 : vector<8x128xf32>
    %47 = vector.extract_strided_slice %40 {offsets = [0, 128], sizes = [8, 128], strides = [1, 1]} : vector<8x512xf32> to vector<8x128xf32>
    %48 = arith.negf %47 : vector<8x128xf32>
    %49 = math.exp %48 : vector<8x128xf32>
    %cst_20 = arith.constant 1.000000e+00 : f32
    %50 = vector.broadcast %cst_20 : f32 to vector<8x128xf32>
    %51 = arith.addf %50, %49 : vector<8x128xf32>
    %52 = arith.divf %50, %51 : vector<8x128xf32>
    %53 = vector.extract_strided_slice %40 {offsets = [0, 256], sizes = [8, 128], strides = [1, 1]} : vector<8x512xf32> to vector<8x128xf32>
    %54 = math.tanh %53 : vector<8x128xf32>
    %55 = vector.extract_strided_slice %40 {offsets = [0, 384], sizes = [8, 128], strides = [1, 1]} : vector<8x512xf32> to vector<8x128xf32>
    %56 = arith.negf %55 : vector<8x128xf32>
    %57 = math.exp %56 : vector<8x128xf32>
    %cst_21 = arith.constant 1.000000e+00 : f32
    %58 = vector.broadcast %cst_21 : f32 to vector<8x128xf32>
    %59 = arith.addf %58, %57 : vector<8x128xf32>
    %60 = arith.divf %58, %59 : vector<8x128xf32>
    %61 = arith.mulf %52, %35 : vector<8x128xf32>
    %62 = arith.mulf %46, %54 : vector<8x128xf32>
    %63 = arith.addf %61, %62 : vector<8x128xf32>
    %64 = math.tanh %63 : vector<8x128xf32>
    %65 = arith.mulf %60, %64 : vector<8x128xf32>
    %c16 = arith.constant 16 : index
    %c0_22 = arith.constant 0 : index
    %66 = vector.load %arg11[%c16, %c0_22] : memref<64x512xf32, #tpu.memory_space<vmem>>, vector<8x512xf32>
    %cst_23 = arith.constant dense<0.000000e+00> : vector<8x512xf32>
    %67 = tpu.matmul %65, %7, %cst_23 {dimension_numbers = #tpu.dot_dimension_numbers<[1], [0], [0], [1], [0, 0, 1, 1], [], []>} : vector<8x128xf32>, vector<128x512xf32>, vector<8x512xf32> -> vector<8x512xf32>
    %68 = arith.addf %66, %67 : vector<8x512xf32>
    %69 = vector.extract_strided_slice %68 {offsets = [0, 0], sizes = [8, 128], strides = [1, 1]} : vector<8x512xf32> to vector<8x128xf32>
    %70 = arith.negf %69 : vector<8x128xf32>
    %71 = math.exp %70 : vector<8x128xf32>
    %cst_24 = arith.constant 1.000000e+00 : f32
    %72 = vector.broadcast %cst_24 : f32 to vector<8x128xf32>
    %73 = arith.addf %72, %71 : vector<8x128xf32>
    %74 = arith.divf %72, %73 : vector<8x128xf32>
    %75 = vector.extract_strided_slice %68 {offsets = [0, 128], sizes = [8, 128], strides = [1, 1]} : vector<8x512xf32> to vector<8x128xf32>
    %76 = arith.negf %75 : vector<8x128xf32>
    %77 = math.exp %76 : vector<8x128xf32>
    %cst_25 = arith.constant 1.000000e+00 : f32
    %78 = vector.broadcast %cst_25 : f32 to vector<8x128xf32>
    %79 = arith.addf %78, %77 : vector<8x128xf32>
    %80 = arith.divf %78, %79 : vector<8x128xf32>
    %81 = vector.extract_strided_slice %68 {offsets = [0, 256], sizes = [8, 128], strides = [1, 1]} : vector<8x512xf32> to vector<8x128xf32>
    %82 = math.tanh %81 : vector<8x128xf32>
    %83 = vector.extract_strided_slice %68 {offsets = [0, 384], sizes = [8, 128], strides = [1, 1]} : vector<8x512xf32> to vector<8x128xf32>
    %84 = arith.negf %83 : vector<8x128xf32>
    %85 = math.exp %84 : vector<8x128xf32>
    %cst_26 = arith.constant 1.000000e+00 : f32
    %86 = vector.broadcast %cst_26 : f32 to vector<8x128xf32>
    %87 = arith.addf %86, %85 : vector<8x128xf32>
    %88 = arith.divf %86, %87 : vector<8x128xf32>
    %89 = arith.mulf %80, %63 : vector<8x128xf32>
    %90 = arith.mulf %74, %82 : vector<8x128xf32>
    %91 = arith.addf %89, %90 : vector<8x128xf32>
    %92 = math.tanh %91 : vector<8x128xf32>
    %93 = arith.mulf %88, %92 : vector<8x128xf32>
    %c24 = arith.constant 24 : index
    %c0_27 = arith.constant 0 : index
    %94 = vector.load %arg11[%c24, %c0_27] : memref<64x512xf32, #tpu.memory_space<vmem>>, vector<8x512xf32>
    %cst_28 = arith.constant dense<0.000000e+00> : vector<8x512xf32>
    %95 = tpu.matmul %93, %7, %cst_28 {dimension_numbers = #tpu.dot_dimension_numbers<[1], [0], [0], [1], [0, 0, 1, 1], [], []>} : vector<8x128xf32>, vector<128x512xf32>, vector<8x512xf32> -> vector<8x512xf32>
    %96 = arith.addf %94, %95 : vector<8x512xf32>
    %97 = vector.extract_strided_slice %96 {offsets = [0, 0], sizes = [8, 128], strides = [1, 1]} : vector<8x512xf32> to vector<8x128xf32>
    %98 = arith.negf %97 : vector<8x128xf32>
    %99 = math.exp %98 : vector<8x128xf32>
    %cst_29 = arith.constant 1.000000e+00 : f32
    %100 = vector.broadcast %cst_29 : f32 to vector<8x128xf32>
    %101 = arith.addf %100, %99 : vector<8x128xf32>
    %102 = arith.divf %100, %101 : vector<8x128xf32>
    %103 = vector.extract_strided_slice %96 {offsets = [0, 128], sizes = [8, 128], strides = [1, 1]} : vector<8x512xf32> to vector<8x128xf32>
    %104 = arith.negf %103 : vector<8x128xf32>
    %105 = math.exp %104 : vector<8x128xf32>
    %cst_30 = arith.constant 1.000000e+00 : f32
    %106 = vector.broadcast %cst_30 : f32 to vector<8x128xf32>
    %107 = arith.addf %106, %105 : vector<8x128xf32>
    %108 = arith.divf %106, %107 : vector<8x128xf32>
    %109 = vector.extract_strided_slice %96 {offsets = [0, 256], sizes = [8, 128], strides = [1, 1]} : vector<8x512xf32> to vector<8x128xf32>
    %110 = math.tanh %109 : vector<8x128xf32>
    %111 = vector.extract_strided_slice %96 {offsets = [0, 384], sizes = [8, 128], strides = [1, 1]} : vector<8x512xf32> to vector<8x128xf32>
    %112 = arith.negf %111 : vector<8x128xf32>
    %113 = math.exp %112 : vector<8x128xf32>
    %cst_31 = arith.constant 1.000000e+00 : f32
    %114 = vector.broadcast %cst_31 : f32 to vector<8x128xf32>
    %115 = arith.addf %114, %113 : vector<8x128xf32>
    %116 = arith.divf %114, %115 : vector<8x128xf32>
    %117 = arith.mulf %108, %91 : vector<8x128xf32>
    %118 = arith.mulf %102, %110 : vector<8x128xf32>
    %119 = arith.addf %117, %118 : vector<8x128xf32>
    %120 = math.tanh %119 : vector<8x128xf32>
    %121 = arith.mulf %116, %120 : vector<8x128xf32>
    %c32 = arith.constant 32 : index
    %c0_32 = arith.constant 0 : index
    %122 = vector.load %arg11[%c32, %c0_32] : memref<64x512xf32, #tpu.memory_space<vmem>>, vector<8x512xf32>
    %cst_33 = arith.constant dense<0.000000e+00> : vector<8x512xf32>
    %123 = tpu.matmul %121, %7, %cst_33 {dimension_numbers = #tpu.dot_dimension_numbers<[1], [0], [0], [1], [0, 0, 1, 1], [], []>} : vector<8x128xf32>, vector<128x512xf32>, vector<8x512xf32> -> vector<8x512xf32>
    %124 = arith.addf %122, %123 : vector<8x512xf32>
    %125 = vector.extract_strided_slice %124 {offsets = [0, 0], sizes = [8, 128], strides = [1, 1]} : vector<8x512xf32> to vector<8x128xf32>
    %126 = arith.negf %125 : vector<8x128xf32>
    %127 = math.exp %126 : vector<8x128xf32>
    %cst_34 = arith.constant 1.000000e+00 : f32
    %128 = vector.broadcast %cst_34 : f32 to vector<8x128xf32>
    %129 = arith.addf %128, %127 : vector<8x128xf32>
    %130 = arith.divf %128, %129 : vector<8x128xf32>
    %131 = vector.extract_strided_slice %124 {offsets = [0, 128], sizes = [8, 128], strides = [1, 1]} : vector<8x512xf32> to vector<8x128xf32>
    %132 = arith.negf %131 : vector<8x128xf32>
    %133 = math.exp %132 : vector<8x128xf32>
    %cst_35 = arith.constant 1.000000e+00 : f32
    %134 = vector.broadcast %cst_35 : f32 to vector<8x128xf32>
    %135 = arith.addf %134, %133 : vector<8x128xf32>
    %136 = arith.divf %134, %135 : vector<8x128xf32>
    %137 = vector.extract_strided_slice %124 {offsets = [0, 256], sizes = [8, 128], strides = [1, 1]} : vector<8x512xf32> to vector<8x128xf32>
    %138 = math.tanh %137 : vector<8x128xf32>
    %139 = vector.extract_strided_slice %124 {offsets = [0, 384], sizes = [8, 128], strides = [1, 1]} : vector<8x512xf32> to vector<8x128xf32>
    %140 = arith.negf %139 : vector<8x128xf32>
    %141 = math.exp %140 : vector<8x128xf32>
    %cst_36 = arith.constant 1.000000e+00 : f32
    %142 = vector.broadcast %cst_36 : f32 to vector<8x128xf32>
    %143 = arith.addf %142, %141 : vector<8x128xf32>
    %144 = arith.divf %142, %143 : vector<8x128xf32>
    %145 = arith.mulf %136, %119 : vector<8x128xf32>
    %146 = arith.mulf %130, %138 : vector<8x128xf32>
    %147 = arith.addf %145, %146 : vector<8x128xf32>
    %148 = math.tanh %147 : vector<8x128xf32>
    %149 = arith.mulf %144, %148 : vector<8x128xf32>
    %c40 = arith.constant 40 : index
    %c0_37 = arith.constant 0 : index
    %150 = vector.load %arg11[%c40, %c0_37] : memref<64x512xf32, #tpu.memory_space<vmem>>, vector<8x512xf32>
    %cst_38 = arith.constant dense<0.000000e+00> : vector<8x512xf32>
    %151 = tpu.matmul %149, %7, %cst_38 {dimension_numbers = #tpu.dot_dimension_numbers<[1], [0], [0], [1], [0, 0, 1, 1], [], []>} : vector<8x128xf32>, vector<128x512xf32>, vector<8x512xf32> -> vector<8x512xf32>
    %152 = arith.addf %150, %151 : vector<8x512xf32>
    %153 = vector.extract_strided_slice %152 {offsets = [0, 0], sizes = [8, 128], strides = [1, 1]} : vector<8x512xf32> to vector<8x128xf32>
    %154 = arith.negf %153 : vector<8x128xf32>
    %155 = math.exp %154 : vector<8x128xf32>
    %cst_39 = arith.constant 1.000000e+00 : f32
    %156 = vector.broadcast %cst_39 : f32 to vector<8x128xf32>
    %157 = arith.addf %156, %155 : vector<8x128xf32>
    %158 = arith.divf %156, %157 : vector<8x128xf32>
    %159 = vector.extract_strided_slice %152 {offsets = [0, 128], sizes = [8, 128], strides = [1, 1]} : vector<8x512xf32> to vector<8x128xf32>
    %160 = arith.negf %159 : vector<8x128xf32>
    %161 = math.exp %160 : vector<8x128xf32>
    %cst_40 = arith.constant 1.000000e+00 : f32
    %162 = vector.broadcast %cst_40 : f32 to vector<8x128xf32>
    %163 = arith.addf %162, %161 : vector<8x128xf32>
    %164 = arith.divf %162, %163 : vector<8x128xf32>
    %165 = vector.extract_strided_slice %152 {offsets = [0, 256], sizes = [8, 128], strides = [1, 1]} : vector<8x512xf32> to vector<8x128xf32>
    %166 = math.tanh %165 : vector<8x128xf32>
    %167 = vector.extract_strided_slice %152 {offsets = [0, 384], sizes = [8, 128], strides = [1, 1]} : vector<8x512xf32> to vector<8x128xf32>
    %168 = arith.negf %167 : vector<8x128xf32>
    %169 = math.exp %168 : vector<8x128xf32>
    %cst_41 = arith.constant 1.000000e+00 : f32
    %170 = vector.broadcast %cst_41 : f32 to vector<8x128xf32>
    %171 = arith.addf %170, %169 : vector<8x128xf32>
    %172 = arith.divf %170, %171 : vector<8x128xf32>
    %173 = arith.mulf %164, %147 : vector<8x128xf32>
    %174 = arith.mulf %158, %166 : vector<8x128xf32>
    %175 = arith.addf %173, %174 : vector<8x128xf32>
    %176 = math.tanh %175 : vector<8x128xf32>
    %177 = arith.mulf %172, %176 : vector<8x128xf32>
    %c48 = arith.constant 48 : index
    %c0_42 = arith.constant 0 : index
    %178 = vector.load %arg11[%c48, %c0_42] : memref<64x512xf32, #tpu.memory_space<vmem>>, vector<8x512xf32>
    %cst_43 = arith.constant dense<0.000000e+00> : vector<8x512xf32>
    %179 = tpu.matmul %177, %7, %cst_43 {dimension_numbers = #tpu.dot_dimension_numbers<[1], [0], [0], [1], [0, 0, 1, 1], [], []>} : vector<8x128xf32>, vector<128x512xf32>, vector<8x512xf32> -> vector<8x512xf32>
    %180 = arith.addf %178, %179 : vector<8x512xf32>
    %181 = vector.extract_strided_slice %180 {offsets = [0, 0], sizes = [8, 128], strides = [1, 1]} : vector<8x512xf32> to vector<8x128xf32>
    %182 = arith.negf %181 : vector<8x128xf32>
    %183 = math.exp %182 : vector<8x128xf32>
    %cst_44 = arith.constant 1.000000e+00 : f32
    %184 = vector.broadcast %cst_44 : f32 to vector<8x128xf32>
    %185 = arith.addf %184, %183 : vector<8x128xf32>
    %186 = arith.divf %184, %185 : vector<8x128xf32>
    %187 = vector.extract_strided_slice %180 {offsets = [0, 128], sizes = [8, 128], strides = [1, 1]} : vector<8x512xf32> to vector<8x128xf32>
    %188 = arith.negf %187 : vector<8x128xf32>
    %189 = math.exp %188 : vector<8x128xf32>
    %cst_45 = arith.constant 1.000000e+00 : f32
    %190 = vector.broadcast %cst_45 : f32 to vector<8x128xf32>
    %191 = arith.addf %190, %189 : vector<8x128xf32>
    %192 = arith.divf %190, %191 : vector<8x128xf32>
    %193 = vector.extract_strided_slice %180 {offsets = [0, 256], sizes = [8, 128], strides = [1, 1]} : vector<8x512xf32> to vector<8x128xf32>
    %194 = math.tanh %193 : vector<8x128xf32>
    %195 = vector.extract_strided_slice %180 {offsets = [0, 384], sizes = [8, 128], strides = [1, 1]} : vector<8x512xf32> to vector<8x128xf32>
    %196 = arith.negf %195 : vector<8x128xf32>
    %197 = math.exp %196 : vector<8x128xf32>
    %cst_46 = arith.constant 1.000000e+00 : f32
    %198 = vector.broadcast %cst_46 : f32 to vector<8x128xf32>
    %199 = arith.addf %198, %197 : vector<8x128xf32>
    %200 = arith.divf %198, %199 : vector<8x128xf32>
    %201 = arith.mulf %192, %175 : vector<8x128xf32>
    %202 = arith.mulf %186, %194 : vector<8x128xf32>
    %203 = arith.addf %201, %202 : vector<8x128xf32>
    %204 = math.tanh %203 : vector<8x128xf32>
    %205 = arith.mulf %200, %204 : vector<8x128xf32>
    %c56 = arith.constant 56 : index
    %c0_47 = arith.constant 0 : index
    %206 = vector.load %arg11[%c56, %c0_47] : memref<64x512xf32, #tpu.memory_space<vmem>>, vector<8x512xf32>
    %cst_48 = arith.constant dense<0.000000e+00> : vector<8x512xf32>
    %207 = tpu.matmul %205, %7, %cst_48 {dimension_numbers = #tpu.dot_dimension_numbers<[1], [0], [0], [1], [0, 0, 1, 1], [], []>} : vector<8x128xf32>, vector<128x512xf32>, vector<8x512xf32> -> vector<8x512xf32>
    %208 = arith.addf %206, %207 : vector<8x512xf32>
    %209 = vector.extract_strided_slice %208 {offsets = [0, 0], sizes = [8, 128], strides = [1, 1]} : vector<8x512xf32> to vector<8x128xf32>
    %210 = arith.negf %209 : vector<8x128xf32>
    %211 = math.exp %210 : vector<8x128xf32>
    %cst_49 = arith.constant 1.000000e+00 : f32
    %212 = vector.broadcast %cst_49 : f32 to vector<8x128xf32>
    %213 = arith.addf %212, %211 : vector<8x128xf32>
    %214 = arith.divf %212, %213 : vector<8x128xf32>
    %215 = vector.extract_strided_slice %208 {offsets = [0, 128], sizes = [8, 128], strides = [1, 1]} : vector<8x512xf32> to vector<8x128xf32>
    %216 = arith.negf %215 : vector<8x128xf32>
    %217 = math.exp %216 : vector<8x128xf32>
    %cst_50 = arith.constant 1.000000e+00 : f32
    %218 = vector.broadcast %cst_50 : f32 to vector<8x128xf32>
    %219 = arith.addf %218, %217 : vector<8x128xf32>
    %220 = arith.divf %218, %219 : vector<8x128xf32>
    %221 = vector.extract_strided_slice %208 {offsets = [0, 256], sizes = [8, 128], strides = [1, 1]} : vector<8x512xf32> to vector<8x128xf32>
    %222 = math.tanh %221 : vector<8x128xf32>
    %223 = vector.extract_strided_slice %208 {offsets = [0, 384], sizes = [8, 128], strides = [1, 1]} : vector<8x512xf32> to vector<8x128xf32>
    %224 = arith.negf %223 : vector<8x128xf32>
    %225 = math.exp %224 : vector<8x128xf32>
    %cst_51 = arith.constant 1.000000e+00 : f32
    %226 = vector.broadcast %cst_51 : f32 to vector<8x128xf32>
    %227 = arith.addf %226, %225 : vector<8x128xf32>
    %228 = arith.divf %226, %227 : vector<8x128xf32>
    %229 = arith.mulf %220, %203 : vector<8x128xf32>
    %230 = arith.mulf %214, %222 : vector<8x128xf32>
    %231 = arith.addf %229, %230 : vector<8x128xf32>
    %232 = math.tanh %231 : vector<8x128xf32>
    %233 = arith.mulf %228, %232 : vector<8x128xf32>
    %c0_52 = arith.constant 0 : index
    %c0_53 = arith.constant 0 : index
    %234 = vector.load %arg4[%c0_52, %c0_53] : memref<128x512xf32, #tpu.memory_space<vmem>>, vector<128x512xf32>
    %c0_54 = arith.constant 0 : index
    %c0_55 = arith.constant 0 : index
    %235 = vector.load %arg5[%c0_54, %c0_55] : memref<128x512xf32, #tpu.memory_space<vmem>>, vector<128x512xf32>
    %c0_56 = arith.constant 0 : index
    %c0_57 = arith.constant 0 : index
    %236 = vector.load %arg6[%c0_56, %c0_57] : memref<1x512xf32, #tpu.memory_space<vmem>>, vector<1x512xf32>
    %237 = vector.shape_cast %236 : vector<1x512xf32> to vector<1x512xf32>
    %238 = vector.broadcast %237 : vector<1x512xf32> to vector<8x512xf32>
    %cst_58 = arith.constant dense<0.000000e+00> : vector<8x512xf32>
    %239 = tpu.matmul %233, %234, %cst_58 {dimension_numbers = #tpu.dot_dimension_numbers<[1], [0], [0], [1], [0, 0, 1, 1], [], []>} : vector<8x128xf32>, vector<128x512xf32>, vector<8x512xf32> -> vector<8x512xf32>
    %c0_59 = arith.constant 0 : index
    %c0_60 = arith.constant 0 : index
    %240 = vector.load %arg7[%c0_59, %c0_60] : memref<1x512xf32, #tpu.memory_space<vmem>>, vector<1x512xf32>
    %241 = vector.broadcast %240 : vector<1x512xf32> to vector<8x512xf32>
    %242 = arith.addf %239, %241 : vector<8x512xf32>
    %243 = vector.extract_strided_slice %242 {offsets = [0, 0], sizes = [8, 128], strides = [1, 1]} : vector<8x512xf32> to vector<8x128xf32>
    %244 = arith.negf %243 : vector<8x128xf32>
    %245 = math.exp %244 : vector<8x128xf32>
    %cst_61 = arith.constant 1.000000e+00 : f32
    %246 = vector.broadcast %cst_61 : f32 to vector<8x128xf32>
    %247 = arith.addf %246, %245 : vector<8x128xf32>
    %248 = arith.divf %246, %247 : vector<8x128xf32>
    %249 = vector.extract_strided_slice %242 {offsets = [0, 128], sizes = [8, 128], strides = [1, 1]} : vector<8x512xf32> to vector<8x128xf32>
    %250 = arith.negf %249 : vector<8x128xf32>
    %251 = math.exp %250 : vector<8x128xf32>
    %cst_62 = arith.constant 1.000000e+00 : f32
    %252 = vector.broadcast %cst_62 : f32 to vector<8x128xf32>
    %253 = arith.addf %252, %251 : vector<8x128xf32>
    %254 = arith.divf %252, %253 : vector<8x128xf32>
    %255 = vector.extract_strided_slice %242 {offsets = [0, 256], sizes = [8, 128], strides = [1, 1]} : vector<8x512xf32> to vector<8x128xf32>
    %256 = math.tanh %255 : vector<8x128xf32>
    %257 = vector.extract_strided_slice %242 {offsets = [0, 384], sizes = [8, 128], strides = [1, 1]} : vector<8x512xf32> to vector<8x128xf32>
    %258 = arith.negf %257 : vector<8x128xf32>
    %259 = math.exp %258 : vector<8x128xf32>
    %cst_63 = arith.constant 1.000000e+00 : f32
    %260 = vector.broadcast %cst_63 : f32 to vector<8x128xf32>
    %261 = arith.addf %260, %259 : vector<8x128xf32>
    %262 = arith.divf %260, %261 : vector<8x128xf32>
    %263 = arith.mulf %254, %231 : vector<8x128xf32>
    %264 = arith.mulf %248, %256 : vector<8x128xf32>
    %265 = arith.addf %263, %264 : vector<8x128xf32>
    %266 = math.tanh %265 : vector<8x128xf32>
    %267 = arith.mulf %262, %266 : vector<8x128xf32>
    %c0_64 = arith.constant 0 : index
    %c0_65 = arith.constant 0 : index
    %268 = vector.load %arg12[%c0_64, %c0_65] : memref<64x128xf32, #tpu.memory_space<vmem>>, vector<8x128xf32>
    tpu.vector_store %arg12[%c0_64, %c0_65], %267 {strides = array<i32>} : memref<64x128xf32, #tpu.memory_space<vmem>>, vector<8x128xf32>,
    %cst_66 = arith.constant dense<0.000000e+00> : vector<8x512xf32>
    %269 = tpu.matmul %267, %235, %cst_66 {dimension_numbers = #tpu.dot_dimension_numbers<[1], [0], [0], [1], [0, 0, 1, 1], [], []>} : vector<8x128xf32>, vector<128x512xf32>, vector<8x512xf32> -> vector<8x512xf32>
    %270 = arith.addf %269, %238 : vector<8x512xf32>
    %271 = vector.extract_strided_slice %270 {offsets = [0, 0], sizes = [8, 128], strides = [1, 1]} : vector<8x512xf32> to vector<8x128xf32>
    %272 = arith.negf %271 : vector<8x128xf32>
    %273 = math.exp %272 : vector<8x128xf32>
    %cst_67 = arith.constant 1.000000e+00 : f32
    %274 = vector.broadcast %cst_67 : f32 to vector<8x128xf32>
    %275 = arith.addf %274, %273 : vector<8x128xf32>
    %276 = arith.divf %274, %275 : vector<8x128xf32>
    %277 = vector.extract_strided_slice %270 {offsets = [0, 128], sizes = [8, 128], strides = [1, 1]} : vector<8x512xf32> to vector<8x128xf32>
    %278 = arith.negf %277 : vector<8x128xf32>
    %279 = math.exp %278 : vector<8x128xf32>
    %cst_68 = arith.constant 1.000000e+00 : f32
    %280 = vector.broadcast %cst_68 : f32 to vector<8x128xf32>
    %281 = arith.addf %280, %279 : vector<8x128xf32>
    %282 = arith.divf %280, %281 : vector<8x128xf32>
    %283 = vector.extract_strided_slice %270 {offsets = [0, 256], sizes = [8, 128], strides = [1, 1]} : vector<8x512xf32> to vector<8x128xf32>
    %284 = math.tanh %283 : vector<8x128xf32>
    %285 = vector.extract_strided_slice %270 {offsets = [0, 384], sizes = [8, 128], strides = [1, 1]} : vector<8x512xf32> to vector<8x128xf32>
    %286 = arith.negf %285 : vector<8x128xf32>
    %287 = math.exp %286 : vector<8x128xf32>
    %cst_69 = arith.constant 1.000000e+00 : f32
    %288 = vector.broadcast %cst_69 : f32 to vector<8x128xf32>
    %289 = arith.addf %288, %287 : vector<8x128xf32>
    %290 = arith.divf %288, %289 : vector<8x128xf32>
    %291 = arith.mulf %282, %265 : vector<8x128xf32>
    %292 = arith.mulf %276, %284 : vector<8x128xf32>
    %293 = arith.addf %291, %292 : vector<8x128xf32>
    %294 = math.tanh %293 : vector<8x128xf32>
    %295 = arith.mulf %290, %294 : vector<8x128xf32>
    %c8_70 = arith.constant 8 : index
    %c0_71 = arith.constant 0 : index
    %296 = vector.load %arg12[%c8_70, %c0_71] : memref<64x128xf32, #tpu.memory_space<vmem>>, vector<8x128xf32>
    tpu.vector_store %arg12[%c8_70, %c0_71], %295 {strides = array<i32>} : memref<64x128xf32, #tpu.memory_space<vmem>>, vector<8x128xf32>,
    %cst_72 = arith.constant dense<0.000000e+00> : vector<8x512xf32>
    %297 = tpu.matmul %295, %235, %cst_72 {dimension_numbers = #tpu.dot_dimension_numbers<[1], [0], [0], [1], [0, 0, 1, 1], [], []>} : vector<8x128xf32>, vector<128x512xf32>, vector<8x512xf32> -> vector<8x512xf32>
    %298 = arith.addf %297, %238 : vector<8x512xf32>
    %299 = vector.extract_strided_slice %298 {offsets = [0, 0], sizes = [8, 128], strides = [1, 1]} : vector<8x512xf32> to vector<8x128xf32>
    %300 = arith.negf %299 : vector<8x128xf32>
    %301 = math.exp %300 : vector<8x128xf32>
    %cst_73 = arith.constant 1.000000e+00 : f32
    %302 = vector.broadcast %cst_73 : f32 to vector<8x128xf32>
    %303 = arith.addf %302, %301 : vector<8x128xf32>
    %304 = arith.divf %302, %303 : vector<8x128xf32>
    %305 = vector.extract_strided_slice %298 {offsets = [0, 128], sizes = [8, 128], strides = [1, 1]} : vector<8x512xf32> to vector<8x128xf32>
    %306 = arith.negf %305 : vector<8x128xf32>
    %307 = math.exp %306 : vector<8x128xf32>
    %cst_74 = arith.constant 1.000000e+00 : f32
    %308 = vector.broadcast %cst_74 : f32 to vector<8x128xf32>
    %309 = arith.addf %308, %307 : vector<8x128xf32>
    %310 = arith.divf %308, %309 : vector<8x128xf32>
    %311 = vector.extract_strided_slice %298 {offsets = [0, 256], sizes = [8, 128], strides = [1, 1]} : vector<8x512xf32> to vector<8x128xf32>
    %312 = math.tanh %311 : vector<8x128xf32>
    %313 = vector.extract_strided_slice %298 {offsets = [0, 384], sizes = [8, 128], strides = [1, 1]} : vector<8x512xf32> to vector<8x128xf32>
    %314 = arith.negf %313 : vector<8x128xf32>
    %315 = math.exp %314 : vector<8x128xf32>
    %cst_75 = arith.constant 1.000000e+00 : f32
    %316 = vector.broadcast %cst_75 : f32 to vector<8x128xf32>
    %317 = arith.addf %316, %315 : vector<8x128xf32>
    %318 = arith.divf %316, %317 : vector<8x128xf32>
    %319 = arith.mulf %310, %293 : vector<8x128xf32>
    %320 = arith.mulf %304, %312 : vector<8x128xf32>
    %321 = arith.addf %319, %320 : vector<8x128xf32>
    %322 = math.tanh %321 : vector<8x128xf32>
    %323 = arith.mulf %318, %322 : vector<8x128xf32>
    %c16_76 = arith.constant 16 : index
    %c0_77 = arith.constant 0 : index
    %324 = vector.load %arg12[%c16_76, %c0_77] : memref<64x128xf32, #tpu.memory_space<vmem>>, vector<8x128xf32>
    tpu.vector_store %arg12[%c16_76, %c0_77], %323 {strides = array<i32>} : memref<64x128xf32, #tpu.memory_space<vmem>>, vector<8x128xf32>,
    %cst_78 = arith.constant dense<0.000000e+00> : vector<8x512xf32>
    %325 = tpu.matmul %323, %235, %cst_78 {dimension_numbers = #tpu.dot_dimension_numbers<[1], [0], [0], [1], [0, 0, 1, 1], [], []>} : vector<8x128xf32>, vector<128x512xf32>, vector<8x512xf32> -> vector<8x512xf32>
    %326 = arith.addf %325, %238 : vector<8x512xf32>
    %327 = vector.extract_strided_slice %326 {offsets = [0, 0], sizes = [8, 128], strides = [1, 1]} : vector<8x512xf32> to vector<8x128xf32>
    %328 = arith.negf %327 : vector<8x128xf32>
    %329 = math.exp %328 : vector<8x128xf32>
    %cst_79 = arith.constant 1.000000e+00 : f32
    %330 = vector.broadcast %cst_79 : f32 to vector<8x128xf32>
    %331 = arith.addf %330, %329 : vector<8x128xf32>
    %332 = arith.divf %330, %331 : vector<8x128xf32>
    %333 = vector.extract_strided_slice %326 {offsets = [0, 128], sizes = [8, 128], strides = [1, 1]} : vector<8x512xf32> to vector<8x128xf32>
    %334 = arith.negf %333 : vector<8x128xf32>
    %335 = math.exp %334 : vector<8x128xf32>
    %cst_80 = arith.constant 1.000000e+00 : f32
    %336 = vector.broadcast %cst_80 : f32 to vector<8x128xf32>
    %337 = arith.addf %336, %335 : vector<8x128xf32>
    %338 = arith.divf %336, %337 : vector<8x128xf32>
    %339 = vector.extract_strided_slice %326 {offsets = [0, 256], sizes = [8, 128], strides = [1, 1]} : vector<8x512xf32> to vector<8x128xf32>
    %340 = math.tanh %339 : vector<8x128xf32>
    %341 = vector.extract_strided_slice %326 {offsets = [0, 384], sizes = [8, 128], strides = [1, 1]} : vector<8x512xf32> to vector<8x128xf32>
    %342 = arith.negf %341 : vector<8x128xf32>
    %343 = math.exp %342 : vector<8x128xf32>
    %cst_81 = arith.constant 1.000000e+00 : f32
    %344 = vector.broadcast %cst_81 : f32 to vector<8x128xf32>
    %345 = arith.addf %344, %343 : vector<8x128xf32>
    %346 = arith.divf %344, %345 : vector<8x128xf32>
    %347 = arith.mulf %338, %321 : vector<8x128xf32>
    %348 = arith.mulf %332, %340 : vector<8x128xf32>
    %349 = arith.addf %347, %348 : vector<8x128xf32>
    %350 = math.tanh %349 : vector<8x128xf32>
    %351 = arith.mulf %346, %350 : vector<8x128xf32>
    %c24_82 = arith.constant 24 : index
    %c0_83 = arith.constant 0 : index
    %352 = vector.load %arg12[%c24_82, %c0_83] : memref<64x128xf32, #tpu.memory_space<vmem>>, vector<8x128xf32>
    tpu.vector_store %arg12[%c24_82, %c0_83], %351 {strides = array<i32>} : memref<64x128xf32, #tpu.memory_space<vmem>>, vector<8x128xf32>,
    %cst_84 = arith.constant dense<0.000000e+00> : vector<8x512xf32>
    %353 = tpu.matmul %351, %235, %cst_84 {dimension_numbers = #tpu.dot_dimension_numbers<[1], [0], [0], [1], [0, 0, 1, 1], [], []>} : vector<8x128xf32>, vector<128x512xf32>, vector<8x512xf32> -> vector<8x512xf32>
    %354 = arith.addf %353, %238 : vector<8x512xf32>
    %355 = vector.extract_strided_slice %354 {offsets = [0, 0], sizes = [8, 128], strides = [1, 1]} : vector<8x512xf32> to vector<8x128xf32>
    %356 = arith.negf %355 : vector<8x128xf32>
    %357 = math.exp %356 : vector<8x128xf32>
    %cst_85 = arith.constant 1.000000e+00 : f32
    %358 = vector.broadcast %cst_85 : f32 to vector<8x128xf32>
    %359 = arith.addf %358, %357 : vector<8x128xf32>
    %360 = arith.divf %358, %359 : vector<8x128xf32>
    %361 = vector.extract_strided_slice %354 {offsets = [0, 128], sizes = [8, 128], strides = [1, 1]} : vector<8x512xf32> to vector<8x128xf32>
    %362 = arith.negf %361 : vector<8x128xf32>
    %363 = math.exp %362 : vector<8x128xf32>
    %cst_86 = arith.constant 1.000000e+00 : f32
    %364 = vector.broadcast %cst_86 : f32 to vector<8x128xf32>
    %365 = arith.addf %364, %363 : vector<8x128xf32>
    %366 = arith.divf %364, %365 : vector<8x128xf32>
    %367 = vector.extract_strided_slice %354 {offsets = [0, 256], sizes = [8, 128], strides = [1, 1]} : vector<8x512xf32> to vector<8x128xf32>
    %368 = math.tanh %367 : vector<8x128xf32>
    %369 = vector.extract_strided_slice %354 {offsets = [0, 384], sizes = [8, 128], strides = [1, 1]} : vector<8x512xf32> to vector<8x128xf32>
    %370 = arith.negf %369 : vector<8x128xf32>
    %371 = math.exp %370 : vector<8x128xf32>
    %cst_87 = arith.constant 1.000000e+00 : f32
    %372 = vector.broadcast %cst_87 : f32 to vector<8x128xf32>
    %373 = arith.addf %372, %371 : vector<8x128xf32>
    %374 = arith.divf %372, %373 : vector<8x128xf32>
    %375 = arith.mulf %366, %349 : vector<8x128xf32>
    %376 = arith.mulf %360, %368 : vector<8x128xf32>
    %377 = arith.addf %375, %376 : vector<8x128xf32>
    %378 = math.tanh %377 : vector<8x128xf32>
    %379 = arith.mulf %374, %378 : vector<8x128xf32>
    %c32_88 = arith.constant 32 : index
    %c0_89 = arith.constant 0 : index
    %380 = vector.load %arg12[%c32_88, %c0_89] : memref<64x128xf32, #tpu.memory_space<vmem>>, vector<8x128xf32>
    tpu.vector_store %arg12[%c32_88, %c0_89], %379 {strides = array<i32>} : memref<64x128xf32, #tpu.memory_space<vmem>>, vector<8x128xf32>,
    %cst_90 = arith.constant dense<0.000000e+00> : vector<8x512xf32>
    %381 = tpu.matmul %379, %235, %cst_90 {dimension_numbers = #tpu.dot_dimension_numbers<[1], [0], [0], [1], [0, 0, 1, 1], [], []>} : vector<8x128xf32>, vector<128x512xf32>, vector<8x512xf32> -> vector<8x512xf32>
    %382 = arith.addf %381, %238 : vector<8x512xf32>
    %383 = vector.extract_strided_slice %382 {offsets = [0, 0], sizes = [8, 128], strides = [1, 1]} : vector<8x512xf32> to vector<8x128xf32>
    %384 = arith.negf %383 : vector<8x128xf32>
    %385 = math.exp %384 : vector<8x128xf32>
    %cst_91 = arith.constant 1.000000e+00 : f32
    %386 = vector.broadcast %cst_91 : f32 to vector<8x128xf32>
    %387 = arith.addf %386, %385 : vector<8x128xf32>
    %388 = arith.divf %386, %387 : vector<8x128xf32>
    %389 = vector.extract_strided_slice %382 {offsets = [0, 128], sizes = [8, 128], strides = [1, 1]} : vector<8x512xf32> to vector<8x128xf32>
    %390 = arith.negf %389 : vector<8x128xf32>
    %391 = math.exp %390 : vector<8x128xf32>
    %cst_92 = arith.constant 1.000000e+00 : f32
    %392 = vector.broadcast %cst_92 : f32 to vector<8x128xf32>
    %393 = arith.addf %392, %391 : vector<8x128xf32>
    %394 = arith.divf %392, %393 : vector<8x128xf32>
    %395 = vector.extract_strided_slice %382 {offsets = [0, 256], sizes = [8, 128], strides = [1, 1]} : vector<8x512xf32> to vector<8x128xf32>
    %396 = math.tanh %395 : vector<8x128xf32>
    %397 = vector.extract_strided_slice %382 {offsets = [0, 384], sizes = [8, 128], strides = [1, 1]} : vector<8x512xf32> to vector<8x128xf32>
    %398 = arith.negf %397 : vector<8x128xf32>
    %399 = math.exp %398 : vector<8x128xf32>
    %cst_93 = arith.constant 1.000000e+00 : f32
    %400 = vector.broadcast %cst_93 : f32 to vector<8x128xf32>
    %401 = arith.addf %400, %399 : vector<8x128xf32>
    %402 = arith.divf %400, %401 : vector<8x128xf32>
    %403 = arith.mulf %394, %377 : vector<8x128xf32>
    %404 = arith.mulf %388, %396 : vector<8x128xf32>
    %405 = arith.addf %403, %404 : vector<8x128xf32>
    %406 = math.tanh %405 : vector<8x128xf32>
    %407 = arith.mulf %402, %406 : vector<8x128xf32>
    %c40_94 = arith.constant 40 : index
    %c0_95 = arith.constant 0 : index
    %408 = vector.load %arg12[%c40_94, %c0_95] : memref<64x128xf32, #tpu.memory_space<vmem>>, vector<8x128xf32>
    tpu.vector_store %arg12[%c40_94, %c0_95], %407 {strides = array<i32>} : memref<64x128xf32, #tpu.memory_space<vmem>>, vector<8x128xf32>,
    %cst_96 = arith.constant dense<0.000000e+00> : vector<8x512xf32>
    %409 = tpu.matmul %407, %235, %cst_96 {dimension_numbers = #tpu.dot_dimension_numbers<[1], [0], [0], [1], [0, 0, 1, 1], [], []>} : vector<8x128xf32>, vector<128x512xf32>, vector<8x512xf32> -> vector<8x512xf32>
    %410 = arith.addf %409, %238 : vector<8x512xf32>
    %411 = vector.extract_strided_slice %410 {offsets = [0, 0], sizes = [8, 128], strides = [1, 1]} : vector<8x512xf32> to vector<8x128xf32>
    %412 = arith.negf %411 : vector<8x128xf32>
    %413 = math.exp %412 : vector<8x128xf32>
    %cst_97 = arith.constant 1.000000e+00 : f32
    %414 = vector.broadcast %cst_97 : f32 to vector<8x128xf32>
    %415 = arith.addf %414, %413 : vector<8x128xf32>
    %416 = arith.divf %414, %415 : vector<8x128xf32>
    %417 = vector.extract_strided_slice %410 {offsets = [0, 128], sizes = [8, 128], strides = [1, 1]} : vector<8x512xf32> to vector<8x128xf32>
    %418 = arith.negf %417 : vector<8x128xf32>
    %419 = math.exp %418 : vector<8x128xf32>
    %cst_98 = arith.constant 1.000000e+00 : f32
    %420 = vector.broadcast %cst_98 : f32 to vector<8x128xf32>
    %421 = arith.addf %420, %419 : vector<8x128xf32>
    %422 = arith.divf %420, %421 : vector<8x128xf32>
    %423 = vector.extract_strided_slice %410 {offsets = [0, 256], sizes = [8, 128], strides = [1, 1]} : vector<8x512xf32> to vector<8x128xf32>
    %424 = math.tanh %423 : vector<8x128xf32>
    %425 = vector.extract_strided_slice %410 {offsets = [0, 384], sizes = [8, 128], strides = [1, 1]} : vector<8x512xf32> to vector<8x128xf32>
    %426 = arith.negf %425 : vector<8x128xf32>
    %427 = math.exp %426 : vector<8x128xf32>
    %cst_99 = arith.constant 1.000000e+00 : f32
    %428 = vector.broadcast %cst_99 : f32 to vector<8x128xf32>
    %429 = arith.addf %428, %427 : vector<8x128xf32>
    %430 = arith.divf %428, %429 : vector<8x128xf32>
    %431 = arith.mulf %422, %405 : vector<8x128xf32>
    %432 = arith.mulf %416, %424 : vector<8x128xf32>
    %433 = arith.addf %431, %432 : vector<8x128xf32>
    %434 = math.tanh %433 : vector<8x128xf32>
    %435 = arith.mulf %430, %434 : vector<8x128xf32>
    %c48_100 = arith.constant 48 : index
    %c0_101 = arith.constant 0 : index
    %436 = vector.load %arg12[%c48_100, %c0_101] : memref<64x128xf32, #tpu.memory_space<vmem>>, vector<8x128xf32>
    tpu.vector_store %arg12[%c48_100, %c0_101], %435 {strides = array<i32>} : memref<64x128xf32, #tpu.memory_space<vmem>>, vector<8x128xf32>,
    %cst_102 = arith.constant dense<0.000000e+00> : vector<8x512xf32>
    %437 = tpu.matmul %435, %235, %cst_102 {dimension_numbers = #tpu.dot_dimension_numbers<[1], [0], [0], [1], [0, 0, 1, 1], [], []>} : vector<8x128xf32>, vector<128x512xf32>, vector<8x512xf32> -> vector<8x512xf32>
    %438 = arith.addf %437, %238 : vector<8x512xf32>
    %439 = vector.extract_strided_slice %438 {offsets = [0, 0], sizes = [8, 128], strides = [1, 1]} : vector<8x512xf32> to vector<8x128xf32>
    %440 = arith.negf %439 : vector<8x128xf32>
    %441 = math.exp %440 : vector<8x128xf32>
    %cst_103 = arith.constant 1.000000e+00 : f32
    %442 = vector.broadcast %cst_103 : f32 to vector<8x128xf32>
    %443 = arith.addf %442, %441 : vector<8x128xf32>
    %444 = arith.divf %442, %443 : vector<8x128xf32>
    %445 = vector.extract_strided_slice %438 {offsets = [0, 128], sizes = [8, 128], strides = [1, 1]} : vector<8x512xf32> to vector<8x128xf32>
    %446 = arith.negf %445 : vector<8x128xf32>
    %447 = math.exp %446 : vector<8x128xf32>
    %cst_104 = arith.constant 1.000000e+00 : f32
    %448 = vector.broadcast %cst_104 : f32 to vector<8x128xf32>
    %449 = arith.addf %448, %447 : vector<8x128xf32>
    %450 = arith.divf %448, %449 : vector<8x128xf32>
    %451 = vector.extract_strided_slice %438 {offsets = [0, 256], sizes = [8, 128], strides = [1, 1]} : vector<8x512xf32> to vector<8x128xf32>
    %452 = math.tanh %451 : vector<8x128xf32>
    %453 = vector.extract_strided_slice %438 {offsets = [0, 384], sizes = [8, 128], strides = [1, 1]} : vector<8x512xf32> to vector<8x128xf32>
    %454 = arith.negf %453 : vector<8x128xf32>
    %455 = math.exp %454 : vector<8x128xf32>
    %cst_105 = arith.constant 1.000000e+00 : f32
    %456 = vector.broadcast %cst_105 : f32 to vector<8x128xf32>
    %457 = arith.addf %456, %455 : vector<8x128xf32>
    %458 = arith.divf %456, %457 : vector<8x128xf32>
    %459 = arith.mulf %450, %433 : vector<8x128xf32>
    %460 = arith.mulf %444, %452 : vector<8x128xf32>
    %461 = arith.addf %459, %460 : vector<8x128xf32>
    %462 = math.tanh %461 : vector<8x128xf32>
    %463 = arith.mulf %458, %462 : vector<8x128xf32>
    %c56_106 = arith.constant 56 : index
    %c0_107 = arith.constant 0 : index
    %464 = vector.load %arg12[%c56_106, %c0_107] : memref<64x128xf32, #tpu.memory_space<vmem>>, vector<8x128xf32>
    tpu.vector_store %arg12[%c56_106, %c0_107], %463 {strides = array<i32>} : memref<64x128xf32, #tpu.memory_space<vmem>>, vector<8x128xf32>,
    %c0_108 = arith.constant 0 : index
    %c0_109 = arith.constant 0 : index
    %465 = vector.load %arg12[%c0_108, %c0_109] : memref<64x128xf32, #tpu.memory_space<vmem>>, vector<64x128xf32>
    %c0_110 = arith.constant 0 : index
    %c0_111 = arith.constant 0 : index
    %466 = vector.load %arg8[%c0_110, %c0_111] : memref<128x32xf32, #tpu.memory_space<vmem>>, vector<128x32xf32>
    %cst_112 = arith.constant dense<0.000000e+00> : vector<64x32xf32>
    %467 = tpu.matmul %465, %466, %cst_112 {dimension_numbers = #tpu.dot_dimension_numbers<[1], [0], [0], [1], [0, 0, 1, 1], [], []>} : vector<64x128xf32>, vector<128x32xf32>, vector<64x32xf32> -> vector<64x32xf32>
    %c0_113 = arith.constant 0 : index
    %c0_114 = arith.constant 0 : index
    %468 = vector.load %arg9[%c0_113, %c0_114] : memref<1x32xf32, #tpu.memory_space<vmem>>, vector<1x32xf32>
    %469 = vector.broadcast %468 : vector<1x32xf32> to vector<64x32xf32>
    %470 = arith.addf %467, %469 : vector<64x32xf32>
    %471 = math.tanh %470 : vector<64x32xf32>
    %c0_115 = arith.constant 0 : index
    %c0_116 = arith.constant 0 : index
    %472 = vector.load %arg10[%c0_115, %c0_116] : memref<64x32xf32, #tpu.memory_space<vmem>>, vector<64x32xf32>
    tpu.vector_store %arg10[%c0_115, %c0_116], %471 {strides = array<i32>} : memref<64x32xf32, #tpu.memory_space<vmem>>, vector<64x32xf32>,
    return
  }
}

</mosaic_0001>

<llo_original>
// kernel: tpu_custom_call.1
$region0: #{tpu_custom_call.1}
  #allocation0 [shape = 'u32[]', space=smem, size = 0x4, offset = 0x4, fixed_abs, tag = 'smem constant byte address 0x4 - core index']
  #allocation1 [shape = 'u32[144,128]{1,0:T(1,128)}', space=vmem, size = 0x12000, scoped, tag = 'internal scratch']
  #allocation2 [shape = 'f32[64,512]{1,0:T(8,128)}', space=vmem, size = 0x20000, scoped, tag = 'scratch operand']
  #allocation3 [shape = 'f32[64,128]{1,0:T(8,128)}', space=vmem, size = 0x8000, scoped, tag = 'scratch operand']
  %s0 = inlined_call_operand.vmem [shape: f32[64,32], index: 0, kind: input, shape index: {}]
  %s1 = inlined_call_operand.vmem [shape: f32[32,512], index: 1, kind: input, shape index: {}]
  %s2 = inlined_call_operand.hbm [shape: f32[128,512], index: 2, kind: input, shape index: {}]
  %s3 = inlined_call_operand.vmem [shape: f32[1,512], index: 3, kind: input, shape index: {}]
  %s4 = inlined_call_operand.hbm [shape: f32[128,512], index: 4, kind: input, shape index: {}]
  %s5 = inlined_call_operand.hbm [shape: f32[128,512], index: 5, kind: input, shape index: {}]
  %s6 = inlined_call_operand.vmem [shape: f32[1,512], index: 6, kind: input, shape index: {}]
  %s7 = inlined_call_operand.vmem [shape: f32[1,512], index: 7, kind: input, shape index: {}]
  %s8 = inlined_call_operand.vmem [shape: f32[128,32], index: 8, kind: input, shape index: {}]
  %s9 = inlined_call_operand.vmem [shape: f32[1,32], index: 9, kind: input, shape index: {}]
  %s10 = inlined_call_operand.vmem [shape: f32[64,32], index: 10, kind: output, shape index: {}]
  %s11 = sld [smem:[#allocation0]]
  $region62: #{tpu_custom_call.1} parent=0
    _
  %s13 = ssub.s32 1, %s11
  %s14 = scalar_select 0, %s13, %s11
  $region1: #{tpu_custom_call.1} parent=0
    #allocation4 [shape = 'u8[262144]{0}', space=vmem, size = 0x40000, scoped, tag = 'input window, operand 2, single buffered']
    #allocation5 [shape = 's32[1]{0}', space=sflag, size = 0x4, scoped, tag = 'scoped memory for tpu_custom_call.1']
    #allocation6 [shape = 'u8[262144]{0}', space=vmem, size = 0x40000, scoped, tag = 'input window, operand 4, single buffered']
    #allocation7 [shape = 's32[1]{0}', space=sflag, size = 0x4, scoped, tag = 'scoped memory for tpu_custom_call.1']
    #allocation8 [shape = 'u8[262144]{0}', space=vmem, size = 0x40000, scoped, tag = 'input window, operand 5, single buffered']
    %15 = vsyncpa [#allocation5], 0
    %16 = vsyncpa [#allocation7], 0
    // Predicated region
    $region2: #{tpu_custom_call.1} parent=1 // pred_check
      _
    $region3: #{tpu_custom_call.1} parent=1 // pred_check_branch
      %18 = sbr.rel (0) target = $region5
    $region4: #{tpu_custom_call.1} parent=1 // pred_region
      _
    $region5: #{tpu_custom_call.1} parent=1 // pred_fallthru
      _
    // Predicated region
    $region6: #{tpu_custom_call.1} parent=1 // pred_check
      _
    $region7: #{tpu_custom_call.1} parent=1 // pred_check_branch
      %20 = sbr.rel (0) target = $region9
    $region8: #{tpu_custom_call.1} parent=1 // pred_region
      _
    $region9: #{tpu_custom_call.1} parent=1 // pred_fallthru
      _
    // Predicated region
    $region10: #{tpu_custom_call.1} parent=1 // pred_check
      _
    $region11: #{tpu_custom_call.1} parent=1 // pred_check_branch
      %22 = sbr.rel (0) target = $region13
    $region12: #{tpu_custom_call.1} parent=1 // pred_region
      %s24 = ssub.s32 8192, 8192
      %25 = vsyncadd [#allocation5], %s24
      %s26 = sshll.u32 [#allocation4], 4
      %s27 = int_to_ptr.vmem [resolvable:$true] %s26
      %32 = dma.hbm_to_vmem [thread:$0]  %s2, 8192, %s27, [#allocation5], 512, 512, 32
    $region13: #{tpu_custom_call.1} parent=1 // pred_fallthru
      _
    // Predicated region
    $region14: #{tpu_custom_call.1} parent=1 // pred_check
      _
    $region15: #{tpu_custom_call.1} parent=1 // pred_check_branch
      %34 = sbr.rel (0) target = $region17
    $region16: #{tpu_custom_call.1} parent=1 // pred_region
      _
    $region17: #{tpu_custom_call.1} parent=1 // pred_fallthru
      _
    // Predicated region
    $region18: #{tpu_custom_call.1} parent=1 // pred_check
      _
    $region19: #{tpu_custom_call.1} parent=1 // pred_check_branch
      %36 = sbr.rel (0) target = $region21
    $region20: #{tpu_custom_call.1} parent=1 // pred_region
      %s38 = ssub.s32 8192, 8192
      %39 = vsyncadd [#allocation7], %s38
      %s40 = sshll.u32 [#allocation6], 4
      %s41 = int_to_ptr.vmem [resolvable:$true] %s40
      %46 = dma.hbm_to_vmem [thread:$0]  %s4, 8192, %s41, [#allocation7], 512, 512, 32
    $region21: #{tpu_custom_call.1} parent=1 // pred_fallthru
      _
    // Predicated region
    $region22: #{tpu_custom_call.1} parent=1 // pred_check
      _
    $region23: #{tpu_custom_call.1} parent=1 // pred_check_branch
      %48 = sbr.rel (0) target = $region25
    $region24: #{tpu_custom_call.1} parent=1 // pred_region
      %s50 = ssub.s32 8192, 8192
      %51 = vsyncadd [#allocation7], %s50
      %s52 = sshll.u32 [#allocation8], 4
      %s53 = int_to_ptr.vmem [resolvable:$true] %s52
      %58 = dma.hbm_to_vmem [thread:$0]  %s5, 8192, %s53, [#allocation7], 512, 512, 32
    $region25: #{tpu_custom_call.1} parent=1 // pred_fallthru
      _
    // Predicated region
    $region26: #{tpu_custom_call.1} parent=1 // pred_check
      _
    $region27: #{tpu_custom_call.1} parent=1 // pred_check_branch
      %60 = sbr.rel (0) target = $region29
    $region28: #{tpu_custom_call.1} parent=1 // pred_region
      _
    $region29: #{tpu_custom_call.1} parent=1 // pred_fallthru
      _
    // Predicated region
    $region30: #{tpu_custom_call.1} parent=1 // pred_check
      _
    $region31: #{tpu_custom_call.1} parent=1 // pred_check_branch
      %62 = sbr.rel (0) target = $region33
    $region32: #{tpu_custom_call.1} parent=1 // pred_region
      _
    $region33: #{tpu_custom_call.1} parent=1 // pred_fallthru
      _
    // Predicated region
    $region34: #{tpu_custom_call.1} parent=1 // pred_check
      _
    $region35: #{tpu_custom_call.1} parent=1 // pred_check_branch
      %64 = sbr.rel (0) target = $region37
    $region36: #{tpu_custom_call.1} parent=1 // pred_region
      _
    $region37: #{tpu_custom_call.1} parent=1 // pred_fallthru
      _
    // Predicated region
    $region38: #{tpu_custom_call.1} parent=1 // pred_check
      _
    $region39: #{tpu_custom_call.1} parent=1 // pred_check_branch
      %66 = sbr.rel (0) target = $region41
    $region40: #{tpu_custom_call.1} parent=1 // pred_region
      _
    $region41: #{tpu_custom_call.1} parent=1 // pred_fallthru
      _
    // Predicated region
    $region42: #{tpu_custom_call.1} parent=1 // pred_check
      _
    $region43: #{tpu_custom_call.1} parent=1 // pred_check_branch
      %68 = sbr.rel (0) target = $region45
    $region44: #{tpu_custom_call.1} parent=1 // pred_region
      %69 = dma.done [#allocation5], 8192
    $region45: #{tpu_custom_call.1} parent=1 // pred_fallthru
      _
    // Predicated region
    $region46: #{tpu_custom_call.1} parent=1 // pred_check
      _
    $region47: #{tpu_custom_call.1} parent=1 // pred_check_branch
      %71 = sbr.rel (0) target = $region49
    $region48: #{tpu_custom_call.1} parent=1 // pred_region
      %72 = dma.done [#allocation7], 8192
    $region49: #{tpu_custom_call.1} parent=1 // pred_fallthru
      _
    // Predicated region
    $region50: #{tpu_custom_call.1} parent=1 // pred_check
      _
    $region51: #{tpu_custom_call.1} parent=1 // pred_check_branch
      %74 = sbr.rel (0) target = $region53
    $region52: #{tpu_custom_call.1} parent=1 // pred_region
      %75 = dma.done [#allocation7], 8192
    $region53: #{tpu_custom_call.1} parent=1 // pred_fallthru
      _
    %v76 = vld [vmem:[%s0] sm:$0xff]
    %v77 = vld [vmem:[%s0 + $0x8] sm:$0xff]
    %v78 = vld [vmem:[%s0 + $0x10] sm:$0xff]
    %v79 = vld [vmem:[%s0 + $0x18] sm:$0xff]
    %v80 = vld [vmem:[%s0 + $0x20] sm:$0xff]
    %v81 = vld [vmem:[%s0 + $0x28] sm:$0xff]
    %v82 = vld [vmem:[%s0 + $0x30] sm:$0xff]
    %v83 = vld [vmem:[%s0 + $0x38] sm:$0xff]
    %v84 = vld [vmem:[%s1] sm:$0xff]
    %v85 = vld [vmem:[%s1 + $0x8] sm:$0xff]
    %v86 = vld [vmem:[%s1 + $0x10] sm:$0xff]
    %v87 = vld [vmem:[%s1 + $0x18] sm:$0xff]
    %v88 = vld [vmem:[%s1 + $0x20] sm:$0xff]
    %v89 = vld [vmem:[%s1 + $0x28] sm:$0xff]
    %v90 = vld [vmem:[%s1 + $0x30] sm:$0xff]
    %v91 = vld [vmem:[%s1 + $0x38] sm:$0xff]
    %v92 = vld [vmem:[%s1 + $0x40] sm:$0xff]
    %v93 = vld [vmem:[%s1 + $0x48] sm:$0xff]
    %v94 = vld [vmem:[%s1 + $0x50] sm:$0xff]
    %v95 = vld [vmem:[%s1 + $0x58] sm:$0xff]
    %v96 = vld [vmem:[%s1 + $0x60] sm:$0xff]
    %v97 = vld [vmem:[%s1 + $0x68] sm:$0xff]
    %v98 = vld [vmem:[%s1 + $0x70] sm:$0xff]
    %v99 = vld [vmem:[%s1 + $0x78] sm:$0xff]
    %v100 = vld [vmem:[%s3] sm:$0xf]
    %v102 = vlaneseq
    %v103 = vshrl.u32 %v102, 7
    %v104 = vsub.s32 0, %v103
    %v105 = vrot.slane %v100, %v104
    %v106 = vlaneseq
    %v107 = vshrl.u32 %v106, 7
    %v108 = vsub.s32 1, %v107
    %v109 = vrot.slane %v100, %v108
    %v110 = vlaneseq
    %v111 = vshrl.u32 %v110, 7
    %v112 = vsub.s32 2, %v111
    %v113 = vrot.slane %v100, %v112
    %v114 = vlaneseq
    %v115 = vshrl.u32 %v114, 7
    %v116 = vsub.s32 3, %v115
    %v117 = vrot.slane %v100, %v116
    %vm122 = vcmask 261120
    %v124 = vsel %vm122, %v76, 0
    %v127 = vsel %vm122, %v77, 0
    %v130 = vsel %vm122, %v78, 0
    %v133 = vsel %vm122, %v79, 0
    %v136 = vsel %vm122, %v80, 0
    %v139 = vsel %vm122, %v81, 0
    %v142 = vsel %vm122, %v82, 0
    %v145 = vsel %vm122, %v83, 0
    %147 = vmatprep.subr.mxu0 0.0
    %148 = vmatpush1.msra.mxu0 0.0
    %149 = vmatprep.subr.mxu0 0.0
    %150 = vmatpush1.msra.mxu0 0.0
    %151 = vmatprep.subr.mxu0 0.0
    %152 = vmatpush1.msra.mxu0 0.0
    %153 = vmatprep.subr.mxu0 0.0
    %154 = vmatpush1.msra.mxu0 0.0
    %155 = vmatprep.subr.mxu0 0.0
    %156 = vmatpush1.msra.mxu0 0.0
    %157 = vmatprep.subr.mxu0 0.0
    %158 = vmatpush1.msra.mxu0 0.0
    %159 = vmatprep.subr.mxu0 0.0
    %160 = vmatpush1.msra.mxu0 0.0
    %161 = vmatprep.subr.mxu0 0.0
    %162 = vmatpush1.msra.mxu0 0.0
    %163 = vmatprep.subr.mxu0 0.0
    %164 = vmatpush1.msra.mxu0 0.0
    %165 = vmatprep.subr.mxu0 0.0
    %166 = vmatpush1.msra.mxu0 0.0
    %167 = vmatprep.subr.mxu0 0.0
    %168 = vmatpush1.msra.mxu0 0.0
    %169 = vmatprep.subr.mxu0 0.0
    %170 = vmatpush1.msra.mxu0 0.0
    %171 = vmatprep.subr.mxu0 %v97
    %172 = vmatpush1.msra.mxu0 %v96
    %173 = vmatprep.subr.mxu0 %v93
    %174 = vmatpush1.msra.mxu0 %v92
    %175 = vmatprep.subr.mxu0 %v89
    %176 = vmatpush1.msra.mxu0 %v88
    %177 = vmatprep.subr.mxu0 %v85
    %178 = vmatpush1.msra.mxu0 %v84
    %179 = vmatprep.subr.mxu0 0.0
    %180 = vmatpush2.msra.mxu0 0.0
    %181 = vmatprep.subr.mxu0 0.0
    %182 = vmatpush2.msra.mxu0 0.0
    %183 = vmatprep.subr.mxu0 0.0
    %184 = vmatpush2.msra.mxu0 0.0
    %185 = vmatprep.subr.mxu0 0.0
    %186 = vmatpush2.msra.mxu0 0.0
    %187 = vmatprep.subr.mxu0 0.0
    %188 = vmatpush2.msra.mxu0 0.0
    %189 = vmatprep.subr.mxu0 0.0
    %190 = vmatpush2.msra.mxu0 0.0
    %191 = vmatprep.subr.mxu0 0.0
    %192 = vmatpush2.msra.mxu0 0.0
    %193 = vmatprep.subr.mxu0 0.0
    %194 = vmatpush2.msra.mxu0 0.0
    %195 = vmatprep.subr.mxu0 0.0
    %196 = vmatpush2.msra.mxu0 0.0
    %197 = vmatprep.subr.mxu0 0.0
    %198 = vmatpush2.msra.mxu0 0.0
    %199 = vmatprep.subr.mxu0 0.0
    %200 = vmatpush2.msra.mxu0 0.0
    %201 = vmatprep.subr.mxu0 0.0
    %202 = vmatpush2.msra.mxu0 0.0
    %203 = vmatprep.subr.mxu0 0.0
    %204 = vmatpush2.msra.mxu0 0.0
    %205 = vmatprep.subr.mxu0 0.0
    %206 = vmatpush2.msra.mxu0 0.0
    %207 = vmatprep.subr.mxu0 0.0
    %208 = vmatpush2.msra.mxu0 0.0
    %209 = vmatprep.subr.mxu0 0.0
    %210 = vmatpush2.msra.mxu0 0.0
    %211 = vmatprep.mubr.f32.mxu0 0.0
    %212 = vmatmul.mubr.f32.gmra.mxu0 %v124
    %v213 = vpop.f32.mrf.mxu0
    %v214 = vadd.f32 %v105, %v213
    %v215 = vpop.f32.mrf.mxu0
    %v216 = vadd.f32 %v109, %v215
    %217 = vmatprep.mubr.f32.mxu0 0.0
    %218 = vmatmul.mubr.f32.gmra.mxu0 %v127
    %v219 = vpop.f32.mrf.mxu0
    %v220 = vadd.f32 %v105, %v219
    %v221 = vpop.f32.mrf.mxu0
    %v222 = vadd.f32 %v109, %v221
    %223 = vmatprep.mubr.f32.mxu0 0.0
    %224 = vmatmul.mubr.f32.gmra.mxu0 %v130
    %v225 = vpop.f32.mrf.mxu0
    %v226 = vadd.f32 %v105, %v225
    %v227 = vpop.f32.mrf.mxu0
    %v228 = vadd.f32 %v109, %v227
    %229 = vmatprep.mubr.f32.mxu0 0.0
    %230 = vmatmul.mubr.f32.gmra.mxu0 %v133
    %v231 = vpop.f32.mrf.mxu0
    %v232 = vadd.f32 %v105, %v231
    %v233 = vpop.f32.mrf.mxu0
    %v234 = vadd.f32 %v109, %v233
    %235 = vmatprep.mubr.f32.mxu0 0.0
    %236 = vmatmul.mubr.f32.gmra.mxu0 %v136
    %v237 = vpop.f32.mrf.mxu0
    %v238 = vadd.f32 %v105, %v237
    %v239 = vpop.f32.mrf.mxu0
    %v240 = vadd.f32 %v109, %v239
    %241 = vmatprep.mubr.f32.mxu0 0.0
    %242 = vmatmul.mubr.f32.gmra.mxu0 %v139
    %v243 = vpop.f32.mrf.mxu0
    %v244 = vadd.f32 %v105, %v243
    %v245 = vpop.f32.mrf.mxu0
    %v246 = vadd.f32 %v109, %v245
    %247 = vmatprep.mubr.f32.mxu0 0.0
    %248 = vmatmul.mubr.f32.gmra.mxu0 %v142
    %v249 = vpop.f32.mrf.mxu0
    %v250 = vadd.f32 %v105, %v249
    %v251 = vpop.f32.mrf.mxu0
    %v252 = vadd.f32 %v109, %v251
    %253 = vmatprep.mubr.f32.mxu0 0.0
    %254 = vmatmul.mubr.f32.gmra.mxu0 %v145
    %v255 = vpop.f32.mrf.mxu0
    %v256 = vadd.f32 %v105, %v255
    %v257 = vpop.f32.mrf.mxu0
    %v258 = vadd.f32 %v109, %v257
    %259 = vdwg.mxu0
    %260 = vmatprep.subr.mxu0 0.0
    %261 = vmatpush1.msra.mxu0 0.0
    %262 = vmatprep.subr.mxu0 0.0
    %263 = vmatpush1.msra.mxu0 0.0
    %264 = vmatprep.subr.mxu0 0.0
    %265 = vmatpush1.msra.mxu0 0.0
    %266 = vmatprep.subr.mxu0 0.0
    %267 = vmatpush1.msra.mxu0 0.0
    %268 = vmatprep.subr.mxu0 0.0
    %269 = vmatpush1.msra.mxu0 0.0
    %270 = vmatprep.subr.mxu0 0.0
    %271 = vmatpush1.msra.mxu0 0.0
    %272 = vmatprep.subr.mxu0 0.0
    %273 = vmatpush1.msra.mxu0 0.0
    %274 = vmatprep.subr.mxu0 0.0
    %275 = vmatpush1.msra.mxu0 0.0
    %276 = vmatprep.subr.mxu0 0.0
    %277 = vmatpush1.msra.mxu0 0.0
    %278 = vmatprep.subr.mxu0 0.0
    %279 = vmatpush1.msra.mxu0 0.0
    %280 = vmatprep.subr.mxu0 0.0
    %281 = vmatpush1.msra.mxu0 0.0
    %282 = vmatprep.subr.mxu0 0.0
    %283 = vmatpush1.msra.mxu0 0.0
    %284 = vmatprep.subr.mxu0 %v99
    %285 = vmatpush1.msra.mxu0 %v98
    %286 = vmatprep.subr.mxu0 %v95
    %287 = vmatpush1.msra.mxu0 %v94
    %288 = vmatprep.subr.mxu0 %v91
    %289 = vmatpush1.msra.mxu0 %v90
    %290 = vmatprep.subr.mxu0 %v87
    %291 = vmatpush1.msra.mxu0 %v86
    %292 = vmatprep.subr.mxu0 0.0
    %293 = vmatpush2.msra.mxu0 0.0
    %294 = vmatprep.subr.mxu0 0.0
    %295 = vmatpush2.msra.mxu0 0.0
    %296 = vmatprep.subr.mxu0 0.0
    %297 = vmatpush2.msra.mxu0 0.0
    %298 = vmatprep.subr.mxu0 0.0
    %299 = vmatpush2.msra.mxu0 0.0
    %300 = vmatprep.subr.mxu0 0.0
    %301 = vmatpush2.msra.mxu0 0.0
    %302 = vmatprep.subr.mxu0 0.0
    %303 = vmatpush2.msra.mxu0 0.0
    %304 = vmatprep.subr.mxu0 0.0
    %305 = vmatpush2.msra.mxu0 0.0
    %306 = vmatprep.subr.mxu0 0.0
    %307 = vmatpush2.msra.mxu0 0.0
    %308 = vmatprep.subr.mxu0 0.0
    %309 = vmatpush2.msra.mxu0 0.0
    %310 = vmatprep.subr.mxu0 0.0
    %311 = vmatpush2.msra.mxu0 0.0
    %312 = vmatprep.subr.mxu0 0.0
    %313 = vmatpush2.msra.mxu0 0.0
    %314 = vmatprep.subr.mxu0 0.0
    %315 = vmatpush2.msra.mxu0 0.0
    %316 = vmatprep.subr.mxu0 0.0
    %317 = vmatpush2.msra.mxu0 0.0
    %318 = vmatprep.subr.mxu0 0.0
    %319 = vmatpush2.msra.mxu0 0.0
    %320 = vmatprep.subr.mxu0 0.0
    %321 = vmatpush2.msra.mxu0 0.0
    %322 = vmatprep.subr.mxu0 0.0
    %323 = vmatpush2.msra.mxu0 0.0
    %324 = vmatprep.mubr.f32.mxu0 0.0
    %325 = vmatmul.mubr.f32.gmra.mxu0 %v124
    %v326 = vpop.f32.mrf.mxu0
    %v327 = vadd.f32 %v113, %v326
    %v328 = vpop.f32.mrf.mxu0
    %v329 = vadd.f32 %v117, %v328
    %330 = vmatprep.mubr.f32.mxu0 0.0
    %331 = vmatmul.mubr.f32.gmra.mxu0 %v127
    %v332 = vpop.f32.mrf.mxu0
    %v333 = vadd.f32 %v113, %v332
    %v334 = vpop.f32.mrf.mxu0
    %v335 = vadd.f32 %v117, %v334
    %336 = vmatprep.mubr.f32.mxu0 0.0
    %337 = vmatmul.mubr.f32.gmra.mxu0 %v130
    %v338 = vpop.f32.mrf.mxu0
    %v339 = vadd.f32 %v113, %v338
    %v340 = vpop.f32.mrf.mxu0
    %v341 = vadd.f32 %v117, %v340
    %342 = vmatprep.mubr.f32.mxu0 0.0
    %343 = vmatmul.mubr.f32.gmra.mxu0 %v133
    %v344 = vpop.f32.mrf.mxu0
    %v345 = vadd.f32 %v113, %v344
    %v346 = vpop.f32.mrf.mxu0
    %v347 = vadd.f32 %v117, %v346
    %348 = vmatprep.mubr.f32.mxu0 0.0
    %349 = vmatmul.mubr.f32.gmra.mxu0 %v136
    %v350 = vpop.f32.mrf.mxu0
    %v351 = vadd.f32 %v113, %v350
    %v352 = vpop.f32.mrf.mxu0
    %v353 = vadd.f32 %v117, %v352
    %354 = vmatprep.mubr.f32.mxu0 0.0
    %355 = vmatmul.mubr.f32.gmra.mxu0 %v139
    %v356 = vpop.f32.mrf.mxu0
    %v357 = vadd.f32 %v113, %v356
    %v358 = vpop.f32.mrf.mxu0
    %v359 = vadd.f32 %v117, %v358
    %360 = vmatprep.mubr.f32.mxu0 0.0
    %361 = vmatmul.mubr.f32.gmra.mxu0 %v142
    %v362 = vpop.f32.mrf.mxu0
    %v363 = vadd.f32 %v113, %v362
    %v364 = vpop.f32.mrf.mxu0
    %v365 = vadd.f32 %v117, %v364
    %366 = vmatprep.mubr.f32.mxu0 0.0
    %367 = vmatmul.mubr.f32.gmra.mxu0 %v145
    %v368 = vpop.f32.mrf.mxu0
    %v369 = vadd.f32 %v113, %v368
    %v370 = vpop.f32.mrf.mxu0
    %v371 = vadd.f32 %v117, %v370
    %372 = vdwg.mxu0
    %373 = vst [vmem:[#allocation2] sm:$0xff] %v214
    %374 = vst [vmem:[#allocation2 + $0x8] sm:$0xff] %v216
    %375 = vst [vmem:[#allocation2 + $0x10] sm:$0xff] %v327
    %376 = vst [vmem:[#allocation2 + $0x18] sm:$0xff] %v329
    %377 = vst [vmem:[#allocation2 + $0x20] sm:$0xff] %v220
    %378 = vst [vmem:[#allocation2 + $0x28] sm:$0xff] %v222
    %379 = vst [vmem:[#allocation2 + $0x30] sm:$0xff] %v333
    %380 = vst [vmem:[#allocation2 + $0x38] sm:$0xff] %v335
    %381 = vst [vmem:[#allocation2 + $0x40] sm:$0xff] %v226
    %382 = vst [vmem:[#allocation2 + $0x48] sm:$0xff] %v228
    %383 = vst [vmem:[#allocation2 + $0x50] sm:$0xff] %v339
    %384 = vst [vmem:[#allocation2 + $0x58] sm:$0xff] %v341
    %385 = vst [vmem:[#allocation2 + $0x60] sm:$0xff] %v232
    %386 = vst [vmem:[#allocation2 + $0x68] sm:$0xff] %v234
    %387 = vst [vmem:[#allocation2 + $0x70] sm:$0xff] %v345
    %388 = vst [vmem:[#allocation2 + $0x78] sm:$0xff] %v347
    %389 = vst [vmem:[#allocation2 + $0x80] sm:$0xff] %v238
    %390 = vst [vmem:[#allocation2 + $0x88] sm:$0xff] %v240
    %391 = vst [vmem:[#allocation2 + $0x90] sm:$0xff] %v351
    %392 = vst [vmem:[#allocation2 + $0x98] sm:$0xff] %v353
    %393 = vst [vmem:[#allocation2 + $0xa0] sm:$0xff] %v244
    %394 = vst [vmem:[#allocation2 + $0xa8] sm:$0xff] %v246
    %395 = vst [vmem:[#allocation2 + $0xb0] sm:$0xff] %v357
    %396 = vst [vmem:[#allocation2 + $0xb8] sm:$0xff] %v359
    %397 = vst [vmem:[#allocation2 + $0xc0] sm:$0xff] %v250
    %398 = vst [vmem:[#allocation2 + $0xc8] sm:$0xff] %v252
    %399 = vst [vmem:[#allocation2 + $0xd0] sm:$0xff] %v363
    %400 = vst [vmem:[#allocation2 + $0xd8] sm:$0xff] %v365
    %401 = vst [vmem:[#allocation2 + $0xe0] sm:$0xff] %v256
    %402 = vst [vmem:[#allocation2 + $0xe8] sm:$0xff] %v258
    %403 = vst [vmem:[#allocation2 + $0xf0] sm:$0xff] %v369
    %404 = vst [vmem:[#allocation2 + $0xf8] sm:$0xff] %v371
    %v405 = vld [vmem:[#allocation4] sm:$0xff]
    %v406 = vld [vmem:[#allocation4 + $0x8] sm:$0xff]
    %v407 = vld [vmem:[#allocation4 + $0x10] sm:$0xff]
    %v408 = vld [vmem:[#allocation4 + $0x18] sm:$0xff]
    %v409 = vld [vmem:[#allocation4 + $0x20] sm:$0xff]
    %v410 = vld [vmem:[#allocation4 + $0x28] sm:$0xff]
    %v411 = vld [vmem:[#allocation4 + $0x30] sm:$0xff]
    %v412 = vld [vmem:[#allocation4 + $0x38] sm:$0xff]
    %v413 = vld [vmem:[#allocation4 + $0x40] sm:$0xff]
    %v414 = vld [vmem:[#allocation4 + $0x48] sm:$0xff]
    %v415 = vld [vmem:[#allocation4 + $0x50] sm:$0xff]
    %v416 = vld [vmem:[#allocation4 + $0x58] sm:$0xff]
    %v417 = vld [vmem:[#allocation4 + $0x60] sm:$0xff]
    %v418 = vld [vmem:[#allocation4 + $0x68] sm:$0xff]
    %v419 = vld [vmem:[#allocation4 + $0x70] sm:$0xff]
    %v420 = vld [vmem:[#allocation4 + $0x78] sm:$0xff]
    %v421 = vld [vmem:[#allocation4 + $0x80] sm:$0xff]
    %v422 = vld [vmem:[#allocation4 + $0x88] sm:$0xff]
    %v423 = vld [vmem:[#allocation4 + $0x90] sm:$0xff]
    %v424 = vld [vmem:[#allocation4 + $0x98] sm:$0xff]
    %v425 = vld [vmem:[#allocation4 + $0xa0] sm:$0xff]
    %v426 = vld [vmem:[#allocation4 + $0xa8] sm:$0xff]
    %v427 = vld [vmem:[#allocation4 + $0xb0] sm:$0xff]
    %v428 = vld [vmem:[#allocation4 + $0xb8] sm:$0xff]
    %v429 = vld [vmem:[#allocation4 + $0xc0] sm:$0xff]
    %v430 = vld [vmem:[#allocation4 + $0xc8] sm:$0xff]
    %v431 = vld [vmem:[#allocation4 + $0xd0] sm:$0xff]
    %v432 = vld [vmem:[#allocation4 + $0xd8] sm:$0xff]
    %v433 = vld [vmem:[#allocation4 + $0xe0] sm:$0xff]
    %v434 = vld [vmem:[#allocation4 + $0xe8] sm:$0xff]
    %v435 = vld [vmem:[#allocation4 + $0xf0] sm:$0xff]
    %v436 = vld [vmem:[#allocation4 + $0xf8] sm:$0xff]
    %v437 = vld [vmem:[#allocation4 + $0x100] sm:$0xff]
    %v438 = vld [vmem:[#allocation4 + $0x108] sm:$0xff]
    %v439 = vld [vmem:[#allocation4 + $0x110] sm:$0xff]
    %v440 = vld [vmem:[#allocation4 + $0x118] sm:$0xff]
    %v441 = vld [vmem:[#allocation4 + $0x120] sm:$0xff]
    %v442 = vld [vmem:[#allocation4 + $0x128] sm:$0xff]
    %v443 = vld [vmem:[#allocation4 + $0x130] sm:$0xff]
    %v444 = vld [vmem:[#allocation4 + $0x138] sm:$0xff]
    %v445 = vld [vmem:[#allocation4 + $0x140] sm:$0xff]
    %v446 = vld [vmem:[#allocation4 + $0x148] sm:$0xff]
    %v447 = vld [vmem:[#allocation4 + $0x150] sm:$0xff]
    %v448 = vld [vmem:[#allocation4 + $0x158] sm:$0xff]
    %v449 = vld [vmem:[#allocation4 + $0x160] sm:$0xff]
    %v450 = vld [vmem:[#allocation4 + $0x168] sm:$0xff]
    %v451 = vld [vmem:[#allocation4 + $0x170] sm:$0xff]
    %v452 = vld [vmem:[#allocation4 + $0x178] sm:$0xff]
    %v453 = vld [vmem:[#allocation4 + $0x180] sm:$0xff]
    %v454 = vld [vmem:[#allocation4 + $0x188] sm:$0xff]
    %v455 = vld [vmem:[#allocation4 + $0x190] sm:$0xff]
    %v456 = vld [vmem:[#allocation4 + $0x198] sm:$0xff]
    %v457 = vld [vmem:[#allocation4 + $0x1a0] sm:$0xff]
    %v458 = vld [vmem:[#allocation4 + $0x1a8] sm:$0xff]
    %v459 = vld [vmem:[#allocation4 + $0x1b0] sm:$0xff]
    %v460 = vld [vmem:[#allocation4 + $0x1b8] sm:$0xff]
    %v461 = vld [vmem:[#allocation4 + $0x1c0] sm:$0xff]
    %v462 = vld [vmem:[#allocation4 + $0x1c8] sm:$0xff]
    %v463 = vld [vmem:[#allocation4 + $0x1d0] sm:$0xff]
    %v464 = vld [vmem:[#allocation4 + $0x1d8] sm:$0xff]
    %v465 = vld [vmem:[#allocation4 + $0x1e0] sm:$0xff]
    %v466 = vld [vmem:[#allocation4 + $0x1e8] sm:$0xff]
    %v467 = vld [vmem:[#allocation4 + $0x1f0] sm:$0xff]
    %v468 = vld [vmem:[#allocation4 + $0x1f8] sm:$0xff]
    %v469 = vld [vmem:[#allocation2] sm:$0xff]
    %v470 = vld [vmem:[#allocation2 + $0x8] sm:$0xff]
    %v471 = vld [vmem:[#allocation2 + $0x10] sm:$0xff]
    %v472 = vld [vmem:[#allocation2 + $0x18] sm:$0xff]
    %473 = vmatprep.subr.mxu0 %v466
    %474 = vmatpush1.msra.mxu0 %v465
    %475 = vmatprep.subr.mxu0 %v462
    %476 = vmatpush1.msra.mxu0 %v461
    %477 = vmatprep.subr.mxu0 %v458
    %478 = vmatpush1.msra.mxu0 %v457
    %479 = vmatprep.subr.mxu0 %v454
    %480 = vmatpush1.msra.mxu0 %v453
    %481 = vmatprep.subr.mxu0 %v450
    %482 = vmatpush1.msra.mxu0 %v449
    %483 = vmatprep.subr.mxu0 %v446
    %484 = vmatpush1.msra.mxu0 %v445
    %485 = vmatprep.subr.mxu0 %v442
    %486 = vmatpush1.msra.mxu0 %v441
    %487 = vmatprep.subr.mxu0 %v438
    %488 = vmatpush1.msra.mxu0 %v437
    %489 = vmatprep.subr.mxu0 %v434
    %490 = vmatpush1.msra.mxu0 %v433
    %491 = vmatprep.subr.mxu0 %v430
    %492 = vmatpush1.msra.mxu0 %v429
    %493 = vmatprep.subr.mxu0 %v426
    %494 = vmatpush1.msra.mxu0 %v425
    %495 = vmatprep.subr.mxu0 %v422
    %496 = vmatpush1.msra.mxu0 %v421
    %497 = vmatprep.subr.mxu0 %v418
    %498 = vmatpush1.msra.mxu0 %v417
    %499 = vmatprep.subr.mxu0 %v414
    %500 = vmatpush1.msra.mxu0 %v413
    %501 = vmatprep.subr.mxu0 %v410
    %502 = vmatpush1.msra.mxu0 %v409
    %503 = vmatprep.subr.mxu0 %v406
    %504 = vmatpush1.msra.mxu0 %v405
    %505 = vmatprep.subr.mxu0 0.0
    %506 = vmatpush2.msra.mxu0 0.0
    %507 = vmatprep.subr.mxu0 0.0
    %508 = vmatpush2.msra.mxu0 0.0
    %509 = vmatprep.subr.mxu0 0.0
    %510 = vmatpush2.msra.mxu0 0.0
    %511 = vmatprep.subr.mxu0 0.0
    %512 = vmatpush2.msra.mxu0 0.0
    %513 = vmatprep.subr.mxu0 0.0
    %514 = vmatpush2.msra.mxu0 0.0
    %515 = vmatprep.subr.mxu0 0.0
    %516 = vmatpush2.msra.mxu0 0.0
    %517 = vmatprep.subr.mxu0 0.0
    %518 = vmatpush2.msra.mxu0 0.0
    %519 = vmatprep.subr.mxu0 0.0
    %520 = vmatpush2.msra.mxu0 0.0
    %521 = vmatprep.subr.mxu0 0.0
    %522 = vmatpush2.msra.mxu0 0.0
    %523 = vmatprep.subr.mxu0 0.0
    %524 = vmatpush2.msra.mxu0 0.0
    %525 = vmatprep.subr.mxu0 0.0
    %526 = vmatpush2.msra.mxu0 0.0
    %527 = vmatprep.subr.mxu0 0.0
    %528 = vmatpush2.msra.mxu0 0.0
    %529 = vmatprep.subr.mxu0 0.0
    %530 = vmatpush2.msra.mxu0 0.0
    %531 = vmatprep.subr.mxu0 0.0
    %532 = vmatpush2.msra.mxu0 0.0
    %533 = vmatprep.subr.mxu0 0.0
    %534 = vmatpush2.msra.mxu0 0.0
    %535 = vmatprep.subr.mxu0 0.0
    %536 = vmatpush2.msra.mxu0 0.0
    %537 = vmatprep.mubr.f32.mxu0 0.0
    %538 = vmatmul.mubr.f32.gmra.mxu0 0.0
    %v539 = vpop.f32.mrf.mxu0
    %v540 = vadd.f32 0.0, %v539
    %v541 = vpop.f32.mrf.mxu0
    %v542 = vadd.f32 0.0, %v541
    %543 = vdwg.mxu0
    %544 = vmatprep.subr.mxu0 %v468
    %545 = vmatpush1.msra.mxu0 %v467
    %546 = vmatprep.subr.mxu0 %v464
    %547 = vmatpush1.msra.mxu0 %v463
    %548 = vmatprep.subr.mxu0 %v460
    %549 = vmatpush1.msra.mxu0 %v459
    %550 = vmatprep.subr.mxu0 %v456
    %551 = vmatpush1.msra.mxu0 %v455
    %552 = vmatprep.subr.mxu0 %v452
    %553 = vmatpush1.msra.mxu0 %v451
    %554 = vmatprep.subr.mxu0 %v448
    %555 = vmatpush1.msra.mxu0 %v447
    %556 = vmatprep.subr.mxu0 %v444
    %557 = vmatpush1.msra.mxu0 %v443
    %558 = vmatprep.subr.mxu0 %v440
    %559 = vmatpush1.msra.mxu0 %v439
    %560 = vmatprep.subr.mxu0 %v436
    %561 = vmatpush1.msra.mxu0 %v435
    %562 = vmatprep.subr.mxu0 %v432
    %563 = vmatpush1.msra.mxu0 %v431
    %564 = vmatprep.subr.mxu0 %v428
    %565 = vmatpush1.msra.mxu0 %v427
    %566 = vmatprep.subr.mxu0 %v424
    %567 = vmatpush1.msra.mxu0 %v423
    %568 = vmatprep.subr.mxu0 %v420
    %569 = vmatpush1.msra.mxu0 %v419
    %570 = vmatprep.subr.mxu0 %v416
    %571 = vmatpush1.msra.mxu0 %v415
    %572 = vmatprep.subr.mxu0 %v412
    %573 = vmatpush1.msra.mxu0 %v411
    %574 = vmatprep.subr.mxu0 %v408
    %575 = vmatpush1.msra.mxu0 %v407
    %576 = vmatprep.subr.mxu0 0.0
    %577 = vmatpush2.msra.mxu0 0.0
    %578 = vmatprep.subr.mxu0 0.0
    %579 = vmatpush2.msra.mxu0 0.0
    %580 = vmatprep.subr.mxu0 0.0
    %581 = vmatpush2.msra.mxu0 0.0
    %582 = vmatprep.subr.mxu0 0.0
    %583 = vmatpush2.msra.mxu0 0.0
    %584 = vmatprep.subr.mxu0 0.0
    %585 = vmatpush2.msra.mxu0 0.0
    %586 = vmatprep.subr.mxu0 0.0
    %587 = vmatpush2.msra.mxu0 0.0
    %588 = vmatprep.subr.mxu0 0.0
    %589 = vmatpush2.msra.mxu0 0.0
    %590 = vmatprep.subr.mxu0 0.0
    %591 = vmatpush2.msra.mxu0 0.0
    %592 = vmatprep.subr.mxu0 0.0
    %593 = vmatpush2.msra.mxu0 0.0
    %594 = vmatprep.subr.mxu0 0.0
    %595 = vmatpush2.msra.mxu0 0.0
    %596 = vmatprep.subr.mxu0 0.0
    %597 = vmatpush2.msra.mxu0 0.0
    %598 = vmatprep.subr.mxu0 0.0
    %599 = vmatpush2.msra.mxu0 0.0
    %600 = vmatprep.subr.mxu0 0.0
    %601 = vmatpush2.msra.mxu0 0.0
    %602 = vmatprep.subr.mxu0 0.0
    %603 = vmatpush2.msra.mxu0 0.0
    %604 = vmatprep.subr.mxu0 0.0
    %605 = vmatpush2.msra.mxu0 0.0
    %606 = vmatprep.subr.mxu0 0.0
    %607 = vmatpush2.msra.mxu0 0.0
    %608 = vmatprep.mubr.f32.mxu0 0.0
    %609 = vmatmul.mubr.f32.gmra.mxu0 0.0
    %v610 = vpop.f32.mrf.mxu0
    %v611 = vadd.f32 0.0, %v610
    %v612 = vpop.f32.mrf.mxu0
    %v613 = vadd.f32 0.0, %v612
    %614 = vdwg.mxu0
    %v615 = vadd.f32 %v469, %v540
    %v616 = vadd.f32 %v470, %v542
    %v617 = vadd.f32 %v471, %v611
    %v618 = vadd.f32 %v472, %v613
    %v619 = vxor.u32 %v615, 2147483648
    %v620 = vmul.f32 %v619, 1.442695
    %v621 = vpow.pop %v620
    %v622 = vadd.f32 %v621, 1.0
    %v623 = vrcp.pop %v622
    %v624 = vmul.f32 1.0, %v623
    %v625 = vxor.u32 %v616, 2147483648
    %v626 = vmul.f32 %v625, 1.442695
    %v627 = vpow.pop %v626
    %v628 = vadd.f32 %v627, 1.0
    %v629 = vrcp.pop %v628
    %v630 = vmul.f32 1.0, %v629
    %v631 = vtanh.pop %v617
    %v632 = vxor.u32 %v618, 2147483648
    %v633 = vmul.f32 %v632, 1.442695
    %v634 = vpow.pop %v633
    %v635 = vadd.f32 %v634, 1.0
    %v636 = vrcp.pop %v635
    %v637 = vmul.f32 1.0, %v636
    %v638 = vmul.f32 %v630, 0.0
    %v639 = vmul.f32 %v624, %v631
    %v640 = vadd.f32 %v638, %v639
    %v641 = vtanh.pop %v640
    %v642 = vmul.f32 %v637, %v641
    %v643 = vld [vmem:[#allocation2 + $0x20] sm:$0xff]
    %v644 = vld [vmem:[#allocation2 + $0x28] sm:$0xff]
    %v645 = vld [vmem:[#allocation2 + $0x30] sm:$0xff]
    %v646 = vld [vmem:[#allocation2 + $0x38] sm:$0xff]
    %647 = vmatprep.subr.mxu0 %v466
    %648 = vmatpush1.msra.mxu0 %v465
    %649 = vmatprep.subr.mxu0 %v462
    %650 = vmatpush1.msra.mxu0 %v461
    %651 = vmatprep.subr.mxu0 %v458
    %652 = vmatpush1.msra.mxu0 %v457
    %653 = vmatprep.subr.mxu0 %v454
    %654 = vmatpush1.msra.mxu0 %v453
    %655 = vmatprep.subr.mxu0 %v450
    %656 = vmatpush1.msra.mxu0 %v449
    %657 = vmatprep.subr.mxu0 %v446
    %658 = vmatpush1.msra.mxu0 %v445
    %659 = vmatprep.subr.mxu0 %v442
    %660 = vmatpush1.msra.mxu0 %v441
    %661 = vmatprep.subr.mxu0 %v438
    %662 = vmatpush1.msra.mxu0 %v437
    %663 = vmatprep.subr.mxu0 %v434
    %664 = vmatpush1.msra.mxu0 %v433
    %665 = vmatprep.subr.mxu0 %v430
    %666 = vmatpush1.msra.mxu0 %v429
    %667 = vmatprep.subr.mxu0 %v426
    %668 = vmatpush1.msra.mxu0 %v425
    %669 = vmatprep.subr.mxu0 %v422
    %670 = vmatpush1.msra.mxu0 %v421
    %671 = vmatprep.subr.mxu0 %v418
    %672 = vmatpush1.msra.mxu0 %v417
    %673 = vmatprep.subr.mxu0 %v414
    %674 = vmatpush1.msra.mxu0 %v413
    %675 = vmatprep.subr.mxu0 %v410
    %676 = vmatpush1.msra.mxu0 %v409
    %677 = vmatprep.subr.mxu0 %v406
    %678 = vmatpush1.msra.mxu0 %v405
    %679 = vmatprep.subr.mxu0 0.0
    %680 = vmatpush2.msra.mxu0 0.0
    %681 = vmatprep.subr.mxu0 0.0
    %682 = vmatpush2.msra.mxu0 0.0
    %683 = vmatprep.subr.mxu0 0.0
    %684 = vmatpush2.msra.mxu0 0.0
    %685 = vmatprep.subr.mxu0 0.0
    %686 = vmatpush2.msra.mxu0 0.0
    %687 = vmatprep.subr.mxu0 0.0
    %688 = vmatpush2.msra.mxu0 0.0
    %689 = vmatprep.subr.mxu0 0.0
    %690 = vmatpush2.msra.mxu0 0.0
    %691 = vmatprep.subr.mxu0 0.0
    %692 = vmatpush2.msra.mxu0 0.0
    %693 = vmatprep.subr.mxu0 0.0
    %694 = vmatpush2.msra.mxu0 0.0
    %695 = vmatprep.subr.mxu0 0.0
    %696 = vmatpush2.msra.mxu0 0.0
    %697 = vmatprep.subr.mxu0 0.0
    %698 = vmatpush2.msra.mxu0 0.0
    %699 = vmatprep.subr.mxu0 0.0
    %700 = vmatpush2.msra.mxu0 0.0
    %701 = vmatprep.subr.mxu0 0.0
    %702 = vmatpush2.msra.mxu0 0.0
    %703 = vmatprep.subr.mxu0 0.0
    %704 = vmatpush2.msra.mxu0 0.0
    %705 = vmatprep.subr.mxu0 0.0
    %706 = vmatpush2.msra.mxu0 0.0
    %707 = vmatprep.subr.mxu0 0.0
    %708 = vmatpush2.msra.mxu0 0.0
    %709 = vmatprep.subr.mxu0 0.0
    %710 = vmatpush2.msra.mxu0 0.0
    %711 = vmatprep.mubr.f32.mxu0 0.0
    %712 = vmatmul.mubr.f32.gmra.mxu0 %v642
    %v713 = vpop.f32.mrf.mxu0
    %v714 = vadd.f32 0.0, %v713
    %v715 = vpop.f32.mrf.mxu0
    %v716 = vadd.f32 0.0, %v715
    %717 = vdwg.mxu0
    %718 = vmatprep.subr.mxu0 %v468
    %719 = vmatpush1.msra.mxu0 %v467
    %720 = vmatprep.subr.mxu0 %v464
    %721 = vmatpush1.msra.mxu0 %v463
    %722 = vmatprep.subr.mxu0 %v460
    %723 = vmatpush1.msra.mxu0 %v459
    %724 = vmatprep.subr.mxu0 %v456
    %725 = vmatpush1.msra.mxu0 %v455
    %726 = vmatprep.subr.mxu0 %v452
    %727 = vmatpush1.msra.mxu0 %v451
    %728 = vmatprep.subr.mxu0 %v448
    %729 = vmatpush1.msra.mxu0 %v447
    %730 = vmatprep.subr.mxu0 %v444
    %731 = vmatpush1.msra.mxu0 %v443
    %732 = vmatprep.subr.mxu0 %v440
    %733 = vmatpush1.msra.mxu0 %v439
    %734 = vmatprep.subr.mxu0 %v436
    %735 = vmatpush1.msra.mxu0 %v435
    %736 = vmatprep.subr.mxu0 %v432
    %737 = vmatpush1.msra.mxu0 %v431
    %738 = vmatprep.subr.mxu0 %v428
    %739 = vmatpush1.msra.mxu0 %v427
    %740 = vmatprep.subr.mxu0 %v424
    %741 = vmatpush1.msra.mxu0 %v423
    %742 = vmatprep.subr.mxu0 %v420
    %743 = vmatpush1.msra.mxu0 %v419
    %744 = vmatprep.subr.mxu0 %v416
    %745 = vmatpush1.msra.mxu0 %v415
    %746 = vmatprep.subr.mxu0 %v412
    %747 = vmatpush1.msra.mxu0 %v411
    %748 = vmatprep.subr.mxu0 %v408
    %749 = vmatpush1.msra.mxu0 %v407
    %750 = vmatprep.subr.mxu0 0.0
    %751 = vmatpush2.msra.mxu0 0.0
    %752 = vmatprep.subr.mxu0 0.0
    %753 = vmatpush2.msra.mxu0 0.0
    %754 = vmatprep.subr.mxu0 0.0
    %755 = vmatpush2.msra.mxu0 0.0
    %756 = vmatprep.subr.mxu0 0.0
    %757 = vmatpush2.msra.mxu0 0.0
    %758 = vmatprep.subr.mxu0 0.0
    %759 = vmatpush2.msra.mxu0 0.0
    %760 = vmatprep.subr.mxu0 0.0
    %761 = vmatpush2.msra.mxu0 0.0
    %762 = vmatprep.subr.mxu0 0.0
    %763 = vmatpush2.msra.mxu0 0.0
    %764 = vmatprep.subr.mxu0 0.0
    %765 = vmatpush2.msra.mxu0 0.0
    %766 = vmatprep.subr.mxu0 0.0
    %767 = vmatpush2.msra.mxu0 0.0
    %768 = vmatprep.subr.mxu0 0.0
    %769 = vmatpush2.msra.mxu0 0.0
    %770 = vmatprep.subr.mxu0 0.0
    %771 = vmatpush2.msra.mxu0 0.0
    %772 = vmatprep.subr.mxu0 0.0
    %773 = vmatpush2.msra.mxu0 0.0
    %774 = vmatprep.subr.mxu0 0.0
    %775 = vmatpush2.msra.mxu0 0.0
    %776 = vmatprep.subr.mxu0 0.0
    %777 = vmatpush2.msra.mxu0 0.0
    %778 = vmatprep.subr.mxu0 0.0
    %779 = vmatpush2.msra.mxu0 0.0
    %780 = vmatprep.subr.mxu0 0.0
    %781 = vmatpush2.msra.mxu0 0.0
    %782 = vmatprep.mubr.f32.mxu0 0.0
    %783 = vmatmul.mubr.f32.gmra.mxu0 %v642
    %v784 = vpop.f32.mrf.mxu0
    %v785 = vadd.f32 0.0, %v784
    %v786 = vpop.f32.mrf.mxu0
    %v787 = vadd.f32 0.0, %v786
    %788 = vdwg.mxu0
    %v789 = vadd.f32 %v643, %v714
    %v790 = vadd.f32 %v644, %v716
    %v791 = vadd.f32 %v645, %v785
    %v792 = vadd.f32 %v646, %v787
    %v793 = vxor.u32 %v789, 2147483648
    %v794 = vmul.f32 %v793, 1.442695
    %v795 = vpow.pop %v794
    %v796 = vadd.f32 %v795, 1.0
    %v797 = vrcp.pop %v796
    %v798 = vmul.f32 1.0, %v797
    %v799 = vxor.u32 %v790, 2147483648
    %v800 = vmul.f32 %v799, 1.442695
    %v801 = vpow.pop %v800
    %v802 = vadd.f32 %v801, 1.0
    %v803 = vrcp.pop %v802
    %v804 = vmul.f32 1.0, %v803
    %v805 = vtanh.pop %v791
    %v806 = vxor.u32 %v792, 2147483648
    %v807 = vmul.f32 %v806, 1.442695
    %v808 = vpow.pop %v807
    %v809 = vadd.f32 %v808, 1.0
    %v810 = vrcp.pop %v809
    %v811 = vmul.f32 1.0, %v810
    %v812 = vmul.f32 %v804, %v640
    %v813 = vmul.f32 %v798, %v805
    %v814 = vadd.f32 %v812, %v813
    %v815 = vtanh.pop %v814
    %v816 = vmul.f32 %v811, %v815
    %v817 = vld [vmem:[#allocation2 + $0x40] sm:$0xff]
    %v818 = vld [vmem:[#allocation2 + $0x48] sm:$0xff]
    %v819 = vld [vmem:[#allocation2 + $0x50] sm:$0xff]
    %v820 = vld [vmem:[#allocation2 + $0x58] sm:$0xff]
    %821 = vmatprep.subr.mxu0 %v466
    %822 = vmatpush1.msra.mxu0 %v465
    %823 = vmatprep.subr.mxu0 %v462
    %824 = vmatpush1.msra.mxu0 %v461
    %825 = vmatprep.subr.mxu0 %v458
    %826 = vmatpush1.msra.mxu0 %v457
    %827 = vmatprep.subr.mxu0 %v454
    %828 = vmatpush1.msra.mxu0 %v453
    %829 = vmatprep.subr.mxu0 %v450
    %830 = vmatpush1.msra.mxu0 %v449
    %831 = vmatprep.subr.mxu0 %v446
    %832 = vmatpush1.msra.mxu0 %v445
    %833 = vmatprep.subr.mxu0 %v442
    %834 = vmatpush1.msra.mxu0 %v441
    %835 = vmatprep.subr.mxu0 %v438
    %836 = vmatpush1.msra.mxu0 %v437
    %837 = vmatprep.subr.mxu0 %v434
    %838 = vmatpush1.msra.mxu0 %v433
    %839 = vmatprep.subr.mxu0 %v430
    %840 = vmatpush1.msra.mxu0 %v429
    %841 = vmatprep.subr.mxu0 %v426
    %842 = vmatpush1.msra.mxu0 %v425
    %843 = vmatprep.subr.mxu0 %v422
    %844 = vmatpush1.msra.mxu0 %v421
    %845 = vmatprep.subr.mxu0 %v418
    %846 = vmatpush1.msra.mxu0 %v417
    %847 = vmatprep.subr.mxu0 %v414
    %848 = vmatpush1.msra.mxu0 %v413
    %849 = vmatprep.subr.mxu0 %v410
    %850 = vmatpush1.msra.mxu0 %v409
    %851 = vmatprep.subr.mxu0 %v406
    %852 = vmatpush1.msra.mxu0 %v405
    %853 = vmatprep.subr.mxu0 0.0
    %854 = vmatpush2.msra.mxu0 0.0
    %855 = vmatprep.subr.mxu0 0.0
    %856 = vmatpush2.msra.mxu0 0.0
    %857 = vmatprep.subr.mxu0 0.0
    %858 = vmatpush2.msra.mxu0 0.0
    %859 = vmatprep.subr.mxu0 0.0
    %860 = vmatpush2.msra.mxu0 0.0
    %861 = vmatprep.subr.mxu0 0.0
    %862 = vmatpush2.msra.mxu0 0.0
    %863 = vmatprep.subr.mxu0 0.0
    %864 = vmatpush2.msra.mxu0 0.0
    %865 = vmatprep.subr.mxu0 0.0
    %866 = vmatpush2.msra.mxu0 0.0
    %867 = vmatprep.subr.mxu0 0.0
    %868 = vmatpush2.msra.mxu0 0.0
    %869 = vmatprep.subr.mxu0 0.0
    %870 = vmatpush2.msra.mxu0 0.0
    %871 = vmatprep.subr.mxu0 0.0
    %872 = vmatpush2.msra.mxu0 0.0
    %873 = vmatprep.subr.mxu0 0.0
    %874 = vmatpush2.msra.mxu0 0.0
    %875 = vmatprep.subr.mxu0 0.0
    %876 = vmatpush2.msra.mxu0 0.0
    %877 = vmatprep.subr.mxu0 0.0
    %878 = vmatpush2.msra.mxu0 0.0
    %879 = vmatprep.subr.mxu0 0.0
    %880 = vmatpush2.msra.mxu0 0.0
    %881 = vmatprep.subr.mxu0 0.0
    %882 = vmatpush2.msra.mxu0 0.0
    %883 = vmatprep.subr.mxu0 0.0
    %884 = vmatpush2.msra.mxu0 0.0
    %885 = vmatprep.mubr.f32.mxu0 0.0
    %886 = vmatmul.mubr.f32.gmra.mxu0 %v816
    %v887 = vpop.f32.mrf.mxu0
    %v888 = vadd.f32 0.0, %v887
    %v889 = vpop.f32.mrf.mxu0
    %v890 = vadd.f32 0.0, %v889
    %891 = vdwg.mxu0
    %892 = vmatprep.subr.mxu0 %v468
    %893 = vmatpush1.msra.mxu0 %v467
    %894 = vmatprep.subr.mxu0 %v464
    %895 = vmatpush1.msra.mxu0 %v463
    %896 = vmatprep.subr.mxu0 %v460
    %897 = vmatpush1.msra.mxu0 %v459
    %898 = vmatprep.subr.mxu0 %v456
    %899 = vmatpush1.msra.mxu0 %v455
    %900 = vmatprep.subr.mxu0 %v452
    %901 = vmatpush1.msra.mxu0 %v451
    %902 = vmatprep.subr.mxu0 %v448
    %903 = vmatpush1.msra.mxu0 %v447
    %904 = vmatprep.subr.mxu0 %v444
    %905 = vmatpush1.msra.mxu0 %v443
    %906 = vmatprep.subr.mxu0 %v440
    %907 = vmatpush1.msra.mxu0 %v439
    %908 = vmatprep.subr.mxu0 %v436
    %909 = vmatpush1.msra.mxu0 %v435
    %910 = vmatprep.subr.mxu0 %v432
    %911 = vmatpush1.msra.mxu0 %v431
    %912 = vmatprep.subr.mxu0 %v428
    %913 = vmatpush1.msra.mxu0 %v427
    %914 = vmatprep.subr.mxu0 %v424
    %915 = vmatpush1.msra.mxu0 %v423
    %916 = vmatprep.subr.mxu0 %v420
    %917 = vmatpush1.msra.mxu0 %v419
    %918 = vmatprep.subr.mxu0 %v416
    %919 = vmatpush1.msra.mxu0 %v415
    %920 = vmatprep.subr.mxu0 %v412
    %921 = vmatpush1.msra.mxu0 %v411
    %922 = vmatprep.subr.mxu0 %v408
    %923 = vmatpush1.msra.mxu0 %v407
    %924 = vmatprep.subr.mxu0 0.0
    %925 = vmatpush2.msra.mxu0 0.0
    %926 = vmatprep.subr.mxu0 0.0
    %927 = vmatpush2.msra.mxu0 0.0
    %928 = vmatprep.subr.mxu0 0.0
    %929 = vmatpush2.msra.mxu0 0.0
    %930 = vmatprep.subr.mxu0 0.0
    %931 = vmatpush2.msra.mxu0 0.0
    %932 = vmatprep.subr.mxu0 0.0
    %933 = vmatpush2.msra.mxu0 0.0
    %934 = vmatprep.subr.mxu0 0.0
    %935 = vmatpush2.msra.mxu0 0.0
    %936 = vmatprep.subr.mxu0 0.0
    %937 = vmatpush2.msra.mxu0 0.0
    %938 = vmatprep.subr.mxu0 0.0
    %939 = vmatpush2.msra.mxu0 0.0
    %940 = vmatprep.subr.mxu0 0.0
    %941 = vmatpush2.msra.mxu0 0.0
    %942 = vmatprep.subr.mxu0 0.0
    %943 = vmatpush2.msra.mxu0 0.0
    %944 = vmatprep.subr.mxu0 0.0
    %945 = vmatpush2.msra.mxu0 0.0
    %946 = vmatprep.subr.mxu0 0.0
    %947 = vmatpush2.msra.mxu0 0.0
    %948 = vmatprep.subr.mxu0 0.0
    %949 = vmatpush2.msra.mxu0 0.0
    %950 = vmatprep.subr.mxu0 0.0
    %951 = vmatpush2.msra.mxu0 0.0
    %952 = vmatprep.subr.mxu0 0.0
    %953 = vmatpush2.msra.mxu0 0.0
    %954 = vmatprep.subr.mxu0 0.0
    %955 = vmatpush2.msra.mxu0 0.0
    %956 = vmatprep.mubr.f32.mxu0 0.0
    %957 = vmatmul.mubr.f32.gmra.mxu0 %v816
    %v958 = vpop.f32.mrf.mxu0
    %v959 = vadd.f32 0.0, %v958
    %v960 = vpop.f32.mrf.mxu0
    %v961 = vadd.f32 0.0, %v960
    %962 = vdwg.mxu0
    %v963 = vadd.f32 %v817, %v888
    %v964 = vadd.f32 %v818, %v890
    %v965 = vadd.f32 %v819, %v959
    %v966 = vadd.f32 %v820, %v961
    %v967 = vxor.u32 %v963, 2147483648
    %v968 = vmul.f32 %v967, 1.442695
    %v969 = vpow.pop %v968
    %v970 = vadd.f32 %v969, 1.0
    %v971 = vrcp.pop %v970
    %v972 = vmul.f32 1.0, %v971
    %v973 = vxor.u32 %v964, 2147483648
    %v974 = vmul.f32 %v973, 1.442695
    %v975 = vpow.pop %v974
    %v976 = vadd.f32 %v975, 1.0
    %v977 = vrcp.pop %v976
    %v978 = vmul.f32 1.0, %v977
    %v979 = vtanh.pop %v965
    %v980 = vxor.u32 %v966, 2147483648
    %v981 = vmul.f32 %v980, 1.442695
    %v982 = vpow.pop %v981
    %v983 = vadd.f32 %v982, 1.0
    %v984 = vrcp.pop %v983
    %v985 = vmul.f32 1.0, %v984
    %v986 = vmul.f32 %v978, %v814
    %v987 = vmul.f32 %v972, %v979
    %v988 = vadd.f32 %v986, %v987
    %v989 = vtanh.pop %v988
    %v990 = vmul.f32 %v985, %v989
    %v991 = vld [vmem:[#allocation2 + $0x60] sm:$0xff]
    %v992 = vld [vmem:[#allocation2 + $0x68] sm:$0xff]
    %v993 = vld [vmem:[#allocation2 + $0x70] sm:$0xff]
    %v994 = vld [vmem:[#allocation2 + $0x78] sm:$0xff]
    %995 = vmatprep.subr.mxu0 %v466
    %996 = vmatpush1.msra.mxu0 %v465
    %997 = vmatprep.subr.mxu0 %v462
    %998 = vmatpush1.msra.mxu0 %v461
    %999 = vmatprep.subr.mxu0 %v458
    %1000 = vmatpush1.msra.mxu0 %v457
    %1001 = vmatprep.subr.mxu0 %v454
    %1002 = vmatpush1.msra.mxu0 %v453
    %1003 = vmatprep.subr.mxu0 %v450
    %1004 = vmatpush1.msra.mxu0 %v449
    %1005 = vmatprep.subr.mxu0 %v446
    %1006 = vmatpush1.msra.mxu0 %v445
    %1007 = vmatprep.subr.mxu0 %v442
    %1008 = vmatpush1.msra.mxu0 %v441
    %1009 = vmatprep.subr.mxu0 %v438
    %1010 = vmatpush1.msra.mxu0 %v437
    %1011 = vmatprep.subr.mxu0 %v434
    %1012 = vmatpush1.msra.mxu0 %v433
    %1013 = vmatprep.subr.mxu0 %v430
    %1014 = vmatpush1.msra.mxu0 %v429
    %1015 = vmatprep.subr.mxu0 %v426
    %1016 = vmatpush1.msra.mxu0 %v425
    %1017 = vmatprep.subr.mxu0 %v422
    %1018 = vmatpush1.msra.mxu0 %v421
    %1019 = vmatprep.subr.mxu0 %v418
    %1020 = vmatpush1.msra.mxu0 %v417
    %1021 = vmatprep.subr.mxu0 %v414
    %1022 = vmatpush1.msra.mxu0 %v413
    %1023 = vmatprep.subr.mxu0 %v410
    %1024 = vmatpush1.msra.mxu0 %v409
    %1025 = vmatprep.subr.mxu0 %v406
    %1026 = vmatpush1.msra.mxu0 %v405
    %1027 = vmatprep.subr.mxu0 0.0
    %1028 = vmatpush2.msra.mxu0 0.0
    %1029 = vmatprep.subr.mxu0 0.0
    %1030 = vmatpush2.msra.mxu0 0.0
    %1031 = vmatprep.subr.mxu0 0.0
    %1032 = vmatpush2.msra.mxu0 0.0
    %1033 = vmatprep.subr.mxu0 0.0
    %1034 = vmatpush2.msra.mxu0 0.0
    %1035 = vmatprep.subr.mxu0 0.0
    %1036 = vmatpush2.msra.mxu0 0.0
    %1037 = vmatprep.subr.mxu0 0.0
    %1038 = vmatpush2.msra.mxu0 0.0
    %1039 = vmatprep.subr.mxu0 0.0
    %1040 = vmatpush2.msra.mxu0 0.0
    %1041 = vmatprep.subr.mxu0 0.0
    %1042 = vmatpush2.msra.mxu0 0.0
    %1043 = vmatprep.subr.mxu0 0.0
    %1044 = vmatpush2.msra.mxu0 0.0
    %1045 = vmatprep.subr.mxu0 0.0
    %1046 = vmatpush2.msra.mxu0 0.0
    %1047 = vmatprep.subr.mxu0 0.0
    %1048 = vmatpush2.msra.mxu0 0.0
    %1049 = vmatprep.subr.mxu0 0.0
    %1050 = vmatpush2.msra.mxu0 0.0
    %1051 = vmatprep.subr.mxu0 0.0
    %1052 = vmatpush2.msra.mxu0 0.0
    %1053 = vmatprep.subr.mxu0 0.0
    %1054 = vmatpush2.msra.mxu0 0.0
    %1055 = vmatprep.subr.mxu0 0.0
    %1056 = vmatpush2.msra.mxu0 0.0
    %1057 = vmatprep.subr.mxu0 0.0
    %1058 = vmatpush2.msra.mxu0 0.0
    %1059 = vmatprep.mubr.f32.mxu0 0.0
    %1060 = vmatmul.mubr.f32.gmra.mxu0 %v990
    %v1061 = vpop.f32.mrf.mxu0
    %v1062 = vadd.f32 0.0, %v1061
    %v1063 = vpop.f32.mrf.mxu0
    %v1064 = vadd.f32 0.0, %v1063
    %1065 = vdwg.mxu0
    %1066 = vmatprep.subr.mxu0 %v468
    %1067 = vmatpush1.msra.mxu0 %v467
    %1068 = vmatprep.subr.mxu0 %v464
    %1069 = vmatpush1.msra.mxu0 %v463
    %1070 = vmatprep.subr.mxu0 %v460
    %1071 = vmatpush1.msra.mxu0 %v459
    %1072 = vmatprep.subr.mxu0 %v456
    %1073 = vmatpush1.msra.mxu0 %v455
    %1074 = vmatprep.subr.mxu0 %v452
    %1075 = vmatpush1.msra.mxu0 %v451
    %1076 = vmatprep.subr.mxu0 %v448
    %1077 = vmatpush1.msra.mxu0 %v447
    %1078 = vmatprep.subr.mxu0 %v444
    %1079 = vmatpush1.msra.mxu0 %v443
    %1080 = vmatprep.subr.mxu0 %v440
    %1081 = vmatpush1.msra.mxu0 %v439
    %1082 = vmatprep.subr.mxu0 %v436
    %1083 = vmatpush1.msra.mxu0 %v435
    %1084 = vmatprep.subr.mxu0 %v432
    %1085 = vmatpush1.msra.mxu0 %v431
    %1086 = vmatprep.subr.mxu0 %v428
    %1087 = vmatpush1.msra.mxu0 %v427
    %1088 = vmatprep.subr.mxu0 %v424
    %1089 = vmatpush1.msra.mxu0 %v423
    %1090 = vmatprep.subr.mxu0 %v420
    %1091 = vmatpush1.msra.mxu0 %v419
    %1092 = vmatprep.subr.mxu0 %v416
    %1093 = vmatpush1.msra.mxu0 %v415
    %1094 = vmatprep.subr.mxu0 %v412
    %1095 = vmatpush1.msra.mxu0 %v411
    %1096 = vmatprep.subr.mxu0 %v408
    %1097 = vmatpush1.msra.mxu0 %v407
    %1098 = vmatprep.subr.mxu0 0.0
    %1099 = vmatpush2.msra.mxu0 0.0
    %1100 = vmatprep.subr.mxu0 0.0
    %1101 = vmatpush2.msra.mxu0 0.0
    %1102 = vmatprep.subr.mxu0 0.0
    %1103 = vmatpush2.msra.mxu0 0.0
    %1104 = vmatprep.subr.mxu0 0.0
    %1105 = vmatpush2.msra.mxu0 0.0
    %1106 = vmatprep.subr.mxu0 0.0
    %1107 = vmatpush2.msra.mxu0 0.0
    %1108 = vmatprep.subr.mxu0 0.0
    %1109 = vmatpush2.msra.mxu0 0.0
    %1110 = vmatprep.subr.mxu0 0.0
    %1111 = vmatpush2.msra.mxu0 0.0
    %1112 = vmatprep.subr.mxu0 0.0
    %1113 = vmatpush2.msra.mxu0 0.0
    %1114 = vmatprep.subr.mxu0 0.0
    %1115 = vmatpush2.msra.mxu0 0.0
    %1116 = vmatprep.subr.mxu0 0.0
    %1117 = vmatpush2.msra.mxu0 0.0
    %1118 = vmatprep.subr.mxu0 0.0
    %1119 = vmatpush2.msra.mxu0 0.0
    %1120 = vmatprep.subr.mxu0 0.0
    %1121 = vmatpush2.msra.mxu0 0.0
    %1122 = vmatprep.subr.mxu0 0.0
    %1123 = vmatpush2.msra.mxu0 0.0
    %1124 = vmatprep.subr.mxu0 0.0
    %1125 = vmatpush2.msra.mxu0 0.0
    %1126 = vmatprep.subr.mxu0 0.0
    %1127 = vmatpush2.msra.mxu0 0.0
    %1128 = vmatprep.subr.mxu0 0.0
    %1129 = vmatpush2.msra.mxu0 0.0
    %1130 = vmatprep.mubr.f32.mxu0 0.0
    %1131 = vmatmul.mubr.f32.gmra.mxu0 %v990
    %v1132 = vpop.f32.mrf.mxu0
    %v1133 = vadd.f32 0.0, %v1132
    %v1134 = vpop.f32.mrf.mxu0
    %v1135 = vadd.f32 0.0, %v1134
    %1136 = vdwg.mxu0
    %v1137 = vadd.f32 %v991, %v1062
    %v1138 = vadd.f32 %v992, %v1064
    %v1139 = vadd.f32 %v993, %v1133
    %v1140 = vadd.f32 %v994, %v1135
    %v1141 = vxor.u32 %v1137, 2147483648
    %v1142 = vmul.f32 %v1141, 1.442695
    %v1143 = vpow.pop %v1142
    %v1144 = vadd.f32 %v1143, 1.0
    %v1145 = vrcp.pop %v1144
    %v1146 = vmul.f32 1.0, %v1145
    %v1147 = vxor.u32 %v1138, 2147483648
    %v1148 = vmul.f32 %v1147, 1.442695
    %v1149 = vpow.pop %v1148
    %v1150 = vadd.f32 %v1149, 1.0
    %v1151 = vrcp.pop %v1150
    %v1152 = vmul.f32 1.0, %v1151
    %v1153 = vtanh.pop %v1139
    %v1154 = vxor.u32 %v1140, 2147483648
    %v1155 = vmul.f32 %v1154, 1.442695
    %v1156 = vpow.pop %v1155
    %v1157 = vadd.f32 %v1156, 1.0
    %v1158 = vrcp.pop %v1157
    %v1159 = vmul.f32 1.0, %v1158
    %v1160 = vmul.f32 %v1152, %v988
    %v1161 = vmul.f32 %v1146, %v1153
    %v1162 = vadd.f32 %v1160, %v1161
    %v1163 = vtanh.pop %v1162
    %v1164 = vmul.f32 %v1159, %v1163
    %v1165 = vld [vmem:[#allocation2 + $0x80] sm:$0xff]
    %v1166 = vld [vmem:[#allocation2 + $0x88] sm:$0xff]
    %v1167 = vld [vmem:[#allocation2 + $0x90] sm:$0xff]
    %v1168 = vld [vmem:[#allocation2 + $0x98] sm:$0xff]
    %1169 = vmatprep.subr.mxu0 %v466
    %1170 = vmatpush1.msra.mxu0 %v465
    %1171 = vmatprep.subr.mxu0 %v462
    %1172 = vmatpush1.msra.mxu0 %v461
    %1173 = vmatprep.subr.mxu0 %v458
    %1174 = vmatpush1.msra.mxu0 %v457
    %1175 = vmatprep.subr.mxu0 %v454
    %1176 = vmatpush1.msra.mxu0 %v453
    %1177 = vmatprep.subr.mxu0 %v450
    %1178 = vmatpush1.msra.mxu0 %v449
    %1179 = vmatprep.subr.mxu0 %v446
    %1180 = vmatpush1.msra.mxu0 %v445
    %1181 = vmatprep.subr.mxu0 %v442
    %1182 = vmatpush1.msra.mxu0 %v441
    %1183 = vmatprep.subr.mxu0 %v438
    %1184 = vmatpush1.msra.mxu0 %v437
    %1185 = vmatprep.subr.mxu0 %v434
    %1186 = vmatpush1.msra.mxu0 %v433
    %1187 = vmatprep.subr.mxu0 %v430
    %1188 = vmatpush1.msra.mxu0 %v429
    %1189 = vmatprep.subr.mxu0 %v426
    %1190 = vmatpush1.msra.mxu0 %v425
    %1191 = vmatprep.subr.mxu0 %v422
    %1192 = vmatpush1.msra.mxu0 %v421
    %1193 = vmatprep.subr.mxu0 %v418
    %1194 = vmatpush1.msra.mxu0 %v417
    %1195 = vmatprep.subr.mxu0 %v414
    %1196 = vmatpush1.msra.mxu0 %v413
    %1197 = vmatprep.subr.mxu0 %v410
    %1198 = vmatpush1.msra.mxu0 %v409
    %1199 = vmatprep.subr.mxu0 %v406
    %1200 = vmatpush1.msra.mxu0 %v405
    %1201 = vmatprep.subr.mxu0 0.0
    %1202 = vmatpush2.msra.mxu0 0.0
    %1203 = vmatprep.subr.mxu0 0.0
    %1204 = vmatpush2.msra.mxu0 0.0
    %1205 = vmatprep.subr.mxu0 0.0
    %1206 = vmatpush2.msra.mxu0 0.0
    %1207 = vmatprep.subr.mxu0 0.0
    %1208 = vmatpush2.msra.mxu0 0.0
    %1209 = vmatprep.subr.mxu0 0.0
    %1210 = vmatpush2.msra.mxu0 0.0
    %1211 = vmatprep.subr.mxu0 0.0
    %1212 = vmatpush2.msra.mxu0 0.0
    %1213 = vmatprep.subr.mxu0 0.0
    %1214 = vmatpush2.msra.mxu0 0.0
    %1215 = vmatprep.subr.mxu0 0.0
    %1216 = vmatpush2.msra.mxu0 0.0
    %1217 = vmatprep.subr.mxu0 0.0
    %1218 = vmatpush2.msra.mxu0 0.0
    %1219 = vmatprep.subr.mxu0 0.0
    %1220 = vmatpush2.msra.mxu0 0.0
    %1221 = vmatprep.subr.mxu0 0.0
    %1222 = vmatpush2.msra.mxu0 0.0
    %1223 = vmatprep.subr.mxu0 0.0
    %1224 = vmatpush2.msra.mxu0 0.0
    %1225 = vmatprep.subr.mxu0 0.0
    %1226 = vmatpush2.msra.mxu0 0.0
    %1227 = vmatprep.subr.mxu0 0.0
    %1228 = vmatpush2.msra.mxu0 0.0
    %1229 = vmatprep.subr.mxu0 0.0
    %1230 = vmatpush2.msra.mxu0 0.0
    %1231 = vmatprep.subr.mxu0 0.0
    %1232 = vmatpush2.msra.mxu0 0.0
    %1233 = vmatprep.mubr.f32.mxu0 0.0
    %1234 = vmatmul.mubr.f32.gmra.mxu0 %v1164
    %v1235 = vpop.f32.mrf.mxu0
    %v1236 = vadd.f32 0.0, %v1235
    %v1237 = vpop.f32.mrf.mxu0
    %v1238 = vadd.f32 0.0, %v1237
    %1239 = vdwg.mxu0
    %1240 = vmatprep.subr.mxu0 %v468
    %1241 = vmatpush1.msra.mxu0 %v467
    %1242 = vmatprep.subr.mxu0 %v464
    %1243 = vmatpush1.msra.mxu0 %v463
    %1244 = vmatprep.subr.mxu0 %v460
    %1245 = vmatpush1.msra.mxu0 %v459
    %1246 = vmatprep.subr.mxu0 %v456
    %1247 = vmatpush1.msra.mxu0 %v455
    %1248 = vmatprep.subr.mxu0 %v452
    %1249 = vmatpush1.msra.mxu0 %v451
    %1250 = vmatprep.subr.mxu0 %v448
    %1251 = vmatpush1.msra.mxu0 %v447
    %1252 = vmatprep.subr.mxu0 %v444
    %1253 = vmatpush1.msra.mxu0 %v443
    %1254 = vmatprep.subr.mxu0 %v440
    %1255 = vmatpush1.msra.mxu0 %v439
    %1256 = vmatprep.subr.mxu0 %v436
    %1257 = vmatpush1.msra.mxu0 %v435
    %1258 = vmatprep.subr.mxu0 %v432
    %1259 = vmatpush1.msra.mxu0 %v431
    %1260 = vmatprep.subr.mxu0 %v428
    %1261 = vmatpush1.msra.mxu0 %v427
    %1262 = vmatprep.subr.mxu0 %v424
    %1263 = vmatpush1.msra.mxu0 %v423
    %1264 = vmatprep.subr.mxu0 %v420
    %1265 = vmatpush1.msra.mxu0 %v419
    %1266 = vmatprep.subr.mxu0 %v416
    %1267 = vmatpush1.msra.mxu0 %v415
    %1268 = vmatprep.subr.mxu0 %v412
    %1269 = vmatpush1.msra.mxu0 %v411
    %1270 = vmatprep.subr.mxu0 %v408
    %1271 = vmatpush1.msra.mxu0 %v407
    %1272 = vmatprep.subr.mxu0 0.0
    %1273 = vmatpush2.msra.mxu0 0.0
    %1274 = vmatprep.subr.mxu0 0.0
    %1275 = vmatpush2.msra.mxu0 0.0
    %1276 = vmatprep.subr.mxu0 0.0
    %1277 = vmatpush2.msra.mxu0 0.0
    %1278 = vmatprep.subr.mxu0 0.0
    %1279 = vmatpush2.msra.mxu0 0.0
    %1280 = vmatprep.subr.mxu0 0.0
    %1281 = vmatpush2.msra.mxu0 0.0
    %1282 = vmatprep.subr.mxu0 0.0
    %1283 = vmatpush2.msra.mxu0 0.0
    %1284 = vmatprep.subr.mxu0 0.0
    %1285 = vmatpush2.msra.mxu0 0.0
    %1286 = vmatprep.subr.mxu0 0.0
    %1287 = vmatpush2.msra.mxu0 0.0
    %1288 = vmatprep.subr.mxu0 0.0
    %1289 = vmatpush2.msra.mxu0 0.0
    %1290 = vmatprep.subr.mxu0 0.0
    %1291 = vmatpush2.msra.mxu0 0.0
    %1292 = vmatprep.subr.mxu0 0.0
    %1293 = vmatpush2.msra.mxu0 0.0
    %1294 = vmatprep.subr.mxu0 0.0
    %1295 = vmatpush2.msra.mxu0 0.0
    %1296 = vmatprep.subr.mxu0 0.0
    %1297 = vmatpush2.msra.mxu0 0.0
    %1298 = vmatprep.subr.mxu0 0.0
    %1299 = vmatpush2.msra.mxu0 0.0
    %1300 = vmatprep.subr.mxu0 0.0
    %1301 = vmatpush2.msra.mxu0 0.0
    %1302 = vmatprep.subr.mxu0 0.0
    %1303 = vmatpush2.msra.mxu0 0.0
    %1304 = vmatprep.mubr.f32.mxu0 0.0
    %1305 = vmatmul.mubr.f32.gmra.mxu0 %v1164
    %v1306 = vpop.f32.mrf.mxu0
    %v1307 = vadd.f32 0.0, %v1306
    %v1308 = vpop.f32.mrf.mxu0
    %v1309 = vadd.f32 0.0, %v1308
    %1310 = vdwg.mxu0
    %v1311 = vadd.f32 %v1165, %v1236
    %v1312 = vadd.f32 %v1166, %v1238
    %v1313 = vadd.f32 %v1167, %v1307
    %v1314 = vadd.f32 %v1168, %v1309
    %v1315 = vxor.u32 %v1311, 2147483648
    %v1316 = vmul.f32 %v1315, 1.442695
    %v1317 = vpow.pop %v1316
    %v1318 = vadd.f32 %v1317, 1.0
    %v1319 = vrcp.pop %v1318
    %v1320 = vmul.f32 1.0, %v1319
    %v1321 = vxor.u32 %v1312, 2147483648
    %v1322 = vmul.f32 %v1321, 1.442695
    %v1323 = vpow.pop %v1322
    %v1324 = vadd.f32 %v1323, 1.0
    %v1325 = vrcp.pop %v1324
    %v1326 = vmul.f32 1.0, %v1325
    %v1327 = vtanh.pop %v1313
    %v1328 = vxor.u32 %v1314, 2147483648
    %v1329 = vmul.f32 %v1328, 1.442695
    %v1330 = vpow.pop %v1329
    %v1331 = vadd.f32 %v1330, 1.0
    %v1332 = vrcp.pop %v1331
    %v1333 = vmul.f32 1.0, %v1332
    %v1334 = vmul.f32 %v1326, %v1162
    %v1335 = vmul.f32 %v1320, %v1327
    %v1336 = vadd.f32 %v1334, %v1335
    %v1337 = vtanh.pop %v1336
    %v1338 = vmul.f32 %v1333, %v1337
    %v1339 = vld [vmem:[#allocation2 + $0xa0] sm:$0xff]
    %v1340 = vld [vmem:[#allocation2 + $0xa8] sm:$0xff]
    %v1341 = vld [vmem:[#allocation2 + $0xb0] sm:$0xff]
    %v1342 = vld [vmem:[#allocation2 + $0xb8] sm:$0xff]
    %1343 = vmatprep.subr.mxu0 %v466
    %1344 = vmatpush1.msra.mxu0 %v465
    %1345 = vmatprep.subr.mxu0 %v462
    %1346 = vmatpush1.msra.mxu0 %v461
    %1347 = vmatprep.subr.mxu0 %v458
    %1348 = vmatpush1.msra.mxu0 %v457
    %1349 = vmatprep.subr.mxu0 %v454
    %1350 = vmatpush1.msra.mxu0 %v453
    %1351 = vmatprep.subr.mxu0 %v450
    %1352 = vmatpush1.msra.mxu0 %v449
    %1353 = vmatprep.subr.mxu0 %v446
    %1354 = vmatpush1.msra.mxu0 %v445
    %1355 = vmatprep.subr.mxu0 %v442
    %1356 = vmatpush1.msra.mxu0 %v441
    %1357 = vmatprep.subr.mxu0 %v438
    %1358 = vmatpush1.msra.mxu0 %v437
    %1359 = vmatprep.subr.mxu0 %v434
    %1360 = vmatpush1.msra.mxu0 %v433
    %1361 = vmatprep.subr.mxu0 %v430
    %1362 = vmatpush1.msra.mxu0 %v429
    %1363 = vmatprep.subr.mxu0 %v426
    %1364 = vmatpush1.msra.mxu0 %v425
    %1365 = vmatprep.subr.mxu0 %v422
    %1366 = vmatpush1.msra.mxu0 %v421
    %1367 = vmatprep.subr.mxu0 %v418
    %1368 = vmatpush1.msra.mxu0 %v417
    %1369 = vmatprep.subr.mxu0 %v414
    %1370 = vmatpush1.msra.mxu0 %v413
    %1371 = vmatprep.subr.mxu0 %v410
    %1372 = vmatpush1.msra.mxu0 %v409
    %1373 = vmatprep.subr.mxu0 %v406
    %1374 = vmatpush1.msra.mxu0 %v405
    %1375 = vmatprep.subr.mxu0 0.0
    %1376 = vmatpush2.msra.mxu0 0.0
    %1377 = vmatprep.subr.mxu0 0.0
    %1378 = vmatpush2.msra.mxu0 0.0
    %1379 = vmatprep.subr.mxu0 0.0
    %1380 = vmatpush2.msra.mxu0 0.0
    %1381 = vmatprep.subr.mxu0 0.0
    %1382 = vmatpush2.msra.mxu0 0.0
    %1383 = vmatprep.subr.mxu0 0.0
    %1384 = vmatpush2.msra.mxu0 0.0
    %1385 = vmatprep.subr.mxu0 0.0
    %1386 = vmatpush2.msra.mxu0 0.0
    %1387 = vmatprep.subr.mxu0 0.0
    %1388 = vmatpush2.msra.mxu0 0.0
    %1389 = vmatprep.subr.mxu0 0.0
    %1390 = vmatpush2.msra.mxu0 0.0
    %1391 = vmatprep.subr.mxu0 0.0
    %1392 = vmatpush2.msra.mxu0 0.0
    %1393 = vmatprep.subr.mxu0 0.0
    %1394 = vmatpush2.msra.mxu0 0.0
    %1395 = vmatprep.subr.mxu0 0.0
    %1396 = vmatpush2.msra.mxu0 0.0
    %1397 = vmatprep.subr.mxu0 0.0
    %1398 = vmatpush2.msra.mxu0 0.0
    %1399 = vmatprep.subr.mxu0 0.0
    %1400 = vmatpush2.msra.mxu0 0.0
    %1401 = vmatprep.subr.mxu0 0.0
    %1402 = vmatpush2.msra.mxu0 0.0
    %1403 = vmatprep.subr.mxu0 0.0
    %1404 = vmatpush2.msra.mxu0 0.0
    %1405 = vmatprep.subr.mxu0 0.0
    %1406 = vmatpush2.msra.mxu0 0.0
    %1407 = vmatprep.mubr.f32.mxu0 0.0
    %1408 = vmatmul.mubr.f32.gmra.mxu0 %v1338
    %v1409 = vpop.f32.mrf.mxu0
    %v1410 = vadd.f32 0.0, %v1409
    %v1411 = vpop.f32.mrf.mxu0
    %v1412 = vadd.f32 0.0, %v1411
    %1413 = vdwg.mxu0
    %1414 = vmatprep.subr.mxu0 %v468
    %1415 = vmatpush1.msra.mxu0 %v467
    %1416 = vmatprep.subr.mxu0 %v464
    %1417 = vmatpush1.msra.mxu0 %v463
    %1418 = vmatprep.subr.mxu0 %v460
    %1419 = vmatpush1.msra.mxu0 %v459
    %1420 = vmatprep.subr.mxu0 %v456
    %1421 = vmatpush1.msra.mxu0 %v455
    %1422 = vmatprep.subr.mxu0 %v452
    %1423 = vmatpush1.msra.mxu0 %v451
    %1424 = vmatprep.subr.mxu0 %v448
    %1425 = vmatpush1.msra.mxu0 %v447
    %1426 = vmatprep.subr.mxu0 %v444
    %1427 = vmatpush1.msra.mxu0 %v443
    %1428 = vmatprep.subr.mxu0 %v440
    %1429 = vmatpush1.msra.mxu0 %v439
    %1430 = vmatprep.subr.mxu0 %v436
    %1431 = vmatpush1.msra.mxu0 %v435
    %1432 = vmatprep.subr.mxu0 %v432
    %1433 = vmatpush1.msra.mxu0 %v431
    %1434 = vmatprep.subr.mxu0 %v428
    %1435 = vmatpush1.msra.mxu0 %v427
    %1436 = vmatprep.subr.mxu0 %v424
    %1437 = vmatpush1.msra.mxu0 %v423
    %1438 = vmatprep.subr.mxu0 %v420
    %1439 = vmatpush1.msra.mxu0 %v419
    %1440 = vmatprep.subr.mxu0 %v416
    %1441 = vmatpush1.msra.mxu0 %v415
    %1442 = vmatprep.subr.mxu0 %v412
    %1443 = vmatpush1.msra.mxu0 %v411
    %1444 = vmatprep.subr.mxu0 %v408
    %1445 = vmatpush1.msra.mxu0 %v407
    %1446 = vmatprep.subr.mxu0 0.0
    %1447 = vmatpush2.msra.mxu0 0.0
    %1448 = vmatprep.subr.mxu0 0.0
    %1449 = vmatpush2.msra.mxu0 0.0
    %1450 = vmatprep.subr.mxu0 0.0
    %1451 = vmatpush2.msra.mxu0 0.0
    %1452 = vmatprep.subr.mxu0 0.0
    %1453 = vmatpush2.msra.mxu0 0.0
    %1454 = vmatprep.subr.mxu0 0.0
    %1455 = vmatpush2.msra.mxu0 0.0
    %1456 = vmatprep.subr.mxu0 0.0
    %1457 = vmatpush2.msra.mxu0 0.0
    %1458 = vmatprep.subr.mxu0 0.0
    %1459 = vmatpush2.msra.mxu0 0.0
    %1460 = vmatprep.subr.mxu0 0.0
    %1461 = vmatpush2.msra.mxu0 0.0
    %1462 = vmatprep.subr.mxu0 0.0
    %1463 = vmatpush2.msra.mxu0 0.0
    %1464 = vmatprep.subr.mxu0 0.0
    %1465 = vmatpush2.msra.mxu0 0.0
    %1466 = vmatprep.subr.mxu0 0.0
    %1467 = vmatpush2.msra.mxu0 0.0
    %1468 = vmatprep.subr.mxu0 0.0
    %1469 = vmatpush2.msra.mxu0 0.0
    %1470 = vmatprep.subr.mxu0 0.0
    %1471 = vmatpush2.msra.mxu0 0.0
    %1472 = vmatprep.subr.mxu0 0.0
    %1473 = vmatpush2.msra.mxu0 0.0
    %1474 = vmatprep.subr.mxu0 0.0
    %1475 = vmatpush2.msra.mxu0 0.0
    %1476 = vmatprep.subr.mxu0 0.0
    %1477 = vmatpush2.msra.mxu0 0.0
    %1478 = vmatprep.mubr.f32.mxu0 0.0
    %1479 = vmatmul.mubr.f32.gmra.mxu0 %v1338
    %v1480 = vpop.f32.mrf.mxu0
    %v1481 = vadd.f32 0.0, %v1480
    %v1482 = vpop.f32.mrf.mxu0
    %v1483 = vadd.f32 0.0, %v1482
    %1484 = vdwg.mxu0
    %v1485 = vadd.f32 %v1339, %v1410
    %v1486 = vadd.f32 %v1340, %v1412
    %v1487 = vadd.f32 %v1341, %v1481
    %v1488 = vadd.f32 %v1342, %v1483
    %v1489 = vxor.u32 %v1485, 2147483648
    %v1490 = vmul.f32 %v1489, 1.442695
    %v1491 = vpow.pop %v1490
    %v1492 = vadd.f32 %v1491, 1.0
    %v1493 = vrcp.pop %v1492
    %v1494 = vmul.f32 1.0, %v1493
    %v1495 = vxor.u32 %v1486, 2147483648
    %v1496 = vmul.f32 %v1495, 1.442695
    %v1497 = vpow.pop %v1496
    %v1498 = vadd.f32 %v1497, 1.0
    %v1499 = vrcp.pop %v1498
    %v1500 = vmul.f32 1.0, %v1499
    %v1501 = vtanh.pop %v1487
    %v1502 = vxor.u32 %v1488, 2147483648
    %v1503 = vmul.f32 %v1502, 1.442695
    %v1504 = vpow.pop %v1503
    %v1505 = vadd.f32 %v1504, 1.0
    %v1506 = vrcp.pop %v1505
    %v1507 = vmul.f32 1.0, %v1506
    %v1508 = vmul.f32 %v1500, %v1336
    %v1509 = vmul.f32 %v1494, %v1501
    %v1510 = vadd.f32 %v1508, %v1509
    %v1511 = vtanh.pop %v1510
    %v1512 = vmul.f32 %v1507, %v1511
    %v1513 = vld [vmem:[#allocation2 + $0xc0] sm:$0xff]
    %v1514 = vld [vmem:[#allocation2 + $0xc8] sm:$0xff]
    %v1515 = vld [vmem:[#allocation2 + $0xd0] sm:$0xff]
    %v1516 = vld [vmem:[#allocation2 + $0xd8] sm:$0xff]
    %1517 = vmatprep.subr.mxu0 %v466
    %1518 = vmatpush1.msra.mxu0 %v465
    %1519 = vmatprep.subr.mxu0 %v462
    %1520 = vmatpush1.msra.mxu0 %v461
    %1521 = vmatprep.subr.mxu0 %v458
    %1522 = vmatpush1.msra.mxu0 %v457
    %1523 = vmatprep.subr.mxu0 %v454
    %1524 = vmatpush1.msra.mxu0 %v453
    %1525 = vmatprep.subr.mxu0 %v450
    %1526 = vmatpush1.msra.mxu0 %v449
    %1527 = vmatprep.subr.mxu0 %v446
    %1528 = vmatpush1.msra.mxu0 %v445
    %1529 = vmatprep.subr.mxu0 %v442
    %1530 = vmatpush1.msra.mxu0 %v441
    %1531 = vmatprep.subr.mxu0 %v438
    %1532 = vmatpush1.msra.mxu0 %v437
    %1533 = vmatprep.subr.mxu0 %v434
    %1534 = vmatpush1.msra.mxu0 %v433
    %1535 = vmatprep.subr.mxu0 %v430
    %1536 = vmatpush1.msra.mxu0 %v429
    %1537 = vmatprep.subr.mxu0 %v426
    %1538 = vmatpush1.msra.mxu0 %v425
    %1539 = vmatprep.subr.mxu0 %v422
    %1540 = vmatpush1.msra.mxu0 %v421
    %1541 = vmatprep.subr.mxu0 %v418
    %1542 = vmatpush1.msra.mxu0 %v417
    %1543 = vmatprep.subr.mxu0 %v414
    %1544 = vmatpush1.msra.mxu0 %v413
    %1545 = vmatprep.subr.mxu0 %v410
    %1546 = vmatpush1.msra.mxu0 %v409
    %1547 = vmatprep.subr.mxu0 %v406
    %1548 = vmatpush1.msra.mxu0 %v405
    %1549 = vmatprep.subr.mxu0 0.0
    %1550 = vmatpush2.msra.mxu0 0.0
    %1551 = vmatprep.subr.mxu0 0.0
    %1552 = vmatpush2.msra.mxu0 0.0
    %1553 = vmatprep.subr.mxu0 0.0
    %1554 = vmatpush2.msra.mxu0 0.0
    %1555 = vmatprep.subr.mxu0 0.0
    %1556 = vmatpush2.msra.mxu0 0.0
    %1557 = vmatprep.subr.mxu0 0.0
    %1558 = vmatpush2.msra.mxu0 0.0
    %1559 = vmatprep.subr.mxu0 0.0
    %1560 = vmatpush2.msra.mxu0 0.0
    %1561 = vmatprep.subr.mxu0 0.0
    %1562 = vmatpush2.msra.mxu0 0.0
    %1563 = vmatprep.subr.mxu0 0.0
    %1564 = vmatpush2.msra.mxu0 0.0
    %1565 = vmatprep.subr.mxu0 0.0
    %1566 = vmatpush2.msra.mxu0 0.0
    %1567 = vmatprep.subr.mxu0 0.0
    %1568 = vmatpush2.msra.mxu0 0.0
    %1569 = vmatprep.subr.mxu0 0.0
    %1570 = vmatpush2.msra.mxu0 0.0
    %1571 = vmatprep.subr.mxu0 0.0
    %1572 = vmatpush2.msra.mxu0 0.0
    %1573 = vmatprep.subr.mxu0 0.0
    %1574 = vmatpush2.msra.mxu0 0.0
    %1575 = vmatprep.subr.mxu0 0.0
    %1576 = vmatpush2.msra.mxu0 0.0
    %1577 = vmatprep.subr.mxu0 0.0
    %1578 = vmatpush2.msra.mxu0 0.0
    %1579 = vmatprep.subr.mxu0 0.0
    %1580 = vmatpush2.msra.mxu0 0.0
    %1581 = vmatprep.mubr.f32.mxu0 0.0
    %1582 = vmatmul.mubr.f32.gmra.mxu0 %v1512
    %v1583 = vpop.f32.mrf.mxu0
    %v1584 = vadd.f32 0.0, %v1583
    %v1585 = vpop.f32.mrf.mxu0
    %v1586 = vadd.f32 0.0, %v1585
    %1587 = vdwg.mxu0
    %1588 = vmatprep.subr.mxu0 %v468
    %1589 = vmatpush1.msra.mxu0 %v467
    %1590 = vmatprep.subr.mxu0 %v464
    %1591 = vmatpush1.msra.mxu0 %v463
    %1592 = vmatprep.subr.mxu0 %v460
    %1593 = vmatpush1.msra.mxu0 %v459
    %1594 = vmatprep.subr.mxu0 %v456
    %1595 = vmatpush1.msra.mxu0 %v455
    %1596 = vmatprep.subr.mxu0 %v452
    %1597 = vmatpush1.msra.mxu0 %v451
    %1598 = vmatprep.subr.mxu0 %v448
    %1599 = vmatpush1.msra.mxu0 %v447
    %1600 = vmatprep.subr.mxu0 %v444
    %1601 = vmatpush1.msra.mxu0 %v443
    %1602 = vmatprep.subr.mxu0 %v440
    %1603 = vmatpush1.msra.mxu0 %v439
    %1604 = vmatprep.subr.mxu0 %v436
    %1605 = vmatpush1.msra.mxu0 %v435
    %1606 = vmatprep.subr.mxu0 %v432
    %1607 = vmatpush1.msra.mxu0 %v431
    %1608 = vmatprep.subr.mxu0 %v428
    %1609 = vmatpush1.msra.mxu0 %v427
    %1610 = vmatprep.subr.mxu0 %v424
    %1611 = vmatpush1.msra.mxu0 %v423
    %1612 = vmatprep.subr.mxu0 %v420
    %1613 = vmatpush1.msra.mxu0 %v419
    %1614 = vmatprep.subr.mxu0 %v416
    %1615 = vmatpush1.msra.mxu0 %v415
    %1616 = vmatprep.subr.mxu0 %v412
    %1617 = vmatpush1.msra.mxu0 %v411
    %1618 = vmatprep.subr.mxu0 %v408
    %1619 = vmatpush1.msra.mxu0 %v407
    %1620 = vmatprep.subr.mxu0 0.0
    %1621 = vmatpush2.msra.mxu0 0.0
    %1622 = vmatprep.subr.mxu0 0.0
    %1623 = vmatpush2.msra.mxu0 0.0
    %1624 = vmatprep.subr.mxu0 0.0
    %1625 = vmatpush2.msra.mxu0 0.0
    %1626 = vmatprep.subr.mxu0 0.0
    %1627 = vmatpush2.msra.mxu0 0.0
    %1628 = vmatprep.subr.mxu0 0.0
    %1629 = vmatpush2.msra.mxu0 0.0
    %1630 = vmatprep.subr.mxu0 0.0
    %1631 = vmatpush2.msra.mxu0 0.0
    %1632 = vmatprep.subr.mxu0 0.0
    %1633 = vmatpush2.msra.mxu0 0.0
    %1634 = vmatprep.subr.mxu0 0.0
    %1635 = vmatpush2.msra.mxu0 0.0
    %1636 = vmatprep.subr.mxu0 0.0
    %1637 = vmatpush2.msra.mxu0 0.0
    %1638 = vmatprep.subr.mxu0 0.0
    %1639 = vmatpush2.msra.mxu0 0.0
    %1640 = vmatprep.subr.mxu0 0.0
    %1641 = vmatpush2.msra.mxu0 0.0
    %1642 = vmatprep.subr.mxu0 0.0
    %1643 = vmatpush2.msra.mxu0 0.0
    %1644 = vmatprep.subr.mxu0 0.0
    %1645 = vmatpush2.msra.mxu0 0.0
    %1646 = vmatprep.subr.mxu0 0.0
    %1647 = vmatpush2.msra.mxu0 0.0
    %1648 = vmatprep.subr.mxu0 0.0
    %1649 = vmatpush2.msra.mxu0 0.0
    %1650 = vmatprep.subr.mxu0 0.0
    %1651 = vmatpush2.msra.mxu0 0.0
    %1652 = vmatprep.mubr.f32.mxu0 0.0
    %1653 = vmatmul.mubr.f32.gmra.mxu0 %v1512
    %v1654 = vpop.f32.mrf.mxu0
    %v1655 = vadd.f32 0.0, %v1654
    %v1656 = vpop.f32.mrf.mxu0
    %v1657 = vadd.f32 0.0, %v1656
    %1658 = vdwg.mxu0
    %v1659 = vadd.f32 %v1513, %v1584
    %v1660 = vadd.f32 %v1514, %v1586
    %v1661 = vadd.f32 %v1515, %v1655
    %v1662 = vadd.f32 %v1516, %v1657
    %v1663 = vxor.u32 %v1659, 2147483648
    %v1664 = vmul.f32 %v1663, 1.442695
    %v1665 = vpow.pop %v1664
    %v1666 = vadd.f32 %v1665, 1.0
    %v1667 = vrcp.pop %v1666
    %v1668 = vmul.f32 1.0, %v1667
    %v1669 = vxor.u32 %v1660, 2147483648
    %v1670 = vmul.f32 %v1669, 1.442695
    %v1671 = vpow.pop %v1670
    %v1672 = vadd.f32 %v1671, 1.0
    %v1673 = vrcp.pop %v1672
    %v1674 = vmul.f32 1.0, %v1673
    %v1675 = vtanh.pop %v1661
    %v1676 = vxor.u32 %v1662, 2147483648
    %v1677 = vmul.f32 %v1676, 1.442695
    %v1678 = vpow.pop %v1677
    %v1679 = vadd.f32 %v1678, 1.0
    %v1680 = vrcp.pop %v1679
    %v1681 = vmul.f32 1.0, %v1680
    %v1682 = vmul.f32 %v1674, %v1510
    %v1683 = vmul.f32 %v1668, %v1675
    %v1684 = vadd.f32 %v1682, %v1683
    %v1685 = vtanh.pop %v1684
    %v1686 = vmul.f32 %v1681, %v1685
    %v1687 = vld [vmem:[#allocation2 + $0xe0] sm:$0xff]
    %v1688 = vld [vmem:[#allocation2 + $0xe8] sm:$0xff]
    %v1689 = vld [vmem:[#allocation2 + $0xf0] sm:$0xff]
    %v1690 = vld [vmem:[#allocation2 + $0xf8] sm:$0xff]
    %1691 = vmatprep.subr.mxu0 %v466
    %1692 = vmatpush1.msra.mxu0 %v465
    %1693 = vmatprep.subr.mxu0 %v462
    %1694 = vmatpush1.msra.mxu0 %v461
    %1695 = vmatprep.subr.mxu0 %v458
    %1696 = vmatpush1.msra.mxu0 %v457
    %1697 = vmatprep.subr.mxu0 %v454
    %1698 = vmatpush1.msra.mxu0 %v453
    %1699 = vmatprep.subr.mxu0 %v450
    %1700 = vmatpush1.msra.mxu0 %v449
    %1701 = vmatprep.subr.mxu0 %v446
    %1702 = vmatpush1.msra.mxu0 %v445
    %1703 = vmatprep.subr.mxu0 %v442
    %1704 = vmatpush1.msra.mxu0 %v441
    %1705 = vmatprep.subr.mxu0 %v438
    %1706 = vmatpush1.msra.mxu0 %v437
    %1707 = vmatprep.subr.mxu0 %v434
    %1708 = vmatpush1.msra.mxu0 %v433
    %1709 = vmatprep.subr.mxu0 %v430
    %1710 = vmatpush1.msra.mxu0 %v429
    %1711 = vmatprep.subr.mxu0 %v426
    %1712 = vmatpush1.msra.mxu0 %v425
    %1713 = vmatprep.subr.mxu0 %v422
    %1714 = vmatpush1.msra.mxu0 %v421
    %1715 = vmatprep.subr.mxu0 %v418
    %1716 = vmatpush1.msra.mxu0 %v417
    %1717 = vmatprep.subr.mxu0 %v414
    %1718 = vmatpush1.msra.mxu0 %v413
    %1719 = vmatprep.subr.mxu0 %v410
    %1720 = vmatpush1.msra.mxu0 %v409
    %1721 = vmatprep.subr.mxu0 %v406
    %1722 = vmatpush1.msra.mxu0 %v405
    %1723 = vmatprep.subr.mxu0 0.0
    %1724 = vmatpush2.msra.mxu0 0.0
    %1725 = vmatprep.subr.mxu0 0.0
    %1726 = vmatpush2.msra.mxu0 0.0
    %1727 = vmatprep.subr.mxu0 0.0
    %1728 = vmatpush2.msra.mxu0 0.0
    %1729 = vmatprep.subr.mxu0 0.0
    %1730 = vmatpush2.msra.mxu0 0.0
    %1731 = vmatprep.subr.mxu0 0.0
    %1732 = vmatpush2.msra.mxu0 0.0
    %1733 = vmatprep.subr.mxu0 0.0
    %1734 = vmatpush2.msra.mxu0 0.0
    %1735 = vmatprep.subr.mxu0 0.0
    %1736 = vmatpush2.msra.mxu0 0.0
    %1737 = vmatprep.subr.mxu0 0.0
    %1738 = vmatpush2.msra.mxu0 0.0
    %1739 = vmatprep.subr.mxu0 0.0
    %1740 = vmatpush2.msra.mxu0 0.0
    %1741 = vmatprep.subr.mxu0 0.0
    %1742 = vmatpush2.msra.mxu0 0.0
    %1743 = vmatprep.subr.mxu0 0.0
    %1744 = vmatpush2.msra.mxu0 0.0
    %1745 = vmatprep.subr.mxu0 0.0
    %1746 = vmatpush2.msra.mxu0 0.0
    %1747 = vmatprep.subr.mxu0 0.0
    %1748 = vmatpush2.msra.mxu0 0.0
    %1749 = vmatprep.subr.mxu0 0.0
    %1750 = vmatpush2.msra.mxu0 0.0
    %1751 = vmatprep.subr.mxu0 0.0
    %1752 = vmatpush2.msra.mxu0 0.0
    %1753 = vmatprep.subr.mxu0 0.0
    %1754 = vmatpush2.msra.mxu0 0.0
    %1755 = vmatprep.mubr.f32.mxu0 0.0
    %1756 = vmatmul.mubr.f32.gmra.mxu0 %v1686
    %v1757 = vpop.f32.mrf.mxu0
    %v1758 = vadd.f32 0.0, %v1757
    %v1759 = vpop.f32.mrf.mxu0
    %v1760 = vadd.f32 0.0, %v1759
    %1761 = vdwg.mxu0
    %1762 = vmatprep.subr.mxu0 %v468
    %1763 = vmatpush1.msra.mxu0 %v467
    %1764 = vmatprep.subr.mxu0 %v464
    %1765 = vmatpush1.msra.mxu0 %v463
    %1766 = vmatprep.subr.mxu0 %v460
    %1767 = vmatpush1.msra.mxu0 %v459
    %1768 = vmatprep.subr.mxu0 %v456
    %1769 = vmatpush1.msra.mxu0 %v455
    %1770 = vmatprep.subr.mxu0 %v452
    %1771 = vmatpush1.msra.mxu0 %v451
    %1772 = vmatprep.subr.mxu0 %v448
    %1773 = vmatpush1.msra.mxu0 %v447
    %1774 = vmatprep.subr.mxu0 %v444
    %1775 = vmatpush1.msra.mxu0 %v443
    %1776 = vmatprep.subr.mxu0 %v440
    %1777 = vmatpush1.msra.mxu0 %v439
    %1778 = vmatprep.subr.mxu0 %v436
    %1779 = vmatpush1.msra.mxu0 %v435
    %1780 = vmatprep.subr.mxu0 %v432
    %1781 = vmatpush1.msra.mxu0 %v431
    %1782 = vmatprep.subr.mxu0 %v428
    %1783 = vmatpush1.msra.mxu0 %v427
    %1784 = vmatprep.subr.mxu0 %v424
    %1785 = vmatpush1.msra.mxu0 %v423
    %1786 = vmatprep.subr.mxu0 %v420
    %1787 = vmatpush1.msra.mxu0 %v419
    %1788 = vmatprep.subr.mxu0 %v416
    %1789 = vmatpush1.msra.mxu0 %v415
    %1790 = vmatprep.subr.mxu0 %v412
    %1791 = vmatpush1.msra.mxu0 %v411
    %1792 = vmatprep.subr.mxu0 %v408
    %1793 = vmatpush1.msra.mxu0 %v407
    %1794 = vmatprep.subr.mxu0 0.0
    %1795 = vmatpush2.msra.mxu0 0.0
    %1796 = vmatprep.subr.mxu0 0.0
    %1797 = vmatpush2.msra.mxu0 0.0
    %1798 = vmatprep.subr.mxu0 0.0
    %1799 = vmatpush2.msra.mxu0 0.0
    %1800 = vmatprep.subr.mxu0 0.0
    %1801 = vmatpush2.msra.mxu0 0.0
    %1802 = vmatprep.subr.mxu0 0.0
    %1803 = vmatpush2.msra.mxu0 0.0
    %1804 = vmatprep.subr.mxu0 0.0
    %1805 = vmatpush2.msra.mxu0 0.0
    %1806 = vmatprep.subr.mxu0 0.0
    %1807 = vmatpush2.msra.mxu0 0.0
    %1808 = vmatprep.subr.mxu0 0.0
    %1809 = vmatpush2.msra.mxu0 0.0
    %1810 = vmatprep.subr.mxu0 0.0
    %1811 = vmatpush2.msra.mxu0 0.0
    %1812 = vmatprep.subr.mxu0 0.0
    %1813 = vmatpush2.msra.mxu0 0.0
    %1814 = vmatprep.subr.mxu0 0.0
    %1815 = vmatpush2.msra.mxu0 0.0
    %1816 = vmatprep.subr.mxu0 0.0
    %1817 = vmatpush2.msra.mxu0 0.0
    %1818 = vmatprep.subr.mxu0 0.0
    %1819 = vmatpush2.msra.mxu0 0.0
    %1820 = vmatprep.subr.mxu0 0.0
    %1821 = vmatpush2.msra.mxu0 0.0
    %1822 = vmatprep.subr.mxu0 0.0
    %1823 = vmatpush2.msra.mxu0 0.0
    %1824 = vmatprep.subr.mxu0 0.0
    %1825 = vmatpush2.msra.mxu0 0.0
    %1826 = vmatprep.mubr.f32.mxu0 0.0
    %1827 = vmatmul.mubr.f32.gmra.mxu0 %v1686
    %v1828 = vpop.f32.mrf.mxu0
    %v1829 = vadd.f32 0.0, %v1828
    %v1830 = vpop.f32.mrf.mxu0
    %v1831 = vadd.f32 0.0, %v1830
    %1832 = vdwg.mxu0
    %v1833 = vadd.f32 %v1687, %v1758
    %v1834 = vadd.f32 %v1688, %v1760
    %v1835 = vadd.f32 %v1689, %v1829
    %v1836 = vadd.f32 %v1690, %v1831
    %v1837 = vxor.u32 %v1833, 2147483648
    %v1838 = vmul.f32 %v1837, 1.442695
    %v1839 = vpow.pop %v1838
    %v1840 = vadd.f32 %v1839, 1.0
    %v1841 = vrcp.pop %v1840
    %v1842 = vmul.f32 1.0, %v1841
    %v1843 = vxor.u32 %v1834, 2147483648
    %v1844 = vmul.f32 %v1843, 1.442695
    %v1845 = vpow.pop %v1844
    %v1846 = vadd.f32 %v1845, 1.0
    %v1847 = vrcp.pop %v1846
    %v1848 = vmul.f32 1.0, %v1847
    %v1849 = vtanh.pop %v1835
    %v1850 = vxor.u32 %v1836, 2147483648
    %v1851 = vmul.f32 %v1850, 1.442695
    %v1852 = vpow.pop %v1851
    %v1853 = vadd.f32 %v1852, 1.0
    %v1854 = vrcp.pop %v1853
    %v1855 = vmul.f32 1.0, %v1854
    %v1856 = vmul.f32 %v1848, %v1684
    %v1857 = vmul.f32 %v1842, %v1849
    %v1858 = vadd.f32 %v1856, %v1857
    %v1859 = vtanh.pop %v1858
    %v1860 = vmul.f32 %v1855, %v1859
    %v1861 = vld [vmem:[#allocation6] sm:$0xff]
    %v1862 = vld [vmem:[#allocation6 + $0x8] sm:$0xff]
    %v1863 = vld [vmem:[#allocation6 + $0x10] sm:$0xff]
    %v1864 = vld [vmem:[#allocation6 + $0x18] sm:$0xff]
    %v1865 = vld [vmem:[#allocation6 + $0x20] sm:$0xff]
    %v1866 = vld [vmem:[#allocation6 + $0x28] sm:$0xff]
    %v1867 = vld [vmem:[#allocation6 + $0x30] sm:$0xff]
    %v1868 = vld [vmem:[#allocation6 + $0x38] sm:$0xff]
    %v1869 = vld [vmem:[#allocation6 + $0x40] sm:$0xff]
    %v1870 = vld [vmem:[#allocation6 + $0x48] sm:$0xff]
    %v1871 = vld [vmem:[#allocation6 + $0x50] sm:$0xff]
    %v1872 = vld [vmem:[#allocation6 + $0x58] sm:$0xff]
    %v1873 = vld [vmem:[#allocation6 + $0x60] sm:$0xff]
    %v1874 = vld [vmem:[#allocation6 + $0x68] sm:$0xff]
    %v1875 = vld [vmem:[#allocation6 + $0x70] sm:$0xff]
    %v1876 = vld [vmem:[#allocation6 + $0x78] sm:$0xff]
    %v1877 = vld [vmem:[#allocation6 + $0x80] sm:$0xff]
    %v1878 = vld [vmem:[#allocation6 + $0x88] sm:$0xff]
    %v1879 = vld [vmem:[#allocation6 + $0x90] sm:$0xff]
    %v1880 = vld [vmem:[#allocation6 + $0x98] sm:$0xff]
    %v1881 = vld [vmem:[#allocation6 + $0xa0] sm:$0xff]
    %v1882 = vld [vmem:[#allocation6 + $0xa8] sm:$0xff]
    %v1883 = vld [vmem:[#allocation6 + $0xb0] sm:$0xff]
    %v1884 = vld [vmem:[#allocation6 + $0xb8] sm:$0xff]
    %v1885 = vld [vmem:[#allocation6 + $0xc0] sm:$0xff]
    %v1886 = vld [vmem:[#allocation6 + $0xc8] sm:$0xff]
    %v1887 = vld [vmem:[#allocation6 + $0xd0] sm:$0xff]
    %v1888 = vld [vmem:[#allocation6 + $0xd8] sm:$0xff]
    %v1889 = vld [vmem:[#allocation6 + $0xe0] sm:$0xff]
    %v1890 = vld [vmem:[#allocation6 + $0xe8] sm:$0xff]
    %v1891 = vld [vmem:[#allocation6 + $0xf0] sm:$0xff]
    %v1892 = vld [vmem:[#allocation6 + $0xf8] sm:$0xff]
    %v1893 = vld [vmem:[#allocation6 + $0x100] sm:$0xff]
    %v1894 = vld [vmem:[#allocation6 + $0x108] sm:$0xff]
    %v1895 = vld [vmem:[#allocation6 + $0x110] sm:$0xff]
    %v1896 = vld [vmem:[#allocation6 + $0x118] sm:$0xff]
    %v1897 = vld [vmem:[#allocation6 + $0x120] sm:$0xff]
    %v1898 = vld [vmem:[#allocation6 + $0x128] sm:$0xff]
    %v1899 = vld [vmem:[#allocation6 + $0x130] sm:$0xff]
    %v1900 = vld [vmem:[#allocation6 + $0x138] sm:$0xff]
    %v1901 = vld [vmem:[#allocation6 + $0x140] sm:$0xff]
    %v1902 = vld [vmem:[#allocation6 + $0x148] sm:$0xff]
    %v1903 = vld [vmem:[#allocation6 + $0x150] sm:$0xff]
    %v1904 = vld [vmem:[#allocation6 + $0x158] sm:$0xff]
    %v1905 = vld [vmem:[#allocation6 + $0x160] sm:$0xff]
    %v1906 = vld [vmem:[#allocation6 + $0x168] sm:$0xff]
    %v1907 = vld [vmem:[#allocation6 + $0x170] sm:$0xff]
    %v1908 = vld [vmem:[#allocation6 + $0x178] sm:$0xff]
    %v1909 = vld [vmem:[#allocation6 + $0x180] sm:$0xff]
    %v1910 = vld [vmem:[#allocation6 + $0x188] sm:$0xff]
    %v1911 = vld [vmem:[#allocation6 + $0x190] sm:$0xff]
    %v1912 = vld [vmem:[#allocation6 + $0x198] sm:$0xff]
    %v1913 = vld [vmem:[#allocation6 + $0x1a0] sm:$0xff]
    %v1914 = vld [vmem:[#allocation6 + $0x1a8] sm:$0xff]
    %v1915 = vld [vmem:[#allocation6 + $0x1b0] sm:$0xff]
    %v1916 = vld [vmem:[#allocation6 + $0x1b8] sm:$0xff]
    %v1917 = vld [vmem:[#allocation6 + $0x1c0] sm:$0xff]
    %v1918 = vld [vmem:[#allocation6 + $0x1c8] sm:$0xff]
    %v1919 = vld [vmem:[#allocation6 + $0x1d0] sm:$0xff]
    %v1920 = vld [vmem:[#allocation6 + $0x1d8] sm:$0xff]
    %v1921 = vld [vmem:[#allocation6 + $0x1e0] sm:$0xff]
    %v1922 = vld [vmem:[#allocation6 + $0x1e8] sm:$0xff]
    %v1923 = vld [vmem:[#allocation6 + $0x1f0] sm:$0xff]
    %v1924 = vld [vmem:[#allocation6 + $0x1f8] sm:$0xff]
    %v1925 = vld [vmem:[#allocation8] sm:$0xff]
    %v1926 = vld [vmem:[#allocation8 + $0x8] sm:$0xff]
    %v1927 = vld [vmem:[#allocation8 + $0x10] sm:$0xff]
    %v1928 = vld [vmem:[#allocation8 + $0x18] sm:$0xff]
    %v1929 = vld [vmem:[#allocation8 + $0x20] sm:$0xff]
    %v1930 = vld [vmem:[#allocation8 + $0x28] sm:$0xff]
    %v1931 = vld [vmem:[#allocation8 + $0x30] sm:$0xff]
    %v1932 = vld [vmem:[#allocation8 + $0x38] sm:$0xff]
    %v1933 = vld [vmem:[#allocation8 + $0x40] sm:$0xff]
    %v1934 = vld [vmem:[#allocation8 + $0x48] sm:$0xff]
    %v1935 = vld [vmem:[#allocation8 + $0x50] sm:$0xff]
    %v1936 = vld [vmem:[#allocation8 + $0x58] sm:$0xff]
    %v1937 = vld [vmem:[#allocation8 + $0x60] sm:$0xff]
    %v1938 = vld [vmem:[#allocation8 + $0x68] sm:$0xff]
    %v1939 = vld [vmem:[#allocation8 + $0x70] sm:$0xff]
    %v1940 = vld [vmem:[#allocation8 + $0x78] sm:$0xff]
    %v1941 = vld [vmem:[#allocation8 + $0x80] sm:$0xff]
    %v1942 = vld [vmem:[#allocation8 + $0x88] sm:$0xff]
    %v1943 = vld [vmem:[#allocation8 + $0x90] sm:$0xff]
    %v1944 = vld [vmem:[#allocation8 + $0x98] sm:$0xff]
    %v1945 = vld [vmem:[#allocation8 + $0xa0] sm:$0xff]
    %v1946 = vld [vmem:[#allocation8 + $0xa8] sm:$0xff]
    %v1947 = vld [vmem:[#allocation8 + $0xb0] sm:$0xff]
    %v1948 = vld [vmem:[#allocation8 + $0xb8] sm:$0xff]
    %v1949 = vld [vmem:[#allocation8 + $0xc0] sm:$0xff]
    %v1950 = vld [vmem:[#allocation8 + $0xc8] sm:$0xff]
    %v1951 = vld [vmem:[#allocation8 + $0xd0] sm:$0xff]
    %v1952 = vld [vmem:[#allocation8 + $0xd8] sm:$0xff]
    %v1953 = vld [vmem:[#allocation8 + $0xe0] sm:$0xff]
    %v1954 = vld [vmem:[#allocation8 + $0xe8] sm:$0xff]
    %v1955 = vld [vmem:[#allocation8 + $0xf0] sm:$0xff]
    %v1956 = vld [vmem:[#allocation8 + $0xf8] sm:$0xff]
    %v1957 = vld [vmem:[#allocation8 + $0x100] sm:$0xff]
    %v1958 = vld [vmem:[#allocation8 + $0x108] sm:$0xff]
    %v1959 = vld [vmem:[#allocation8 + $0x110] sm:$0xff]
    %v1960 = vld [vmem:[#allocation8 + $0x118] sm:$0xff]
    %v1961 = vld [vmem:[#allocation8 + $0x120] sm:$0xff]
    %v1962 = vld [vmem:[#allocation8 + $0x128] sm:$0xff]
    %v1963 = vld [vmem:[#allocation8 + $0x130] sm:$0xff]
    %v1964 = vld [vmem:[#allocation8 + $0x138] sm:$0xff]
    %v1965 = vld [vmem:[#allocation8 + $0x140] sm:$0xff]
    %v1966 = vld [vmem:[#allocation8 + $0x148] sm:$0xff]
    %v1967 = vld [vmem:[#allocation8 + $0x150] sm:$0xff]
    %v1968 = vld [vmem:[#allocation8 + $0x158] sm:$0xff]
    %v1969 = vld [vmem:[#allocation8 + $0x160] sm:$0xff]
    %v1970 = vld [vmem:[#allocation8 + $0x168] sm:$0xff]
    %v1971 = vld [vmem:[#allocation8 + $0x170] sm:$0xff]
    %v1972 = vld [vmem:[#allocation8 + $0x178] sm:$0xff]
    %v1973 = vld [vmem:[#allocation8 + $0x180] sm:$0xff]
    %v1974 = vld [vmem:[#allocation8 + $0x188] sm:$0xff]
    %v1975 = vld [vmem:[#allocation8 + $0x190] sm:$0xff]
    %v1976 = vld [vmem:[#allocation8 + $0x198] sm:$0xff]
    %v1977 = vld [vmem:[#allocation8 + $0x1a0] sm:$0xff]
    %v1978 = vld [vmem:[#allocation8 + $0x1a8] sm:$0xff]
    %v1979 = vld [vmem:[#allocation8 + $0x1b0] sm:$0xff]
    %v1980 = vld [vmem:[#allocation8 + $0x1b8] sm:$0xff]
    %v1981 = vld [vmem:[#allocation8 + $0x1c0] sm:$0xff]
    %v1982 = vld [vmem:[#allocation8 + $0x1c8] sm:$0xff]
    %v1983 = vld [vmem:[#allocation8 + $0x1d0] sm:$0xff]
    %v1984 = vld [vmem:[#allocation8 + $0x1d8] sm:$0xff]
    %v1985 = vld [vmem:[#allocation8 + $0x1e0] sm:$0xff]
    %v1986 = vld [vmem:[#allocation8 + $0x1e8] sm:$0xff]
    %v1987 = vld [vmem:[#allocation8 + $0x1f0] sm:$0xff]
    %v1988 = vld [vmem:[#allocation8 + $0x1f8] sm:$0xff]
    %v1989 = vld [vmem:[%s6] sm:$0xf]
    %v1991 = vlaneseq
    %v1992 = vshrl.u32 %v1991, 7
    %v1993 = vsub.s32 0, %v1992
    %v1994 = vrot.slane %v1989, %v1993
    %v1995 = vlaneseq
    %v1996 = vshrl.u32 %v1995, 7
    %v1997 = vsub.s32 1, %v1996
    %v1998 = vrot.slane %v1989, %v1997
    %v1999 = vlaneseq
    %v2000 = vshrl.u32 %v1999, 7
    %v2001 = vsub.s32 2, %v2000
    %v2002 = vrot.slane %v1989, %v2001
    %v2003 = vlaneseq
    %v2004 = vshrl.u32 %v2003, 7
    %v2005 = vsub.s32 3, %v2004
    %v2006 = vrot.slane %v1989, %v2005
    %v2011 = vld [vmem:[%s7] sm:$0xf]
    %v2013 = vlaneseq
    %v2014 = vshrl.u32 %v2013, 7
    %v2015 = vsub.s32 0, %v2014
    %v2016 = vrot.slane %v2011, %v2015
    %v2017 = vlaneseq
    %v2018 = vshrl.u32 %v2017, 7
    %v2019 = vsub.s32 1, %v2018
    %v2020 = vrot.slane %v2011, %v2019
    %v2021 = vlaneseq
    %v2022 = vshrl.u32 %v2021, 7
    %v2023 = vsub.s32 2, %v2022
    %v2024 = vrot.slane %v2011, %v2023
    %v2025 = vlaneseq
    %v2026 = vshrl.u32 %v2025, 7
    %v2027 = vsub.s32 3, %v2026
    %v2028 = vrot.slane %v2011, %v2027
    %2033 = vmatprep.subr.mxu0 %v1922
    %2034 = vmatpush1.msra.mxu0 %v1921
    %2035 = vmatprep.subr.mxu0 %v1918
    %2036 = vmatpush1.msra.mxu0 %v1917
    %2037 = vmatprep.subr.mxu0 %v1914
    %2038 = vmatpush1.msra.mxu0 %v1913
    %2039 = vmatprep.subr.mxu0 %v1910
    %2040 = vmatpush1.msra.mxu0 %v1909
    %2041 = vmatprep.subr.mxu0 %v1906
    %2042 = vmatpush1.msra.mxu0 %v1905
    %2043 = vmatprep.subr.mxu0 %v1902
    %2044 = vmatpush1.msra.mxu0 %v1901
    %2045 = vmatprep.subr.mxu0 %v1898
    %2046 = vmatpush1.msra.mxu0 %v1897
    %2047 = vmatprep.subr.mxu0 %v1894
    %2048 = vmatpush1.msra.mxu0 %v1893
    %2049 = vmatprep.subr.mxu0 %v1890
    %2050 = vmatpush1.msra.mxu0 %v1889
    %2051 = vmatprep.subr.mxu0 %v1886
    %2052 = vmatpush1.msra.mxu0 %v1885
    %2053 = vmatprep.subr.mxu0 %v1882
    %2054 = vmatpush1.msra.mxu0 %v1881
    %2055 = vmatprep.subr.mxu0 %v1878
    %2056 = vmatpush1.msra.mxu0 %v1877
    %2057 = vmatprep.subr.mxu0 %v1874
    %2058 = vmatpush1.msra.mxu0 %v1873
    %2059 = vmatprep.subr.mxu0 %v1870
    %2060 = vmatpush1.msra.mxu0 %v1869
    %2061 = vmatprep.subr.mxu0 %v1866
    %2062 = vmatpush1.msra.mxu0 %v1865
    %2063 = vmatprep.subr.mxu0 %v1862
    %2064 = vmatpush1.msra.mxu0 %v1861
    %2065 = vmatprep.subr.mxu0 0.0
    %2066 = vmatpush2.msra.mxu0 0.0
    %2067 = vmatprep.subr.mxu0 0.0
    %2068 = vmatpush2.msra.mxu0 0.0
    %2069 = vmatprep.subr.mxu0 0.0
    %2070 = vmatpush2.msra.mxu0 0.0
    %2071 = vmatprep.subr.mxu0 0.0
    %2072 = vmatpush2.msra.mxu0 0.0
    %2073 = vmatprep.subr.mxu0 0.0
    %2074 = vmatpush2.msra.mxu0 0.0
    %2075 = vmatprep.subr.mxu0 0.0
    %2076 = vmatpush2.msra.mxu0 0.0
    %2077 = vmatprep.subr.mxu0 0.0
    %2078 = vmatpush2.msra.mxu0 0.0
    %2079 = vmatprep.subr.mxu0 0.0
    %2080 = vmatpush2.msra.mxu0 0.0
    %2081 = vmatprep.subr.mxu0 0.0
    %2082 = vmatpush2.msra.mxu0 0.0
    %2083 = vmatprep.subr.mxu0 0.0
    %2084 = vmatpush2.msra.mxu0 0.0
    %2085 = vmatprep.subr.mxu0 0.0
    %2086 = vmatpush2.msra.mxu0 0.0
    %2087 = vmatprep.subr.mxu0 0.0
    %2088 = vmatpush2.msra.mxu0 0.0
    %2089 = vmatprep.subr.mxu0 0.0
    %2090 = vmatpush2.msra.mxu0 0.0
    %2091 = vmatprep.subr.mxu0 0.0
    %2092 = vmatpush2.msra.mxu0 0.0
    %2093 = vmatprep.subr.mxu0 0.0
    %2094 = vmatpush2.msra.mxu0 0.0
    %2095 = vmatprep.subr.mxu0 0.0
    %2096 = vmatpush2.msra.mxu0 0.0
    %2097 = vmatprep.mubr.f32.mxu0 0.0
    %2098 = vmatmul.mubr.f32.gmra.mxu0 %v1860
    %v2099 = vpop.f32.mrf.mxu0
    %v2100 = vadd.f32 %v2016, %v2099
    %v2101 = vpop.f32.mrf.mxu0
    %v2102 = vadd.f32 %v2020, %v2101
    %2103 = vdwg.mxu0
    %2104 = vmatprep.subr.mxu0 %v1924
    %2105 = vmatpush1.msra.mxu0 %v1923
    %2106 = vmatprep.subr.mxu0 %v1920
    %2107 = vmatpush1.msra.mxu0 %v1919
    %2108 = vmatprep.subr.mxu0 %v1916
    %2109 = vmatpush1.msra.mxu0 %v1915
    %2110 = vmatprep.subr.mxu0 %v1912
    %2111 = vmatpush1.msra.mxu0 %v1911
    %2112 = vmatprep.subr.mxu0 %v1908
    %2113 = vmatpush1.msra.mxu0 %v1907
    %2114 = vmatprep.subr.mxu0 %v1904
    %2115 = vmatpush1.msra.mxu0 %v1903
    %2116 = vmatprep.subr.mxu0 %v1900
    %2117 = vmatpush1.msra.mxu0 %v1899
    %2118 = vmatprep.subr.mxu0 %v1896
    %2119 = vmatpush1.msra.mxu0 %v1895
    %2120 = vmatprep.subr.mxu0 %v1892
    %2121 = vmatpush1.msra.mxu0 %v1891
    %2122 = vmatprep.subr.mxu0 %v1888
    %2123 = vmatpush1.msra.mxu0 %v1887
    %2124 = vmatprep.subr.mxu0 %v1884
    %2125 = vmatpush1.msra.mxu0 %v1883
    %2126 = vmatprep.subr.mxu0 %v1880
    %2127 = vmatpush1.msra.mxu0 %v1879
    %2128 = vmatprep.subr.mxu0 %v1876
    %2129 = vmatpush1.msra.mxu0 %v1875
    %2130 = vmatprep.subr.mxu0 %v1872
    %2131 = vmatpush1.msra.mxu0 %v1871
    %2132 = vmatprep.subr.mxu0 %v1868
    %2133 = vmatpush1.msra.mxu0 %v1867
    %2134 = vmatprep.subr.mxu0 %v1864
    %2135 = vmatpush1.msra.mxu0 %v1863
    %2136 = vmatprep.subr.mxu0 0.0
    %2137 = vmatpush2.msra.mxu0 0.0
    %2138 = vmatprep.subr.mxu0 0.0
    %2139 = vmatpush2.msra.mxu0 0.0
    %2140 = vmatprep.subr.mxu0 0.0
    %2141 = vmatpush2.msra.mxu0 0.0
    %2142 = vmatprep.subr.mxu0 0.0
    %2143 = vmatpush2.msra.mxu0 0.0
    %2144 = vmatprep.subr.mxu0 0.0
    %2145 = vmatpush2.msra.mxu0 0.0
    %2146 = vmatprep.subr.mxu0 0.0
    %2147 = vmatpush2.msra.mxu0 0.0
    %2148 = vmatprep.subr.mxu0 0.0
    %2149 = vmatpush2.msra.mxu0 0.0
    %2150 = vmatprep.subr.mxu0 0.0
    %2151 = vmatpush2.msra.mxu0 0.0
    %2152 = vmatprep.subr.mxu0 0.0
    %2153 = vmatpush2.msra.mxu0 0.0
    %2154 = vmatprep.subr.mxu0 0.0
    %2155 = vmatpush2.msra.mxu0 0.0
    %2156 = vmatprep.subr.mxu0 0.0
    %2157 = vmatpush2.msra.mxu0 0.0
    %2158 = vmatprep.subr.mxu0 0.0
    %2159 = vmatpush2.msra.mxu0 0.0
    %2160 = vmatprep.subr.mxu0 0.0
    %2161 = vmatpush2.msra.mxu0 0.0
    %2162 = vmatprep.subr.mxu0 0.0
    %2163 = vmatpush2.msra.mxu0 0.0
    %2164 = vmatprep.subr.mxu0 0.0
    %2165 = vmatpush2.msra.mxu0 0.0
    %2166 = vmatprep.subr.mxu0 0.0
    %2167 = vmatpush2.msra.mxu0 0.0
    %2168 = vmatprep.mubr.f32.mxu0 0.0
    %2169 = vmatmul.mubr.f32.gmra.mxu0 %v1860
    %v2170 = vpop.f32.mrf.mxu0
    %v2171 = vadd.f32 %v2024, %v2170
    %v2172 = vpop.f32.mrf.mxu0
    %v2173 = vadd.f32 %v2028, %v2172
    %2174 = vdwg.mxu0
    %v2175 = vxor.u32 %v2100, 2147483648
    %v2176 = vmul.f32 %v2175, 1.442695
    %v2177 = vpow.pop %v2176
    %v2178 = vadd.f32 %v2177, 1.0
    %v2179 = vrcp.pop %v2178
    %v2180 = vmul.f32 1.0, %v2179
    %v2181 = vxor.u32 %v2102, 2147483648
    %v2182 = vmul.f32 %v2181, 1.442695
    %v2183 = vpow.pop %v2182
    %v2184 = vadd.f32 %v2183, 1.0
    %v2185 = vrcp.pop %v2184
    %v2186 = vmul.f32 1.0, %v2185
    %v2187 = vtanh.pop %v2171
    %v2188 = vxor.u32 %v2173, 2147483648
    %v2189 = vmul.f32 %v2188, 1.442695
    %v2190 = vpow.pop %v2189
    %v2191 = vadd.f32 %v2190, 1.0
    %v2192 = vrcp.pop %v2191
    %v2193 = vmul.f32 1.0, %v2192
    %v2194 = vmul.f32 %v2186, %v1858
    %v2195 = vmul.f32 %v2180, %v2187
    %v2196 = vadd.f32 %v2194, %v2195
    %v2197 = vtanh.pop %v2196
    %v2198 = vmul.f32 %v2193, %v2197
    %2199 = vst [vmem:[#allocation3] sm:$0xff] %v2198
    %2200 = vmatprep.subr.mxu0 %v1986
    %2201 = vmatpush1.msra.mxu0 %v1985
    %2202 = vmatprep.subr.mxu0 %v1982
    %2203 = vmatpush1.msra.mxu0 %v1981
    %2204 = vmatprep.subr.mxu0 %v1978
    %2205 = vmatpush1.msra.mxu0 %v1977
    %2206 = vmatprep.subr.mxu0 %v1974
    %2207 = vmatpush1.msra.mxu0 %v1973
    %2208 = vmatprep.subr.mxu0 %v1970
    %2209 = vmatpush1.msra.mxu0 %v1969
    %2210 = vmatprep.subr.mxu0 %v1966
    %2211 = vmatpush1.msra.mxu0 %v1965
    %2212 = vmatprep.subr.mxu0 %v1962
    %2213 = vmatpush1.msra.mxu0 %v1961
    %2214 = vmatprep.subr.mxu0 %v1958
    %2215 = vmatpush1.msra.mxu0 %v1957
    %2216 = vmatprep.subr.mxu0 %v1954
    %2217 = vmatpush1.msra.mxu0 %v1953
    %2218 = vmatprep.subr.mxu0 %v1950
    %2219 = vmatpush1.msra.mxu0 %v1949
    %2220 = vmatprep.subr.mxu0 %v1946
    %2221 = vmatpush1.msra.mxu0 %v1945
    %2222 = vmatprep.subr.mxu0 %v1942
    %2223 = vmatpush1.msra.mxu0 %v1941
    %2224 = vmatprep.subr.mxu0 %v1938
    %2225 = vmatpush1.msra.mxu0 %v1937
    %2226 = vmatprep.subr.mxu0 %v1934
    %2227 = vmatpush1.msra.mxu0 %v1933
    %2228 = vmatprep.subr.mxu0 %v1930
    %2229 = vmatpush1.msra.mxu0 %v1929
    %2230 = vmatprep.subr.mxu0 %v1926
    %2231 = vmatpush1.msra.mxu0 %v1925
    %2232 = vmatprep.subr.mxu0 0.0
    %2233 = vmatpush2.msra.mxu0 0.0
    %2234 = vmatprep.subr.mxu0 0.0
    %2235 = vmatpush2.msra.mxu0 0.0
    %2236 = vmatprep.subr.mxu0 0.0
    %2237 = vmatpush2.msra.mxu0 0.0
    %2238 = vmatprep.subr.mxu0 0.0
    %2239 = vmatpush2.msra.mxu0 0.0
    %2240 = vmatprep.subr.mxu0 0.0
    %2241 = vmatpush2.msra.mxu0 0.0
    %2242 = vmatprep.subr.mxu0 0.0
    %2243 = vmatpush2.msra.mxu0 0.0
    %2244 = vmatprep.subr.mxu0 0.0
    %2245 = vmatpush2.msra.mxu0 0.0
    %2246 = vmatprep.subr.mxu0 0.0
    %2247 = vmatpush2.msra.mxu0 0.0
    %2248 = vmatprep.subr.mxu0 0.0
    %2249 = vmatpush2.msra.mxu0 0.0
    %2250 = vmatprep.subr.mxu0 0.0
    %2251 = vmatpush2.msra.mxu0 0.0
    %2252 = vmatprep.subr.mxu0 0.0
    %2253 = vmatpush2.msra.mxu0 0.0
    %2254 = vmatprep.subr.mxu0 0.0
    %2255 = vmatpush2.msra.mxu0 0.0
    %2256 = vmatprep.subr.mxu0 0.0
    %2257 = vmatpush2.msra.mxu0 0.0
    %2258 = vmatprep.subr.mxu0 0.0
    %2259 = vmatpush2.msra.mxu0 0.0
    %2260 = vmatprep.subr.mxu0 0.0
    %2261 = vmatpush2.msra.mxu0 0.0
    %2262 = vmatprep.subr.mxu0 0.0
    %2263 = vmatpush2.msra.mxu0 0.0
    %2264 = vmatprep.mubr.f32.mxu0 0.0
    %2265 = vmatmul.mubr.f32.gmra.mxu0 %v2198
    %v2266 = vpop.f32.mrf.mxu0
    %v2267 = vadd.f32 %v1994, %v2266
    %v2268 = vpop.f32.mrf.mxu0
    %v2269 = vadd.f32 %v1998, %v2268
    %2270 = vdwg.mxu0
    %2271 = vmatprep.subr.mxu0 %v1988
    %2272 = vmatpush1.msra.mxu0 %v1987
    %2273 = vmatprep.subr.mxu0 %v1984
    %2274 = vmatpush1.msra.mxu0 %v1983
    %2275 = vmatprep.subr.mxu0 %v1980
    %2276 = vmatpush1.msra.mxu0 %v1979
    %2277 = vmatprep.subr.mxu0 %v1976
    %2278 = vmatpush1.msra.mxu0 %v1975
    %2279 = vmatprep.subr.mxu0 %v1972
    %2280 = vmatpush1.msra.mxu0 %v1971
    %2281 = vmatprep.subr.mxu0 %v1968
    %2282 = vmatpush1.msra.mxu0 %v1967
    %2283 = vmatprep.subr.mxu0 %v1964
    %2284 = vmatpush1.msra.mxu0 %v1963
    %2285 = vmatprep.subr.mxu0 %v1960
    %2286 = vmatpush1.msra.mxu0 %v1959
    %2287 = vmatprep.subr.mxu0 %v1956
    %2288 = vmatpush1.msra.mxu0 %v1955
    %2289 = vmatprep.subr.mxu0 %v1952
    %2290 = vmatpush1.msra.mxu0 %v1951
    %2291 = vmatprep.subr.mxu0 %v1948
    %2292 = vmatpush1.msra.mxu0 %v1947
    %2293 = vmatprep.subr.mxu0 %v1944
    %2294 = vmatpush1.msra.mxu0 %v1943
    %2295 = vmatprep.subr.mxu0 %v1940
    %2296 = vmatpush1.msra.mxu0 %v1939
    %2297 = vmatprep.subr.mxu0 %v1936
    %2298 = vmatpush1.msra.mxu0 %v1935
    %2299 = vmatprep.subr.mxu0 %v1932
    %2300 = vmatpush1.msra.mxu0 %v1931
    %2301 = vmatprep.subr.mxu0 %v1928
    %2302 = vmatpush1.msra.mxu0 %v1927
    %2303 = vmatprep.subr.mxu0 0.0
    %2304 = vmatpush2.msra.mxu0 0.0
    %2305 = vmatprep.subr.mxu0 0.0
    %2306 = vmatpush2.msra.mxu0 0.0
    %2307 = vmatprep.subr.mxu0 0.0
    %2308 = vmatpush2.msra.mxu0 0.0
    %2309 = vmatprep.subr.mxu0 0.0
    %2310 = vmatpush2.msra.mxu0 0.0
    %2311 = vmatprep.subr.mxu0 0.0
    %2312 = vmatpush2.msra.mxu0 0.0
    %2313 = vmatprep.subr.mxu0 0.0
    %2314 = vmatpush2.msra.mxu0 0.0
    %2315 = vmatprep.subr.mxu0 0.0
    %2316 = vmatpush2.msra.mxu0 0.0
    %2317 = vmatprep.subr.mxu0 0.0
    %2318 = vmatpush2.msra.mxu0 0.0
    %2319 = vmatprep.subr.mxu0 0.0
    %2320 = vmatpush2.msra.mxu0 0.0
    %2321 = vmatprep.subr.mxu0 0.0
    %2322 = vmatpush2.msra.mxu0 0.0
    %2323 = vmatprep.subr.mxu0 0.0
    %2324 = vmatpush2.msra.mxu0 0.0
    %2325 = vmatprep.subr.mxu0 0.0
    %2326 = vmatpush2.msra.mxu0 0.0
    %2327 = vmatprep.subr.mxu0 0.0
    %2328 = vmatpush2.msra.mxu0 0.0
    %2329 = vmatprep.subr.mxu0 0.0
    %2330 = vmatpush2.msra.mxu0 0.0
    %2331 = vmatprep.subr.mxu0 0.0
    %2332 = vmatpush2.msra.mxu0 0.0
    %2333 = vmatprep.subr.mxu0 0.0
    %2334 = vmatpush2.msra.mxu0 0.0
    %2335 = vmatprep.mubr.f32.mxu0 0.0
    %2336 = vmatmul.mubr.f32.gmra.mxu0 %v2198
    %v2337 = vpop.f32.mrf.mxu0
    %v2338 = vadd.f32 %v2002, %v2337
    %v2339 = vpop.f32.mrf.mxu0
    %v2340 = vadd.f32 %v2006, %v2339
    %2341 = vdwg.mxu0
    %v2342 = vxor.u32 %v2267, 2147483648
    %v2343 = vmul.f32 %v2342, 1.442695
    %v2344 = vpow.pop %v2343
    %v2345 = vadd.f32 %v2344, 1.0
    %v2346 = vrcp.pop %v2345
    %v2347 = vmul.f32 1.0, %v2346
    %v2348 = vxor.u32 %v2269, 2147483648
    %v2349 = vmul.f32 %v2348, 1.442695
    %v2350 = vpow.pop %v2349
    %v2351 = vadd.f32 %v2350, 1.0
    %v2352 = vrcp.pop %v2351
    %v2353 = vmul.f32 1.0, %v2352
    %v2354 = vtanh.pop %v2338
    %v2355 = vxor.u32 %v2340, 2147483648
    %v2356 = vmul.f32 %v2355, 1.442695
    %v2357 = vpow.pop %v2356
    %v2358 = vadd.f32 %v2357, 1.0
    %v2359 = vrcp.pop %v2358
    %v2360 = vmul.f32 1.0, %v2359
    %v2361 = vmul.f32 %v2353, %v2196
    %v2362 = vmul.f32 %v2347, %v2354
    %v2363 = vadd.f32 %v2361, %v2362
    %v2364 = vtanh.pop %v2363
    %v2365 = vmul.f32 %v2360, %v2364
    %2366 = vst [vmem:[#allocation3 + $0x8] sm:$0xff] %v2365
    %2367 = vmatprep.subr.mxu0 %v1986
    %2368 = vmatpush1.msra.mxu0 %v1985
    %2369 = vmatprep.subr.mxu0 %v1982
    %2370 = vmatpush1.msra.mxu0 %v1981
    %2371 = vmatprep.subr.mxu0 %v1978
    %2372 = vmatpush1.msra.mxu0 %v1977
    %2373 = vmatprep.subr.mxu0 %v1974
    %2374 = vmatpush1.msra.mxu0 %v1973
    %2375 = vmatprep.subr.mxu0 %v1970
    %2376 = vmatpush1.msra.mxu0 %v1969
    %2377 = vmatprep.subr.mxu0 %v1966
    %2378 = vmatpush1.msra.mxu0 %v1965
    %2379 = vmatprep.subr.mxu0 %v1962
    %2380 = vmatpush1.msra.mxu0 %v1961
    %2381 = vmatprep.subr.mxu0 %v1958
    %2382 = vmatpush1.msra.mxu0 %v1957
    %2383 = vmatprep.subr.mxu0 %v1954
    %2384 = vmatpush1.msra.mxu0 %v1953
    %2385 = vmatprep.subr.mxu0 %v1950
    %2386 = vmatpush1.msra.mxu0 %v1949
    %2387 = vmatprep.subr.mxu0 %v1946
    %2388 = vmatpush1.msra.mxu0 %v1945
    %2389 = vmatprep.subr.mxu0 %v1942
    %2390 = vmatpush1.msra.mxu0 %v1941
    %2391 = vmatprep.subr.mxu0 %v1938
    %2392 = vmatpush1.msra.mxu0 %v1937
    %2393 = vmatprep.subr.mxu0 %v1934
    %2394 = vmatpush1.msra.mxu0 %v1933
    %2395 = vmatprep.subr.mxu0 %v1930
    %2396 = vmatpush1.msra.mxu0 %v1929
    %2397 = vmatprep.subr.mxu0 %v1926
    %2398 = vmatpush1.msra.mxu0 %v1925
    %2399 = vmatprep.subr.mxu0 0.0
    %2400 = vmatpush2.msra.mxu0 0.0
    %2401 = vmatprep.subr.mxu0 0.0
    %2402 = vmatpush2.msra.mxu0 0.0
    %2403 = vmatprep.subr.mxu0 0.0
    %2404 = vmatpush2.msra.mxu0 0.0
    %2405 = vmatprep.subr.mxu0 0.0
    %2406 = vmatpush2.msra.mxu0 0.0
    %2407 = vmatprep.subr.mxu0 0.0
    %2408 = vmatpush2.msra.mxu0 0.0
    %2409 = vmatprep.subr.mxu0 0.0
    %2410 = vmatpush2.msra.mxu0 0.0
    %2411 = vmatprep.subr.mxu0 0.0
    %2412 = vmatpush2.msra.mxu0 0.0
    %2413 = vmatprep.subr.mxu0 0.0
    %2414 = vmatpush2.msra.mxu0 0.0
    %2415 = vmatprep.subr.mxu0 0.0
    %2416 = vmatpush2.msra.mxu0 0.0
    %2417 = vmatprep.subr.mxu0 0.0
    %2418 = vmatpush2.msra.mxu0 0.0
    %2419 = vmatprep.subr.mxu0 0.0
    %2420 = vmatpush2.msra.mxu0 0.0
    %2421 = vmatprep.subr.mxu0 0.0
    %2422 = vmatpush2.msra.mxu0 0.0
    %2423 = vmatprep.subr.mxu0 0.0
    %2424 = vmatpush2.msra.mxu0 0.0
    %2425 = vmatprep.subr.mxu0 0.0
    %2426 = vmatpush2.msra.mxu0 0.0
    %2427 = vmatprep.subr.mxu0 0.0
    %2428 = vmatpush2.msra.mxu0 0.0
    %2429 = vmatprep.subr.mxu0 0.0
    %2430 = vmatpush2.msra.mxu0 0.0
    %2431 = vmatprep.mubr.f32.mxu0 0.0
    %2432 = vmatmul.mubr.f32.gmra.mxu0 %v2365
    %v2433 = vpop.f32.mrf.mxu0
    %v2434 = vadd.f32 %v1994, %v2433
    %v2435 = vpop.f32.mrf.mxu0
    %v2436 = vadd.f32 %v1998, %v2435
    %2437 = vdwg.mxu0
    %2438 = vmatprep.subr.mxu0 %v1988
    %2439 = vmatpush1.msra.mxu0 %v1987
    %2440 = vmatprep.subr.mxu0 %v1984
    %2441 = vmatpush1.msra.mxu0 %v1983
    %2442 = vmatprep.subr.mxu0 %v1980
    %2443 = vmatpush1.msra.mxu0 %v1979
    %2444 = vmatprep.subr.mxu0 %v1976
    %2445 = vmatpush1.msra.mxu0 %v1975
    %2446 = vmatprep.subr.mxu0 %v1972
    %2447 = vmatpush1.msra.mxu0 %v1971
    %2448 = vmatprep.subr.mxu0 %v1968
    %2449 = vmatpush1.msra.mxu0 %v1967
    %2450 = vmatprep.subr.mxu0 %v1964
    %2451 = vmatpush1.msra.mxu0 %v1963
    %2452 = vmatprep.subr.mxu0 %v1960
    %2453 = vmatpush1.msra.mxu0 %v1959
    %2454 = vmatprep.subr.mxu0 %v1956
    %2455 = vmatpush1.msra.mxu0 %v1955
    %2456 = vmatprep.subr.mxu0 %v1952
    %2457 = vmatpush1.msra.mxu0 %v1951
    %2458 = vmatprep.subr.mxu0 %v1948
    %2459 = vmatpush1.msra.mxu0 %v1947
    %2460 = vmatprep.subr.mxu0 %v1944
    %2461 = vmatpush1.msra.mxu0 %v1943
    %2462 = vmatprep.subr.mxu0 %v1940
    %2463 = vmatpush1.msra.mxu0 %v1939
    %2464 = vmatprep.subr.mxu0 %v1936
    %2465 = vmatpush1.msra.mxu0 %v1935
    %2466 = vmatprep.subr.mxu0 %v1932
    %2467 = vmatpush1.msra.mxu0 %v1931
    %2468 = vmatprep.subr.mxu0 %v1928
    %2469 = vmatpush1.msra.mxu0 %v1927
    %2470 = vmatprep.subr.mxu0 0.0
    %2471 = vmatpush2.msra.mxu0 0.0
    %2472 = vmatprep.subr.mxu0 0.0
    %2473 = vmatpush2.msra.mxu0 0.0
    %2474 = vmatprep.subr.mxu0 0.0
    %2475 = vmatpush2.msra.mxu0 0.0
    %2476 = vmatprep.subr.mxu0 0.0
    %2477 = vmatpush2.msra.mxu0 0.0
    %2478 = vmatprep.subr.mxu0 0.0
    %2479 = vmatpush2.msra.mxu0 0.0
    %2480 = vmatprep.subr.mxu0 0.0
    %2481 = vmatpush2.msra.mxu0 0.0
    %2482 = vmatprep.subr.mxu0 0.0
    %2483 = vmatpush2.msra.mxu0 0.0
    %2484 = vmatprep.subr.mxu0 0.0
    %2485 = vmatpush2.msra.mxu0 0.0
    %2486 = vmatprep.subr.mxu0 0.0
    %2487 = vmatpush2.msra.mxu0 0.0
    %2488 = vmatprep.subr.mxu0 0.0
    %2489 = vmatpush2.msra.mxu0 0.0
    %2490 = vmatprep.subr.mxu0 0.0
    %2491 = vmatpush2.msra.mxu0 0.0
    %2492 = vmatprep.subr.mxu0 0.0
    %2493 = vmatpush2.msra.mxu0 0.0
    %2494 = vmatprep.subr.mxu0 0.0
    %2495 = vmatpush2.msra.mxu0 0.0
    %2496 = vmatprep.subr.mxu0 0.0
    %2497 = vmatpush2.msra.mxu0 0.0
    %2498 = vmatprep.subr.mxu0 0.0
    %2499 = vmatpush2.msra.mxu0 0.0
    %2500 = vmatprep.subr.mxu0 0.0
    %2501 = vmatpush2.msra.mxu0 0.0
    %2502 = vmatprep.mubr.f32.mxu0 0.0
    %2503 = vmatmul.mubr.f32.gmra.mxu0 %v2365
    %v2504 = vpop.f32.mrf.mxu0
    %v2505 = vadd.f32 %v2002, %v2504
    %v2506 = vpop.f32.mrf.mxu0
    %v2507 = vadd.f32 %v2006, %v2506
    %2508 = vdwg.mxu0
    %v2509 = vxor.u32 %v2434, 2147483648
    %v2510 = vmul.f32 %v2509, 1.442695
    %v2511 = vpow.pop %v2510
    %v2512 = vadd.f32 %v2511, 1.0
    %v2513 = vrcp.pop %v2512
    %v2514 = vmul.f32 1.0, %v2513
    %v2515 = vxor.u32 %v2436, 2147483648
    %v2516 = vmul.f32 %v2515, 1.442695
    %v2517 = vpow.pop %v2516
    %v2518 = vadd.f32 %v2517, 1.0
    %v2519 = vrcp.pop %v2518
    %v2520 = vmul.f32 1.0, %v2519
    %v2521 = vtanh.pop %v2505
    %v2522 = vxor.u32 %v2507, 2147483648
    %v2523 = vmul.f32 %v2522, 1.442695
    %v2524 = vpow.pop %v2523
    %v2525 = vadd.f32 %v2524, 1.0
    %v2526 = vrcp.pop %v2525
    %v2527 = vmul.f32 1.0, %v2526
    %v2528 = vmul.f32 %v2520, %v2363
    %v2529 = vmul.f32 %v2514, %v2521
    %v2530 = vadd.f32 %v2528, %v2529
    %v2531 = vtanh.pop %v2530
    %v2532 = vmul.f32 %v2527, %v2531
    %2533 = vst [vmem:[#allocation3 + $0x10] sm:$0xff] %v2532
    %2534 = vmatprep.subr.mxu0 %v1986
    %2535 = vmatpush1.msra.mxu0 %v1985
    %2536 = vmatprep.subr.mxu0 %v1982
    %2537 = vmatpush1.msra.mxu0 %v1981
    %2538 = vmatprep.subr.mxu0 %v1978
    %2539 = vmatpush1.msra.mxu0 %v1977
    %2540 = vmatprep.subr.mxu0 %v1974
    %2541 = vmatpush1.msra.mxu0 %v1973
    %2542 = vmatprep.subr.mxu0 %v1970
    %2543 = vmatpush1.msra.mxu0 %v1969
    %2544 = vmatprep.subr.mxu0 %v1966
    %2545 = vmatpush1.msra.mxu0 %v1965
    %2546 = vmatprep.subr.mxu0 %v1962
    %2547 = vmatpush1.msra.mxu0 %v1961
    %2548 = vmatprep.subr.mxu0 %v1958
    %2549 = vmatpush1.msra.mxu0 %v1957
    %2550 = vmatprep.subr.mxu0 %v1954
    %2551 = vmatpush1.msra.mxu0 %v1953
    %2552 = vmatprep.subr.mxu0 %v1950
    %2553 = vmatpush1.msra.mxu0 %v1949
    %2554 = vmatprep.subr.mxu0 %v1946
    %2555 = vmatpush1.msra.mxu0 %v1945
    %2556 = vmatprep.subr.mxu0 %v1942
    %2557 = vmatpush1.msra.mxu0 %v1941
    %2558 = vmatprep.subr.mxu0 %v1938
    %2559 = vmatpush1.msra.mxu0 %v1937
    %2560 = vmatprep.subr.mxu0 %v1934
    %2561 = vmatpush1.msra.mxu0 %v1933
    %2562 = vmatprep.subr.mxu0 %v1930
    %2563 = vmatpush1.msra.mxu0 %v1929
    %2564 = vmatprep.subr.mxu0 %v1926
    %2565 = vmatpush1.msra.mxu0 %v1925
    %2566 = vmatprep.subr.mxu0 0.0
    %2567 = vmatpush2.msra.mxu0 0.0
    %2568 = vmatprep.subr.mxu0 0.0
    %2569 = vmatpush2.msra.mxu0 0.0
    %2570 = vmatprep.subr.mxu0 0.0
    %2571 = vmatpush2.msra.mxu0 0.0
    %2572 = vmatprep.subr.mxu0 0.0
    %2573 = vmatpush2.msra.mxu0 0.0
    %2574 = vmatprep.subr.mxu0 0.0
    %2575 = vmatpush2.msra.mxu0 0.0
    %2576 = vmatprep.subr.mxu0 0.0
    %2577 = vmatpush2.msra.mxu0 0.0
    %2578 = vmatprep.subr.mxu0 0.0
    %2579 = vmatpush2.msra.mxu0 0.0
    %2580 = vmatprep.subr.mxu0 0.0
    %2581 = vmatpush2.msra.mxu0 0.0
    %2582 = vmatprep.subr.mxu0 0.0
    %2583 = vmatpush2.msra.mxu0 0.0
    %2584 = vmatprep.subr.mxu0 0.0
    %2585 = vmatpush2.msra.mxu0 0.0
    %2586 = vmatprep.subr.mxu0 0.0
    %2587 = vmatpush2.msra.mxu0 0.0
    %2588 = vmatprep.subr.mxu0 0.0
    %2589 = vmatpush2.msra.mxu0 0.0
    %2590 = vmatprep.subr.mxu0 0.0
    %2591 = vmatpush2.msra.mxu0 0.0
    %2592 = vmatprep.subr.mxu0 0.0
    %2593 = vmatpush2.msra.mxu0 0.0
    %2594 = vmatprep.subr.mxu0 0.0
    %2595 = vmatpush2.msra.mxu0 0.0
    %2596 = vmatprep.subr.mxu0 0.0
    %2597 = vmatpush2.msra.mxu0 0.0
    %2598 = vmatprep.mubr.f32.mxu0 0.0
    %2599 = vmatmul.mubr.f32.gmra.mxu0 %v2532
    %v2600 = vpop.f32.mrf.mxu0
    %v2601 = vadd.f32 %v1994, %v2600
    %v2602 = vpop.f32.mrf.mxu0
    %v2603 = vadd.f32 %v1998, %v2602
    %2604 = vdwg.mxu0
    %2605 = vmatprep.subr.mxu0 %v1988
    %2606 = vmatpush1.msra.mxu0 %v1987
    %2607 = vmatprep.subr.mxu0 %v1984
    %2608 = vmatpush1.msra.mxu0 %v1983
    %2609 = vmatprep.subr.mxu0 %v1980
    %2610 = vmatpush1.msra.mxu0 %v1979
    %2611 = vmatprep.subr.mxu0 %v1976
    %2612 = vmatpush1.msra.mxu0 %v1975
    %2613 = vmatprep.subr.mxu0 %v1972
    %2614 = vmatpush1.msra.mxu0 %v1971
    %2615 = vmatprep.subr.mxu0 %v1968
    %2616 = vmatpush1.msra.mxu0 %v1967
    %2617 = vmatprep.subr.mxu0 %v1964
    %2618 = vmatpush1.msra.mxu0 %v1963
    %2619 = vmatprep.subr.mxu0 %v1960
    %2620 = vmatpush1.msra.mxu0 %v1959
    %2621 = vmatprep.subr.mxu0 %v1956
    %2622 = vmatpush1.msra.mxu0 %v1955
    %2623 = vmatprep.subr.mxu0 %v1952
    %2624 = vmatpush1.msra.mxu0 %v1951
    %2625 = vmatprep.subr.mxu0 %v1948
    %2626 = vmatpush1.msra.mxu0 %v1947
    %2627 = vmatprep.subr.mxu0 %v1944
    %2628 = vmatpush1.msra.mxu0 %v1943
    %2629 = vmatprep.subr.mxu0 %v1940
    %2630 = vmatpush1.msra.mxu0 %v1939
    %2631 = vmatprep.subr.mxu0 %v1936
    %2632 = vmatpush1.msra.mxu0 %v1935
    %2633 = vmatprep.subr.mxu0 %v1932
    %2634 = vmatpush1.msra.mxu0 %v1931
    %2635 = vmatprep.subr.mxu0 %v1928
    %2636 = vmatpush1.msra.mxu0 %v1927
    %2637 = vmatprep.subr.mxu0 0.0
    %2638 = vmatpush2.msra.mxu0 0.0
    %2639 = vmatprep.subr.mxu0 0.0
    %2640 = vmatpush2.msra.mxu0 0.0
    %2641 = vmatprep.subr.mxu0 0.0
    %2642 = vmatpush2.msra.mxu0 0.0
    %2643 = vmatprep.subr.mxu0 0.0
    %2644 = vmatpush2.msra.mxu0 0.0
    %2645 = vmatprep.subr.mxu0 0.0
    %2646 = vmatpush2.msra.mxu0 0.0
    %2647 = vmatprep.subr.mxu0 0.0
    %2648 = vmatpush2.msra.mxu0 0.0
    %2649 = vmatprep.subr.mxu0 0.0
    %2650 = vmatpush2.msra.mxu0 0.0
    %2651 = vmatprep.subr.mxu0 0.0
    %2652 = vmatpush2.msra.mxu0 0.0
    %2653 = vmatprep.subr.mxu0 0.0
    %2654 = vmatpush2.msra.mxu0 0.0
    %2655 = vmatprep.subr.mxu0 0.0
    %2656 = vmatpush2.msra.mxu0 0.0
    %2657 = vmatprep.subr.mxu0 0.0
    %2658 = vmatpush2.msra.mxu0 0.0
    %2659 = vmatprep.subr.mxu0 0.0
    %2660 = vmatpush2.msra.mxu0 0.0
    %2661 = vmatprep.subr.mxu0 0.0
    %2662 = vmatpush2.msra.mxu0 0.0
    %2663 = vmatprep.subr.mxu0 0.0
    %2664 = vmatpush2.msra.mxu0 0.0
    %2665 = vmatprep.subr.mxu0 0.0
    %2666 = vmatpush2.msra.mxu0 0.0
    %2667 = vmatprep.subr.mxu0 0.0
    %2668 = vmatpush2.msra.mxu0 0.0
    %2669 = vmatprep.mubr.f32.mxu0 0.0
    %2670 = vmatmul.mubr.f32.gmra.mxu0 %v2532
    %v2671 = vpop.f32.mrf.mxu0
    %v2672 = vadd.f32 %v2002, %v2671
    %v2673 = vpop.f32.mrf.mxu0
    %v2674 = vadd.f32 %v2006, %v2673
    %2675 = vdwg.mxu0
    %v2676 = vxor.u32 %v2601, 2147483648
    %v2677 = vmul.f32 %v2676, 1.442695
    %v2678 = vpow.pop %v2677
    %v2679 = vadd.f32 %v2678, 1.0
    %v2680 = vrcp.pop %v2679
    %v2681 = vmul.f32 1.0, %v2680
    %v2682 = vxor.u32 %v2603, 2147483648
    %v2683 = vmul.f32 %v2682, 1.442695
    %v2684 = vpow.pop %v2683
    %v2685 = vadd.f32 %v2684, 1.0
    %v2686 = vrcp.pop %v2685
    %v2687 = vmul.f32 1.0, %v2686
    %v2688 = vtanh.pop %v2672
    %v2689 = vxor.u32 %v2674, 2147483648
    %v2690 = vmul.f32 %v2689, 1.442695
    %v2691 = vpow.pop %v2690
    %v2692 = vadd.f32 %v2691, 1.0
    %v2693 = vrcp.pop %v2692
    %v2694 = vmul.f32 1.0, %v2693
    %v2695 = vmul.f32 %v2687, %v2530
    %v2696 = vmul.f32 %v2681, %v2688
    %v2697 = vadd.f32 %v2695, %v2696
    %v2698 = vtanh.pop %v2697
    %v2699 = vmul.f32 %v2694, %v2698
    %2700 = vst [vmem:[#allocation3 + $0x18] sm:$0xff] %v2699
    %2701 = vmatprep.subr.mxu0 %v1986
    %2702 = vmatpush1.msra.mxu0 %v1985
    %2703 = vmatprep.subr.mxu0 %v1982
    %2704 = vmatpush1.msra.mxu0 %v1981
    %2705 = vmatprep.subr.mxu0 %v1978
    %2706 = vmatpush1.msra.mxu0 %v1977
    %2707 = vmatprep.subr.mxu0 %v1974
    %2708 = vmatpush1.msra.mxu0 %v1973
    %2709 = vmatprep.subr.mxu0 %v1970
    %2710 = vmatpush1.msra.mxu0 %v1969
    %2711 = vmatprep.subr.mxu0 %v1966
    %2712 = vmatpush1.msra.mxu0 %v1965
    %2713 = vmatprep.subr.mxu0 %v1962
    %2714 = vmatpush1.msra.mxu0 %v1961
    %2715 = vmatprep.subr.mxu0 %v1958
    %2716 = vmatpush1.msra.mxu0 %v1957
    %2717 = vmatprep.subr.mxu0 %v1954
    %2718 = vmatpush1.msra.mxu0 %v1953
    %2719 = vmatprep.subr.mxu0 %v1950
    %2720 = vmatpush1.msra.mxu0 %v1949
    %2721 = vmatprep.subr.mxu0 %v1946
    %2722 = vmatpush1.msra.mxu0 %v1945
    %2723 = vmatprep.subr.mxu0 %v1942
    %2724 = vmatpush1.msra.mxu0 %v1941
    %2725 = vmatprep.subr.mxu0 %v1938
    %2726 = vmatpush1.msra.mxu0 %v1937
    %2727 = vmatprep.subr.mxu0 %v1934
    %2728 = vmatpush1.msra.mxu0 %v1933
    %2729 = vmatprep.subr.mxu0 %v1930
    %2730 = vmatpush1.msra.mxu0 %v1929
    %2731 = vmatprep.subr.mxu0 %v1926
    %2732 = vmatpush1.msra.mxu0 %v1925
    %2733 = vmatprep.subr.mxu0 0.0
    %2734 = vmatpush2.msra.mxu0 0.0
    %2735 = vmatprep.subr.mxu0 0.0
    %2736 = vmatpush2.msra.mxu0 0.0
    %2737 = vmatprep.subr.mxu0 0.0
    %2738 = vmatpush2.msra.mxu0 0.0
    %2739 = vmatprep.subr.mxu0 0.0
    %2740 = vmatpush2.msra.mxu0 0.0
    %2741 = vmatprep.subr.mxu0 0.0
    %2742 = vmatpush2.msra.mxu0 0.0
    %2743 = vmatprep.subr.mxu0 0.0
    %2744 = vmatpush2.msra.mxu0 0.0
    %2745 = vmatprep.subr.mxu0 0.0
    %2746 = vmatpush2.msra.mxu0 0.0
    %2747 = vmatprep.subr.mxu0 0.0
    %2748 = vmatpush2.msra.mxu0 0.0
    %2749 = vmatprep.subr.mxu0 0.0
    %2750 = vmatpush2.msra.mxu0 0.0
    %2751 = vmatprep.subr.mxu0 0.0
    %2752 = vmatpush2.msra.mxu0 0.0
    %2753 = vmatprep.subr.mxu0 0.0
    %2754 = vmatpush2.msra.mxu0 0.0
    %2755 = vmatprep.subr.mxu0 0.0
    %2756 = vmatpush2.msra.mxu0 0.0
    %2757 = vmatprep.subr.mxu0 0.0
    %2758 = vmatpush2.msra.mxu0 0.0
    %2759 = vmatprep.subr.mxu0 0.0
    %2760 = vmatpush2.msra.mxu0 0.0
    %2761 = vmatprep.subr.mxu0 0.0
    %2762 = vmatpush2.msra.mxu0 0.0
    %2763 = vmatprep.subr.mxu0 0.0
    %2764 = vmatpush2.msra.mxu0 0.0
    %2765 = vmatprep.mubr.f32.mxu0 0.0
    %2766 = vmatmul.mubr.f32.gmra.mxu0 %v2699
    %v2767 = vpop.f32.mrf.mxu0
    %v2768 = vadd.f32 %v1994, %v2767
    %v2769 = vpop.f32.mrf.mxu0
    %v2770 = vadd.f32 %v1998, %v2769
    %2771 = vdwg.mxu0
    %2772 = vmatprep.subr.mxu0 %v1988
    %2773 = vmatpush1.msra.mxu0 %v1987
    %2774 = vmatprep.subr.mxu0 %v1984
    %2775 = vmatpush1.msra.mxu0 %v1983
    %2776 = vmatprep.subr.mxu0 %v1980
    %2777 = vmatpush1.msra.mxu0 %v1979
    %2778 = vmatprep.subr.mxu0 %v1976
    %2779 = vmatpush1.msra.mxu0 %v1975
    %2780 = vmatprep.subr.mxu0 %v1972
    %2781 = vmatpush1.msra.mxu0 %v1971
    %2782 = vmatprep.subr.mxu0 %v1968
    %2783 = vmatpush1.msra.mxu0 %v1967
    %2784 = vmatprep.subr.mxu0 %v1964
    %2785 = vmatpush1.msra.mxu0 %v1963
    %2786 = vmatprep.subr.mxu0 %v1960
    %2787 = vmatpush1.msra.mxu0 %v1959
    %2788 = vmatprep.subr.mxu0 %v1956
    %2789 = vmatpush1.msra.mxu0 %v1955
    %2790 = vmatprep.subr.mxu0 %v1952
    %2791 = vmatpush1.msra.mxu0 %v1951
    %2792 = vmatprep.subr.mxu0 %v1948
    %2793 = vmatpush1.msra.mxu0 %v1947
    %2794 = vmatprep.subr.mxu0 %v1944
    %2795 = vmatpush1.msra.mxu0 %v1943
    %2796 = vmatprep.subr.mxu0 %v1940
    %2797 = vmatpush1.msra.mxu0 %v1939
    %2798 = vmatprep.subr.mxu0 %v1936
    %2799 = vmatpush1.msra.mxu0 %v1935
    %2800 = vmatprep.subr.mxu0 %v1932
    %2801 = vmatpush1.msra.mxu0 %v1931
    %2802 = vmatprep.subr.mxu0 %v1928
    %2803 = vmatpush1.msra.mxu0 %v1927
    %2804 = vmatprep.subr.mxu0 0.0
    %2805 = vmatpush2.msra.mxu0 0.0
    %2806 = vmatprep.subr.mxu0 0.0
    %2807 = vmatpush2.msra.mxu0 0.0
    %2808 = vmatprep.subr.mxu0 0.0
    %2809 = vmatpush2.msra.mxu0 0.0
    %2810 = vmatprep.subr.mxu0 0.0
    %2811 = vmatpush2.msra.mxu0 0.0
    %2812 = vmatprep.subr.mxu0 0.0
    %2813 = vmatpush2.msra.mxu0 0.0
    %2814 = vmatprep.subr.mxu0 0.0
    %2815 = vmatpush2.msra.mxu0 0.0
    %2816 = vmatprep.subr.mxu0 0.0
    %2817 = vmatpush2.msra.mxu0 0.0
    %2818 = vmatprep.subr.mxu0 0.0
    %2819 = vmatpush2.msra.mxu0 0.0
    %2820 = vmatprep.subr.mxu0 0.0
    %2821 = vmatpush2.msra.mxu0 0.0
    %2822 = vmatprep.subr.mxu0 0.0
    %2823 = vmatpush2.msra.mxu0 0.0
    %2824 = vmatprep.subr.mxu0 0.0
    %2825 = vmatpush2.msra.mxu0 0.0
    %2826 = vmatprep.subr.mxu0 0.0
    %2827 = vmatpush2.msra.mxu0 0.0
    %2828 = vmatprep.subr.mxu0 0.0
    %2829 = vmatpush2.msra.mxu0 0.0
    %2830 = vmatprep.subr.mxu0 0.0
    %2831 = vmatpush2.msra.mxu0 0.0
    %2832 = vmatprep.subr.mxu0 0.0
    %2833 = vmatpush2.msra.mxu0 0.0
    %2834 = vmatprep.subr.mxu0 0.0
    %2835 = vmatpush2.msra.mxu0 0.0
    %2836 = vmatprep.mubr.f32.mxu0 0.0
    %2837 = vmatmul.mubr.f32.gmra.mxu0 %v2699
    %v2838 = vpop.f32.mrf.mxu0
    %v2839 = vadd.f32 %v2002, %v2838
    %v2840 = vpop.f32.mrf.mxu0
    %v2841 = vadd.f32 %v2006, %v2840
    %2842 = vdwg.mxu0
    %v2843 = vxor.u32 %v2768, 2147483648
    %v2844 = vmul.f32 %v2843, 1.442695
    %v2845 = vpow.pop %v2844
    %v2846 = vadd.f32 %v2845, 1.0
    %v2847 = vrcp.pop %v2846
    %v2848 = vmul.f32 1.0, %v2847
    %v2849 = vxor.u32 %v2770, 2147483648
    %v2850 = vmul.f32 %v2849, 1.442695
    %v2851 = vpow.pop %v2850
    %v2852 = vadd.f32 %v2851, 1.0
    %v2853 = vrcp.pop %v2852
    %v2854 = vmul.f32 1.0, %v2853
    %v2855 = vtanh.pop %v2839
    %v2856 = vxor.u32 %v2841, 2147483648
    %v2857 = vmul.f32 %v2856, 1.442695
    %v2858 = vpow.pop %v2857
    %v2859 = vadd.f32 %v2858, 1.0
    %v2860 = vrcp.pop %v2859
    %v2861 = vmul.f32 1.0, %v2860
    %v2862 = vmul.f32 %v2854, %v2697
    %v2863 = vmul.f32 %v2848, %v2855
    %v2864 = vadd.f32 %v2862, %v2863
    %v2865 = vtanh.pop %v2864
    %v2866 = vmul.f32 %v2861, %v2865
    %2867 = vst [vmem:[#allocation3 + $0x20] sm:$0xff] %v2866
    %2868 = vmatprep.subr.mxu0 %v1986
    %2869 = vmatpush1.msra.mxu0 %v1985
    %2870 = vmatprep.subr.mxu0 %v1982
    %2871 = vmatpush1.msra.mxu0 %v1981
    %2872 = vmatprep.subr.mxu0 %v1978
    %2873 = vmatpush1.msra.mxu0 %v1977
    %2874 = vmatprep.subr.mxu0 %v1974
    %2875 = vmatpush1.msra.mxu0 %v1973
    %2876 = vmatprep.subr.mxu0 %v1970
    %2877 = vmatpush1.msra.mxu0 %v1969
    %2878 = vmatprep.subr.mxu0 %v1966
    %2879 = vmatpush1.msra.mxu0 %v1965
    %2880 = vmatprep.subr.mxu0 %v1962
    %2881 = vmatpush1.msra.mxu0 %v1961
    %2882 = vmatprep.subr.mxu0 %v1958
    %2883 = vmatpush1.msra.mxu0 %v1957
    %2884 = vmatprep.subr.mxu0 %v1954
    %2885 = vmatpush1.msra.mxu0 %v1953
    %2886 = vmatprep.subr.mxu0 %v1950
    %2887 = vmatpush1.msra.mxu0 %v1949
    %2888 = vmatprep.subr.mxu0 %v1946
    %2889 = vmatpush1.msra.mxu0 %v1945
    %2890 = vmatprep.subr.mxu0 %v1942
    %2891 = vmatpush1.msra.mxu0 %v1941
    %2892 = vmatprep.subr.mxu0 %v1938
    %2893 = vmatpush1.msra.mxu0 %v1937
    %2894 = vmatprep.subr.mxu0 %v1934
    %2895 = vmatpush1.msra.mxu0 %v1933
    %2896 = vmatprep.subr.mxu0 %v1930
    %2897 = vmatpush1.msra.mxu0 %v1929
    %2898 = vmatprep.subr.mxu0 %v1926
    %2899 = vmatpush1.msra.mxu0 %v1925
    %2900 = vmatprep.subr.mxu0 0.0
    %2901 = vmatpush2.msra.mxu0 0.0
    %2902 = vmatprep.subr.mxu0 0.0
    %2903 = vmatpush2.msra.mxu0 0.0
    %2904 = vmatprep.subr.mxu0 0.0
    %2905 = vmatpush2.msra.mxu0 0.0
    %2906 = vmatprep.subr.mxu0 0.0
    %2907 = vmatpush2.msra.mxu0 0.0
    %2908 = vmatprep.subr.mxu0 0.0
    %2909 = vmatpush2.msra.mxu0 0.0
    %2910 = vmatprep.subr.mxu0 0.0
    %2911 = vmatpush2.msra.mxu0 0.0
    %2912 = vmatprep.subr.mxu0 0.0
    %2913 = vmatpush2.msra.mxu0 0.0
    %2914 = vmatprep.subr.mxu0 0.0
    %2915 = vmatpush2.msra.mxu0 0.0
    %2916 = vmatprep.subr.mxu0 0.0
    %2917 = vmatpush2.msra.mxu0 0.0
    %2918 = vmatprep.subr.mxu0 0.0
    %2919 = vmatpush2.msra.mxu0 0.0
    %2920 = vmatprep.subr.mxu0 0.0
    %2921 = vmatpush2.msra.mxu0 0.0
    %2922 = vmatprep.subr.mxu0 0.0
    %2923 = vmatpush2.msra.mxu0 0.0
    %2924 = vmatprep.subr.mxu0 0.0
    %2925 = vmatpush2.msra.mxu0 0.0
    %2926 = vmatprep.subr.mxu0 0.0
    %2927 = vmatpush2.msra.mxu0 0.0
    %2928 = vmatprep.subr.mxu0 0.0
    %2929 = vmatpush2.msra.mxu0 0.0
    %2930 = vmatprep.subr.mxu0 0.0
    %2931 = vmatpush2.msra.mxu0 0.0
    %2932 = vmatprep.mubr.f32.mxu0 0.0
    %2933 = vmatmul.mubr.f32.gmra.mxu0 %v2866
    %v2934 = vpop.f32.mrf.mxu0
    %v2935 = vadd.f32 %v1994, %v2934
    %v2936 = vpop.f32.mrf.mxu0
    %v2937 = vadd.f32 %v1998, %v2936
    %2938 = vdwg.mxu0
    %2939 = vmatprep.subr.mxu0 %v1988
    %2940 = vmatpush1.msra.mxu0 %v1987
    %2941 = vmatprep.subr.mxu0 %v1984
    %2942 = vmatpush1.msra.mxu0 %v1983
    %2943 = vmatprep.subr.mxu0 %v1980
    %2944 = vmatpush1.msra.mxu0 %v1979
    %2945 = vmatprep.subr.mxu0 %v1976
    %2946 = vmatpush1.msra.mxu0 %v1975
    %2947 = vmatprep.subr.mxu0 %v1972
    %2948 = vmatpush1.msra.mxu0 %v1971
    %2949 = vmatprep.subr.mxu0 %v1968
    %2950 = vmatpush1.msra.mxu0 %v1967
    %2951 = vmatprep.subr.mxu0 %v1964
    %2952 = vmatpush1.msra.mxu0 %v1963
    %2953 = vmatprep.subr.mxu0 %v1960
    %2954 = vmatpush1.msra.mxu0 %v1959
    %2955 = vmatprep.subr.mxu0 %v1956
    %2956 = vmatpush1.msra.mxu0 %v1955
    %2957 = vmatprep.subr.mxu0 %v1952
    %2958 = vmatpush1.msra.mxu0 %v1951
    %2959 = vmatprep.subr.mxu0 %v1948
    %2960 = vmatpush1.msra.mxu0 %v1947
    %2961 = vmatprep.subr.mxu0 %v1944
    %2962 = vmatpush1.msra.mxu0 %v1943
    %2963 = vmatprep.subr.mxu0 %v1940
    %2964 = vmatpush1.msra.mxu0 %v1939
    %2965 = vmatprep.subr.mxu0 %v1936
    %2966 = vmatpush1.msra.mxu0 %v1935
    %2967 = vmatprep.subr.mxu0 %v1932
    %2968 = vmatpush1.msra.mxu0 %v1931
    %2969 = vmatprep.subr.mxu0 %v1928
    %2970 = vmatpush1.msra.mxu0 %v1927
    %2971 = vmatprep.subr.mxu0 0.0
    %2972 = vmatpush2.msra.mxu0 0.0
    %2973 = vmatprep.subr.mxu0 0.0
    %2974 = vmatpush2.msra.mxu0 0.0
    %2975 = vmatprep.subr.mxu0 0.0
    %2976 = vmatpush2.msra.mxu0 0.0
    %2977 = vmatprep.subr.mxu0 0.0
    %2978 = vmatpush2.msra.mxu0 0.0
    %2979 = vmatprep.subr.mxu0 0.0
    %2980 = vmatpush2.msra.mxu0 0.0
    %2981 = vmatprep.subr.mxu0 0.0
    %2982 = vmatpush2.msra.mxu0 0.0
    %2983 = vmatprep.subr.mxu0 0.0
    %2984 = vmatpush2.msra.mxu0 0.0
    %2985 = vmatprep.subr.mxu0 0.0
    %2986 = vmatpush2.msra.mxu0 0.0
    %2987 = vmatprep.subr.mxu0 0.0
    %2988 = vmatpush2.msra.mxu0 0.0
    %2989 = vmatprep.subr.mxu0 0.0
    %2990 = vmatpush2.msra.mxu0 0.0
    %2991 = vmatprep.subr.mxu0 0.0
    %2992 = vmatpush2.msra.mxu0 0.0
    %2993 = vmatprep.subr.mxu0 0.0
    %2994 = vmatpush2.msra.mxu0 0.0
    %2995 = vmatprep.subr.mxu0 0.0
    %2996 = vmatpush2.msra.mxu0 0.0
    %2997 = vmatprep.subr.mxu0 0.0
    %2998 = vmatpush2.msra.mxu0 0.0
    %2999 = vmatprep.subr.mxu0 0.0
    %3000 = vmatpush2.msra.mxu0 0.0
    %3001 = vmatprep.subr.mxu0 0.0
    %3002 = vmatpush2.msra.mxu0 0.0
    %3003 = vmatprep.mubr.f32.mxu0 0.0
    %3004 = vmatmul.mubr.f32.gmra.mxu0 %v2866
    %v3005 = vpop.f32.mrf.mxu0
    %v3006 = vadd.f32 %v2002, %v3005
    %v3007 = vpop.f32.mrf.mxu0
    %v3008 = vadd.f32 %v2006, %v3007
    %3009 = vdwg.mxu0
    %v3010 = vxor.u32 %v2935, 2147483648
    %v3011 = vmul.f32 %v3010, 1.442695
    %v3012 = vpow.pop %v3011
    %v3013 = vadd.f32 %v3012, 1.0
    %v3014 = vrcp.pop %v3013
    %v3015 = vmul.f32 1.0, %v3014
    %v3016 = vxor.u32 %v2937, 2147483648
    %v3017 = vmul.f32 %v3016, 1.442695
    %v3018 = vpow.pop %v3017
    %v3019 = vadd.f32 %v3018, 1.0
    %v3020 = vrcp.pop %v3019
    %v3021 = vmul.f32 1.0, %v3020
    %v3022 = vtanh.pop %v3006
    %v3023 = vxor.u32 %v3008, 2147483648
    %v3024 = vmul.f32 %v3023, 1.442695
    %v3025 = vpow.pop %v3024
    %v3026 = vadd.f32 %v3025, 1.0
    %v3027 = vrcp.pop %v3026
    %v3028 = vmul.f32 1.0, %v3027
    %v3029 = vmul.f32 %v3021, %v2864
    %v3030 = vmul.f32 %v3015, %v3022
    %v3031 = vadd.f32 %v3029, %v3030
    %v3032 = vtanh.pop %v3031
    %v3033 = vmul.f32 %v3028, %v3032
    %3034 = vst [vmem:[#allocation3 + $0x28] sm:$0xff] %v3033
    %3035 = vmatprep.subr.mxu0 %v1986
    %3036 = vmatpush1.msra.mxu0 %v1985
    %3037 = vmatprep.subr.mxu0 %v1982
    %3038 = vmatpush1.msra.mxu0 %v1981
    %3039 = vmatprep.subr.mxu0 %v1978
    %3040 = vmatpush1.msra.mxu0 %v1977
    %3041 = vmatprep.subr.mxu0 %v1974
    %3042 = vmatpush1.msra.mxu0 %v1973
    %3043 = vmatprep.subr.mxu0 %v1970
    %3044 = vmatpush1.msra.mxu0 %v1969
    %3045 = vmatprep.subr.mxu0 %v1966
    %3046 = vmatpush1.msra.mxu0 %v1965
    %3047 = vmatprep.subr.mxu0 %v1962
    %3048 = vmatpush1.msra.mxu0 %v1961
    %3049 = vmatprep.subr.mxu0 %v1958
    %3050 = vmatpush1.msra.mxu0 %v1957
    %3051 = vmatprep.subr.mxu0 %v1954
    %3052 = vmatpush1.msra.mxu0 %v1953
    %3053 = vmatprep.subr.mxu0 %v1950
    %3054 = vmatpush1.msra.mxu0 %v1949
    %3055 = vmatprep.subr.mxu0 %v1946
    %3056 = vmatpush1.msra.mxu0 %v1945
    %3057 = vmatprep.subr.mxu0 %v1942
    %3058 = vmatpush1.msra.mxu0 %v1941
    %3059 = vmatprep.subr.mxu0 %v1938
    %3060 = vmatpush1.msra.mxu0 %v1937
    %3061 = vmatprep.subr.mxu0 %v1934
    %3062 = vmatpush1.msra.mxu0 %v1933
    %3063 = vmatprep.subr.mxu0 %v1930
    %3064 = vmatpush1.msra.mxu0 %v1929
    %3065 = vmatprep.subr.mxu0 %v1926
    %3066 = vmatpush1.msra.mxu0 %v1925
    %3067 = vmatprep.subr.mxu0 0.0
    %3068 = vmatpush2.msra.mxu0 0.0
    %3069 = vmatprep.subr.mxu0 0.0
    %3070 = vmatpush2.msra.mxu0 0.0
    %3071 = vmatprep.subr.mxu0 0.0
    %3072 = vmatpush2.msra.mxu0 0.0
    %3073 = vmatprep.subr.mxu0 0.0
    %3074 = vmatpush2.msra.mxu0 0.0
    %3075 = vmatprep.subr.mxu0 0.0
    %3076 = vmatpush2.msra.mxu0 0.0
    %3077 = vmatprep.subr.mxu0 0.0
    %3078 = vmatpush2.msra.mxu0 0.0
    %3079 = vmatprep.subr.mxu0 0.0
    %3080 = vmatpush2.msra.mxu0 0.0
    %3081 = vmatprep.subr.mxu0 0.0
    %3082 = vmatpush2.msra.mxu0 0.0
    %3083 = vmatprep.subr.mxu0 0.0
    %3084 = vmatpush2.msra.mxu0 0.0
    %3085 = vmatprep.subr.mxu0 0.0
    %3086 = vmatpush2.msra.mxu0 0.0
    %3087 = vmatprep.subr.mxu0 0.0
    %3088 = vmatpush2.msra.mxu0 0.0
    %3089 = vmatprep.subr.mxu0 0.0
    %3090 = vmatpush2.msra.mxu0 0.0
    %3091 = vmatprep.subr.mxu0 0.0
    %3092 = vmatpush2.msra.mxu0 0.0
    %3093 = vmatprep.subr.mxu0 0.0
    %3094 = vmatpush2.msra.mxu0 0.0
    %3095 = vmatprep.subr.mxu0 0.0
    %3096 = vmatpush2.msra.mxu0 0.0
    %3097 = vmatprep.subr.mxu0 0.0
    %3098 = vmatpush2.msra.mxu0 0.0
    %3099 = vmatprep.mubr.f32.mxu0 0.0
    %3100 = vmatmul.mubr.f32.gmra.mxu0 %v3033
    %v3101 = vpop.f32.mrf.mxu0
    %v3102 = vadd.f32 %v1994, %v3101
    %v3103 = vpop.f32.mrf.mxu0
    %v3104 = vadd.f32 %v1998, %v3103
    %3105 = vdwg.mxu0
    %3106 = vmatprep.subr.mxu0 %v1988
    %3107 = vmatpush1.msra.mxu0 %v1987
    %3108 = vmatprep.subr.mxu0 %v1984
    %3109 = vmatpush1.msra.mxu0 %v1983
    %3110 = vmatprep.subr.mxu0 %v1980
    %3111 = vmatpush1.msra.mxu0 %v1979
    %3112 = vmatprep.subr.mxu0 %v1976
    %3113 = vmatpush1.msra.mxu0 %v1975
    %3114 = vmatprep.subr.mxu0 %v1972
    %3115 = vmatpush1.msra.mxu0 %v1971
    %3116 = vmatprep.subr.mxu0 %v1968
    %3117 = vmatpush1.msra.mxu0 %v1967
    %3118 = vmatprep.subr.mxu0 %v1964
    %3119 = vmatpush1.msra.mxu0 %v1963
    %3120 = vmatprep.subr.mxu0 %v1960
    %3121 = vmatpush1.msra.mxu0 %v1959
    %3122 = vmatprep.subr.mxu0 %v1956
    %3123 = vmatpush1.msra.mxu0 %v1955
    %3124 = vmatprep.subr.mxu0 %v1952
    %3125 = vmatpush1.msra.mxu0 %v1951
    %3126 = vmatprep.subr.mxu0 %v1948
    %3127 = vmatpush1.msra.mxu0 %v1947
    %3128 = vmatprep.subr.mxu0 %v1944
    %3129 = vmatpush1.msra.mxu0 %v1943
    %3130 = vmatprep.subr.mxu0 %v1940
    %3131 = vmatpush1.msra.mxu0 %v1939
    %3132 = vmatprep.subr.mxu0 %v1936
    %3133 = vmatpush1.msra.mxu0 %v1935
    %3134 = vmatprep.subr.mxu0 %v1932
    %3135 = vmatpush1.msra.mxu0 %v1931
    %3136 = vmatprep.subr.mxu0 %v1928
    %3137 = vmatpush1.msra.mxu0 %v1927
    %3138 = vmatprep.subr.mxu0 0.0
    %3139 = vmatpush2.msra.mxu0 0.0
    %3140 = vmatprep.subr.mxu0 0.0
    %3141 = vmatpush2.msra.mxu0 0.0
    %3142 = vmatprep.subr.mxu0 0.0
    %3143 = vmatpush2.msra.mxu0 0.0
    %3144 = vmatprep.subr.mxu0 0.0
    %3145 = vmatpush2.msra.mxu0 0.0
    %3146 = vmatprep.subr.mxu0 0.0
    %3147 = vmatpush2.msra.mxu0 0.0
    %3148 = vmatprep.subr.mxu0 0.0
    %3149 = vmatpush2.msra.mxu0 0.0
    %3150 = vmatprep.subr.mxu0 0.0
    %3151 = vmatpush2.msra.mxu0 0.0
    %3152 = vmatprep.subr.mxu0 0.0
    %3153 = vmatpush2.msra.mxu0 0.0
    %3154 = vmatprep.subr.mxu0 0.0
    %3155 = vmatpush2.msra.mxu0 0.0
    %3156 = vmatprep.subr.mxu0 0.0
    %3157 = vmatpush2.msra.mxu0 0.0
    %3158 = vmatprep.subr.mxu0 0.0
    %3159 = vmatpush2.msra.mxu0 0.0
    %3160 = vmatprep.subr.mxu0 0.0
    %3161 = vmatpush2.msra.mxu0 0.0
    %3162 = vmatprep.subr.mxu0 0.0
    %3163 = vmatpush2.msra.mxu0 0.0
    %3164 = vmatprep.subr.mxu0 0.0
    %3165 = vmatpush2.msra.mxu0 0.0
    %3166 = vmatprep.subr.mxu0 0.0
    %3167 = vmatpush2.msra.mxu0 0.0
    %3168 = vmatprep.subr.mxu0 0.0
    %3169 = vmatpush2.msra.mxu0 0.0
    %3170 = vmatprep.mubr.f32.mxu0 0.0
    %3171 = vmatmul.mubr.f32.gmra.mxu0 %v3033
    %v3172 = vpop.f32.mrf.mxu0
    %v3173 = vadd.f32 %v2002, %v3172
    %v3174 = vpop.f32.mrf.mxu0
    %v3175 = vadd.f32 %v2006, %v3174
    %3176 = vdwg.mxu0
    %v3177 = vxor.u32 %v3102, 2147483648
    %v3178 = vmul.f32 %v3177, 1.442695
    %v3179 = vpow.pop %v3178
    %v3180 = vadd.f32 %v3179, 1.0
    %v3181 = vrcp.pop %v3180
    %v3182 = vmul.f32 1.0, %v3181
    %v3183 = vxor.u32 %v3104, 2147483648
    %v3184 = vmul.f32 %v3183, 1.442695
    %v3185 = vpow.pop %v3184
    %v3186 = vadd.f32 %v3185, 1.0
    %v3187 = vrcp.pop %v3186
    %v3188 = vmul.f32 1.0, %v3187
    %v3189 = vtanh.pop %v3173
    %v3190 = vxor.u32 %v3175, 2147483648
    %v3191 = vmul.f32 %v3190, 1.442695
    %v3192 = vpow.pop %v3191
    %v3193 = vadd.f32 %v3192, 1.0
    %v3194 = vrcp.pop %v3193
    %v3195 = vmul.f32 1.0, %v3194
    %v3196 = vmul.f32 %v3188, %v3031
    %v3197 = vmul.f32 %v3182, %v3189
    %v3198 = vadd.f32 %v3196, %v3197
    %v3199 = vtanh.pop %v3198
    %v3200 = vmul.f32 %v3195, %v3199
    %3201 = vst [vmem:[#allocation3 + $0x30] sm:$0xff] %v3200
    %3202 = vmatprep.subr.mxu0 %v1986
    %3203 = vmatpush1.msra.mxu0 %v1985
    %3204 = vmatprep.subr.mxu0 %v1982
    %3205 = vmatpush1.msra.mxu0 %v1981
    %3206 = vmatprep.subr.mxu0 %v1978
    %3207 = vmatpush1.msra.mxu0 %v1977
    %3208 = vmatprep.subr.mxu0 %v1974
    %3209 = vmatpush1.msra.mxu0 %v1973
    %3210 = vmatprep.subr.mxu0 %v1970
    %3211 = vmatpush1.msra.mxu0 %v1969
    %3212 = vmatprep.subr.mxu0 %v1966
    %3213 = vmatpush1.msra.mxu0 %v1965
    %3214 = vmatprep.subr.mxu0 %v1962
    %3215 = vmatpush1.msra.mxu0 %v1961
    %3216 = vmatprep.subr.mxu0 %v1958
    %3217 = vmatpush1.msra.mxu0 %v1957
    %3218 = vmatprep.subr.mxu0 %v1954
    %3219 = vmatpush1.msra.mxu0 %v1953
    %3220 = vmatprep.subr.mxu0 %v1950
    %3221 = vmatpush1.msra.mxu0 %v1949
    %3222 = vmatprep.subr.mxu0 %v1946
    %3223 = vmatpush1.msra.mxu0 %v1945
    %3224 = vmatprep.subr.mxu0 %v1942
    %3225 = vmatpush1.msra.mxu0 %v1941
    %3226 = vmatprep.subr.mxu0 %v1938
    %3227 = vmatpush1.msra.mxu0 %v1937
    %3228 = vmatprep.subr.mxu0 %v1934
    %3229 = vmatpush1.msra.mxu0 %v1933
    %3230 = vmatprep.subr.mxu0 %v1930
    %3231 = vmatpush1.msra.mxu0 %v1929
    %3232 = vmatprep.subr.mxu0 %v1926
    %3233 = vmatpush1.msra.mxu0 %v1925
    %3234 = vmatprep.subr.mxu0 0.0
    %3235 = vmatpush2.msra.mxu0 0.0
    %3236 = vmatprep.subr.mxu0 0.0
    %3237 = vmatpush2.msra.mxu0 0.0
    %3238 = vmatprep.subr.mxu0 0.0
    %3239 = vmatpush2.msra.mxu0 0.0
    %3240 = vmatprep.subr.mxu0 0.0
    %3241 = vmatpush2.msra.mxu0 0.0
    %3242 = vmatprep.subr.mxu0 0.0
    %3243 = vmatpush2.msra.mxu0 0.0
    %3244 = vmatprep.subr.mxu0 0.0
    %3245 = vmatpush2.msra.mxu0 0.0
    %3246 = vmatprep.subr.mxu0 0.0
    %3247 = vmatpush2.msra.mxu0 0.0
    %3248 = vmatprep.subr.mxu0 0.0
    %3249 = vmatpush2.msra.mxu0 0.0
    %3250 = vmatprep.subr.mxu0 0.0
    %3251 = vmatpush2.msra.mxu0 0.0
    %3252 = vmatprep.subr.mxu0 0.0
    %3253 = vmatpush2.msra.mxu0 0.0
    %3254 = vmatprep.subr.mxu0 0.0
    %3255 = vmatpush2.msra.mxu0 0.0
    %3256 = vmatprep.subr.mxu0 0.0
    %3257 = vmatpush2.msra.mxu0 0.0
    %3258 = vmatprep.subr.mxu0 0.0
    %3259 = vmatpush2.msra.mxu0 0.0
    %3260 = vmatprep.subr.mxu0 0.0
    %3261 = vmatpush2.msra.mxu0 0.0
    %3262 = vmatprep.subr.mxu0 0.0
    %3263 = vmatpush2.msra.mxu0 0.0
    %3264 = vmatprep.subr.mxu0 0.0
    %3265 = vmatpush2.msra.mxu0 0.0
    %3266 = vmatprep.mubr.f32.mxu0 0.0
    %3267 = vmatmul.mubr.f32.gmra.mxu0 %v3200
    %v3268 = vpop.f32.mrf.mxu0
    %v3269 = vadd.f32 %v1994, %v3268
    %v3270 = vpop.f32.mrf.mxu0
    %v3271 = vadd.f32 %v1998, %v3270
    %3272 = vdwg.mxu0
    %3273 = vmatprep.subr.mxu0 %v1988
    %3274 = vmatpush1.msra.mxu0 %v1987
    %3275 = vmatprep.subr.mxu0 %v1984
    %3276 = vmatpush1.msra.mxu0 %v1983
    %3277 = vmatprep.subr.mxu0 %v1980
    %3278 = vmatpush1.msra.mxu0 %v1979
    %3279 = vmatprep.subr.mxu0 %v1976
    %3280 = vmatpush1.msra.mxu0 %v1975
    %3281 = vmatprep.subr.mxu0 %v1972
    %3282 = vmatpush1.msra.mxu0 %v1971
    %3283 = vmatprep.subr.mxu0 %v1968
    %3284 = vmatpush1.msra.mxu0 %v1967
    %3285 = vmatprep.subr.mxu0 %v1964
    %3286 = vmatpush1.msra.mxu0 %v1963
    %3287 = vmatprep.subr.mxu0 %v1960
    %3288 = vmatpush1.msra.mxu0 %v1959
    %3289 = vmatprep.subr.mxu0 %v1956
    %3290 = vmatpush1.msra.mxu0 %v1955
    %3291 = vmatprep.subr.mxu0 %v1952
    %3292 = vmatpush1.msra.mxu0 %v1951
    %3293 = vmatprep.subr.mxu0 %v1948
    %3294 = vmatpush1.msra.mxu0 %v1947
    %3295 = vmatprep.subr.mxu0 %v1944
    %3296 = vmatpush1.msra.mxu0 %v1943
    %3297 = vmatprep.subr.mxu0 %v1940
    %3298 = vmatpush1.msra.mxu0 %v1939
    %3299 = vmatprep.subr.mxu0 %v1936
    %3300 = vmatpush1.msra.mxu0 %v1935
    %3301 = vmatprep.subr.mxu0 %v1932
    %3302 = vmatpush1.msra.mxu0 %v1931
    %3303 = vmatprep.subr.mxu0 %v1928
    %3304 = vmatpush1.msra.mxu0 %v1927
    %3305 = vmatprep.subr.mxu0 0.0
    %3306 = vmatpush2.msra.mxu0 0.0
    %3307 = vmatprep.subr.mxu0 0.0
    %3308 = vmatpush2.msra.mxu0 0.0
    %3309 = vmatprep.subr.mxu0 0.0
    %3310 = vmatpush2.msra.mxu0 0.0
    %3311 = vmatprep.subr.mxu0 0.0
    %3312 = vmatpush2.msra.mxu0 0.0
    %3313 = vmatprep.subr.mxu0 0.0
    %3314 = vmatpush2.msra.mxu0 0.0
    %3315 = vmatprep.subr.mxu0 0.0
    %3316 = vmatpush2.msra.mxu0 0.0
    %3317 = vmatprep.subr.mxu0 0.0
    %3318 = vmatpush2.msra.mxu0 0.0
    %3319 = vmatprep.subr.mxu0 0.0
    %3320 = vmatpush2.msra.mxu0 0.0
    %3321 = vmatprep.subr.mxu0 0.0
    %3322 = vmatpush2.msra.mxu0 0.0
    %3323 = vmatprep.subr.mxu0 0.0
    %3324 = vmatpush2.msra.mxu0 0.0
    %3325 = vmatprep.subr.mxu0 0.0
    %3326 = vmatpush2.msra.mxu0 0.0
    %3327 = vmatprep.subr.mxu0 0.0
    %3328 = vmatpush2.msra.mxu0 0.0
    %3329 = vmatprep.subr.mxu0 0.0
    %3330 = vmatpush2.msra.mxu0 0.0
    %3331 = vmatprep.subr.mxu0 0.0
    %3332 = vmatpush2.msra.mxu0 0.0
    %3333 = vmatprep.subr.mxu0 0.0
    %3334 = vmatpush2.msra.mxu0 0.0
    %3335 = vmatprep.subr.mxu0 0.0
    %3336 = vmatpush2.msra.mxu0 0.0
    %3337 = vmatprep.mubr.f32.mxu0 0.0
    %3338 = vmatmul.mubr.f32.gmra.mxu0 %v3200
    %v3339 = vpop.f32.mrf.mxu0
    %v3340 = vadd.f32 %v2002, %v3339
    %v3341 = vpop.f32.mrf.mxu0
    %v3342 = vadd.f32 %v2006, %v3341
    %3343 = vdwg.mxu0
    %v3344 = vxor.u32 %v3269, 2147483648
    %v3345 = vmul.f32 %v3344, 1.442695
    %v3346 = vpow.pop %v3345
    %v3347 = vadd.f32 %v3346, 1.0
    %v3348 = vrcp.pop %v3347
    %v3349 = vmul.f32 1.0, %v3348
    %v3350 = vxor.u32 %v3271, 2147483648
    %v3351 = vmul.f32 %v3350, 1.442695
    %v3352 = vpow.pop %v3351
    %v3353 = vadd.f32 %v3352, 1.0
    %v3354 = vrcp.pop %v3353
    %v3355 = vmul.f32 1.0, %v3354
    %v3356 = vtanh.pop %v3340
    %v3357 = vxor.u32 %v3342, 2147483648
    %v3358 = vmul.f32 %v3357, 1.442695
    %v3359 = vpow.pop %v3358
    %v3360 = vadd.f32 %v3359, 1.0
    %v3361 = vrcp.pop %v3360
    %v3362 = vmul.f32 1.0, %v3361
    %v3363 = vmul.f32 %v3355, %v3198
    %v3364 = vmul.f32 %v3349, %v3356
    %v3365 = vadd.f32 %v3363, %v3364
    %v3366 = vtanh.pop %v3365
    %v3367 = vmul.f32 %v3362, %v3366
    %3368 = vst [vmem:[#allocation3 + $0x38] sm:$0xff] %v3367
    %v3369 = vld [vmem:[#allocation3] sm:$0xff]
    %v3370 = vld [vmem:[#allocation3 + $0x8] sm:$0xff]
    %v3371 = vld [vmem:[#allocation3 + $0x10] sm:$0xff]
    %v3372 = vld [vmem:[#allocation3 + $0x18] sm:$0xff]
    %v3373 = vld [vmem:[#allocation3 + $0x20] sm:$0xff]
    %v3374 = vld [vmem:[#allocation3 + $0x28] sm:$0xff]
    %v3375 = vld [vmem:[#allocation3 + $0x30] sm:$0xff]
    %v3376 = vld [vmem:[#allocation3 + $0x38] sm:$0xff]
    %v3377 = vld [vmem:[%s8] sm:$0xff]
    %v3378 = vld [vmem:[%s8 + $0x8] sm:$0xff]
    %v3379 = vld [vmem:[%s8 + $0x10] sm:$0xff]
    %v3380 = vld [vmem:[%s8 + $0x18] sm:$0xff]
    %v3381 = vld [vmem:[%s8 + $0x20] sm:$0xff]
    %v3382 = vld [vmem:[%s8 + $0x28] sm:$0xff]
    %v3383 = vld [vmem:[%s8 + $0x30] sm:$0xff]
    %v3384 = vld [vmem:[%s8 + $0x38] sm:$0xff]
    %v3385 = vld [vmem:[%s8 + $0x40] sm:$0xff]
    %v3386 = vld [vmem:[%s8 + $0x48] sm:$0xff]
    %v3387 = vld [vmem:[%s8 + $0x50] sm:$0xff]
    %v3388 = vld [vmem:[%s8 + $0x58] sm:$0xff]
    %v3389 = vld [vmem:[%s8 + $0x60] sm:$0xff]
    %v3390 = vld [vmem:[%s8 + $0x68] sm:$0xff]
    %v3391 = vld [vmem:[%s8 + $0x70] sm:$0xff]
    %v3392 = vld [vmem:[%s8 + $0x78] sm:$0xff]
    %v3393 = vld [vmem:[%s9] sm:$0x1]
    %v3395 = vlaneseq
    %v3396 = vshrl.u32 %v3395, 7
    %v3397 = vsub.s32 0, %v3396
    %v3398 = vrot.slane %v3393, %v3397
    %3400 = vmatprep.subr.mxu0 0.0
    %3401 = vmatpush1.msra.mxu0 %v3392
    %3402 = vmatprep.subr.mxu0 0.0
    %3403 = vmatpush1.msra.mxu0 %v3391
    %3404 = vmatprep.subr.mxu0 0.0
    %3405 = vmatpush1.msra.mxu0 %v3390
    %3406 = vmatprep.subr.mxu0 0.0
    %3407 = vmatpush1.msra.mxu0 %v3389
    %3408 = vmatprep.subr.mxu0 0.0
    %3409 = vmatpush1.msra.mxu0 %v3388
    %3410 = vmatprep.subr.mxu0 0.0
    %3411 = vmatpush1.msra.mxu0 %v3387
    %3412 = vmatprep.subr.mxu0 0.0
    %3413 = vmatpush1.msra.mxu0 %v3386
    %3414 = vmatprep.subr.mxu0 0.0
    %3415 = vmatpush1.msra.mxu0 %v3385
    %3416 = vmatprep.subr.mxu0 0.0
    %3417 = vmatpush1.msra.mxu0 %v3384
    %3418 = vmatprep.subr.mxu0 0.0
    %3419 = vmatpush1.msra.mxu0 %v3383
    %3420 = vmatprep.subr.mxu0 0.0
    %3421 = vmatpush1.msra.mxu0 %v3382
    %3422 = vmatprep.subr.mxu0 0.0
    %3423 = vmatpush1.msra.mxu0 %v3381
    %3424 = vmatprep.subr.mxu0 0.0
    %3425 = vmatpush1.msra.mxu0 %v3380
    %3426 = vmatprep.subr.mxu0 0.0
    %3427 = vmatpush1.msra.mxu0 %v3379
    %3428 = vmatprep.subr.mxu0 0.0
    %3429 = vmatpush1.msra.mxu0 %v3378
    %3430 = vmatprep.subr.mxu0 0.0
    %3431 = vmatpush1.msra.mxu0 %v3377
    %3432 = vmatprep.subr.mxu0 0.0
    %3433 = vmatpush2.msra.mxu0 0.0
    %3434 = vmatprep.subr.mxu0 0.0
    %3435 = vmatpush2.msra.mxu0 0.0
    %3436 = vmatprep.subr.mxu0 0.0
    %3437 = vmatpush2.msra.mxu0 0.0
    %3438 = vmatprep.subr.mxu0 0.0
    %3439 = vmatpush2.msra.mxu0 0.0
    %3440 = vmatprep.subr.mxu0 0.0
    %3441 = vmatpush2.msra.mxu0 0.0
    %3442 = vmatprep.subr.mxu0 0.0
    %3443 = vmatpush2.msra.mxu0 0.0
    %3444 = vmatprep.subr.mxu0 0.0
    %3445 = vmatpush2.msra.mxu0 0.0
    %3446 = vmatprep.subr.mxu0 0.0
    %3447 = vmatpush2.msra.mxu0 0.0
    %3448 = vmatprep.subr.mxu0 0.0
    %3449 = vmatpush2.msra.mxu0 0.0
    %3450 = vmatprep.subr.mxu0 0.0
    %3451 = vmatpush2.msra.mxu0 0.0
    %3452 = vmatprep.subr.mxu0 0.0
    %3453 = vmatpush2.msra.mxu0 0.0
    %3454 = vmatprep.subr.mxu0 0.0
    %3455 = vmatpush2.msra.mxu0 0.0
    %3456 = vmatprep.subr.mxu0 0.0
    %3457 = vmatpush2.msra.mxu0 0.0
    %3458 = vmatprep.subr.mxu0 0.0
    %3459 = vmatpush2.msra.mxu0 0.0
    %3460 = vmatprep.subr.mxu0 0.0
    %3461 = vmatpush2.msra.mxu0 0.0
    %3462 = vmatprep.subr.mxu0 0.0
    %3463 = vmatpush2.msra.mxu0 0.0
    %3464 = vmatprep.mubr.f32.mxu0 0.0
    %3465 = vmatmul.mubr.f32.gmra.mxu0 %v3369
    %v3466 = vpop.f32.mrf.mxu0
    %v3467 = vadd.f32 %v3398, %v3466
    %v3468 = vpop.f32.mrf.mxu0
    %3469 = vmatprep.mubr.f32.mxu0 0.0
    %3470 = vmatmul.mubr.f32.gmra.mxu0 %v3370
    %v3471 = vpop.f32.mrf.mxu0
    %v3472 = vadd.f32 %v3398, %v3471
    %v3473 = vpop.f32.mrf.mxu0
    %3474 = vmatprep.mubr.f32.mxu0 0.0
    %3475 = vmatmul.mubr.f32.gmra.mxu0 %v3371
    %v3476 = vpop.f32.mrf.mxu0
    %v3477 = vadd.f32 %v3398, %v3476
    %v3478 = vpop.f32.mrf.mxu0
    %3479 = vmatprep.mubr.f32.mxu0 0.0
    %3480 = vmatmul.mubr.f32.gmra.mxu0 %v3372
    %v3481 = vpop.f32.mrf.mxu0
    %v3482 = vadd.f32 %v3398, %v3481
    %v3483 = vpop.f32.mrf.mxu0
    %3484 = vmatprep.mubr.f32.mxu0 0.0
    %3485 = vmatmul.mubr.f32.gmra.mxu0 %v3373
    %v3486 = vpop.f32.mrf.mxu0
    %v3487 = vadd.f32 %v3398, %v3486
    %v3488 = vpop.f32.mrf.mxu0
    %3489 = vmatprep.mubr.f32.mxu0 0.0
    %3490 = vmatmul.mubr.f32.gmra.mxu0 %v3374
    %v3491 = vpop.f32.mrf.mxu0
    %v3492 = vadd.f32 %v3398, %v3491
    %v3493 = vpop.f32.mrf.mxu0
    %3494 = vmatprep.mubr.f32.mxu0 0.0
    %3495 = vmatmul.mubr.f32.gmra.mxu0 %v3375
    %v3496 = vpop.f32.mrf.mxu0
    %v3497 = vadd.f32 %v3398, %v3496
    %v3498 = vpop.f32.mrf.mxu0
    %3499 = vmatprep.mubr.f32.mxu0 0.0
    %3500 = vmatmul.mubr.f32.gmra.mxu0 %v3376
    %v3501 = vpop.f32.mrf.mxu0
    %v3502 = vadd.f32 %v3398, %v3501
    %v3503 = vpop.f32.mrf.mxu0
    %3504 = vdwg.mxu0
    %v3505 = vtanh.pop %v3467
    %v3506 = vtanh.pop %v3472
    %v3507 = vtanh.pop %v3477
    %v3508 = vtanh.pop %v3482
    %v3509 = vtanh.pop %v3487
    %v3510 = vtanh.pop %v3492
    %v3511 = vtanh.pop %v3497
    %v3512 = vtanh.pop %v3502
    %3513 = vst.msk [vmem:[%s10] sm:$0xff] %vm122, %v3505
    %3514 = vst.msk [vmem:[%s10 + $0x8] sm:$0xff] %vm122, %v3506
    %3515 = vst.msk [vmem:[%s10 + $0x10] sm:$0xff] %vm122, %v3507
    %3516 = vst.msk [vmem:[%s10 + $0x18] sm:$0xff] %vm122, %v3508
    %3517 = vst.msk [vmem:[%s10 + $0x20] sm:$0xff] %vm122, %v3509
    %3518 = vst.msk [vmem:[%s10 + $0x28] sm:$0xff] %vm122, %v3510
    %3519 = vst.msk [vmem:[%s10 + $0x30] sm:$0xff] %vm122, %v3511
    %3520 = vst.msk [vmem:[%s10 + $0x38] sm:$0xff] %vm122, %v3512
    // Predicated region
    $region54: #{tpu_custom_call.1} parent=1 // pred_check
      _
    $region55: #{tpu_custom_call.1} parent=1 // pred_check_branch
      %3522 = sbr.rel (0) target = $region57
    $region56: #{tpu_custom_call.1} parent=1 // pred_region
      _
    $region57: #{tpu_custom_call.1} parent=1 // pred_fallthru
      _
    // Predicated region
    $region58: #{tpu_custom_call.1} parent=1 // pred_check
      _
    $region59: #{tpu_custom_call.1} parent=1 // pred_check_branch
      %3524 = sbr.rel (0) target = $region61
    $region60: #{tpu_custom_call.1} parent=1 // pred_region
      _
    $region61: #{tpu_custom_call.1} parent=1 // pred_fallthru
      _
    %3525 = vsyncpa [#allocation5], 1
    %3526 = vsyncpa [#allocation7], 1

</llo_original>
